<compile_context>
chip_gen: v7x
topology: tpu7x:2x2x1
jax: 0.10.0
libtpu: 0.0.40
codegen_flags: <defaults>
</compile_context>

<pallas_src>
import jax
import jax.numpy as jnp
import numpy as np
from jax.experimental import pallas as pl
from jax.experimental.pallas import tpu as pltpu

KSIZE = 5
PAD = KSIZE - 1  # full-conv padding used by the stride-1/pad-0 transposed convs


# ---------------------------------------------------------------------------
# Parameter preparation (done ONCE, outside the hot path)
# ---------------------------------------------------------------------------
def _conv_hwio(w_oihw):
    # PyTorch Conv2d weight [Cout, Cin, kh, kw] -> [kh, kw, Cin, Cout]
    return jnp.transpose(w_oihw, (2, 3, 1, 0)).astype(jnp.float32)


def _convt_hwio(w_iohw):
    # PyTorch ConvTranspose2d weight [Cin, Cout, kh, kw]; stride=1/pad=0 is a
    # full conv with spatially flipped weights -> [kh, kw, Cin, Cout]
    return jnp.transpose(w_iohw[:, :, ::-1, ::-1], (2, 3, 0, 1)).astype(jnp.float32)


def _banded(w_hwio, w_in, pad):
    """Per-kernel-row banded matrices: [k, W_in*Cin, W_out*Cout].

    Wband[di][(j+dj-pad)*Cin + ci, j*Cout + co] = w_hwio[di, dj, ci, co]
    so that  out_row = sum_di  in_row(di) @ Wband[di]  implements the conv
    (with virtual left/right zero padding of `pad` along W).
    """
    k, _, cin, cout = w_hwio.shape
    w_out = w_in - k + 1 + 2 * pad
    mats = []
    for di in range(k):
        m = jnp.zeros((w_in * cin, w_out * cout), jnp.float32)
        for dj in range(k):
            band = jnp.eye(w_in, w_out, k=pad - dj, dtype=jnp.float32)
            m = m + jnp.kron(band, w_hwio[di, dj])
        mats.append(m)
    return jnp.stack(mats)


def _bias_row(b, w_out):
    # bias broadcast over width: row [1, W_out*Cout], channel-minor
    return jnp.tile(b.astype(jnp.float32), w_out)[None, :]


def _dims(h, w):
    r = KSIZE - 1
    return dict(
        h1=h - r, w1=w - r,          # enc1 out, C=6
        h2=h - 2 * r, w2=w - 2 * r,  # enc2 out, C=16
        h3=h - r, w3=w - r,          # dec1 out, C=6
        h4=h, w4=w,                  # dec2 out, C=1
    )


def prepare_params(params, h, w):
    # TODO(synk): optional bf16 weight slabs for v6e/v7x (needs ~1e-2 tolerance).
    d = _dims(h, w)
    return (
        _banded(_conv_hwio(params["enc1_w"]), w, 0),         _bias_row(params["enc1_b"], d["w1"]),
        _banded(_conv_hwio(params["enc2_w"]), d["w1"], 0),    _bias_row(params["enc2_b"], d["w2"]),
        _banded(_convt_hwio(params["dec1_w"]), d["w2"], PAD), _bias_row(params["dec1_b"], d["w3"]),
        _banded(_convt_hwio(params["dec2_w"]), d["w3"], PAD), _bias_row(params["dec2_b"], d["w4"]),
    )


# ---------------------------------------------------------------------------
# Fused, batched Pallas kernel
# ---------------------------------------------------------------------------
def build_autoencoder(n_steps, b_blk, h, w):
    d = _dims(h, w)
    h2, h3 = d["h2"], d["h3"]
    xc = w * 1
    a1c = d["w1"] * 6
    a2c = d["w2"] * 16
    a3c = d["w3"] * 6
    oc = d["w4"] * 1
    k = KSIZE

    S = h + 2 * PAD          # per-image row stride (shared by all layer slabs)
    R = b_blk * S            # rows computed per grid step
    RT = R + (k - 1)         # input slabs carry a zero tail so in[r+di] stays in-bounds

    # in-block row offsets: x & enc1 at 2*PAD, enc2(padded) at PAD, dec1(padded)/out at 0.
    V2_LO, V2_HI = 2 * PAD, 2 * PAD + h2   # valid (non-pad) rows of enc2 activations
    V3_LO, V3_HI = PAD, PAD + h3           # valid (non-pad) rows of dec1 activations

    def band(in_ref, w_ref, b_ref):
        # One batched band-matmul per kernel row di; M = R fills the MXU.
        acc = None
        for di in range(k):
            part = jnp.dot(in_ref[di:di + R, :], w_ref[di],
                           preferred_element_type=jnp.float32)
            acc = part if acc is None else acc + part
        return acc + b_ref[...]

    def kernel(rowpos_ref, x_ref, wb1, br1, wb2, br2, wb3, br3, wb4, br4,
               o_ref, a1, a2p, a3p):
        # Keep the (k-1)-row read tails of the activation slabs at exactly zero.
        # (12 tiny rows per step — replaces the old full-slab re-zeroing.)
        a1[R:, :] = jnp.zeros((k - 1, a1c), jnp.float32)
        a2p[R:, :] = jnp.zeros((k - 1, a2c), jnp.float32)
        a3p[R:, :] = jnp.zeros((k - 1, a3c), jnp.float32)

        rp = rowpos_ref[...]          # (R, 1) int32: row index within each image block

        # ---- enc1: Conv2d(1->6) + ReLU  (no mask needed; garbage rows never
        #      feed a valid row of any later layer) ---------------------------
        a1[:R, :] = jnp.maximum(band(x_ref, wb1, br1), 0.0)

        # ---- enc2: Conv2d(6->16) + ReLU; rows outside the valid range are
        #      forced to 0 (they are dec1's full-conv H padding) --------------
        m2 = (rp >= V2_LO) & (rp < V2_HI)
        a2p[:R, :] = jnp.where(m2, jnp.maximum(band(a1, wb2, br2), 0.0), 0.0)

        # ---- dec1: ConvTranspose2d(16->6) + ReLU; same zero-pad-by-mask -----
        m3 = (rp >= V3_LO) & (rp < V3_HI)
        a3p[:R, :] = jnp.where(m3, jnp.maximum(band(a2p, wb3, br3), 0.0), 0.0)

        # ---- dec2: ConvTranspose2d(6->1) + ReLU + Sigmoid (tanh form: EUP) ---
        y = jnp.maximum(band(a3p, wb4, br4), 0.0)
        o_ref[...] = 0.5 * (jnp.tanh(0.5 * y) + 1.0)

    # Cost estimate for the single fused custom call.
    kdims = [(xc, a1c), (a1c, a2c), (a2c, a3c), (a3c, oc)]
    flops = n_steps * 2 * k * R * sum(a * b for a, b in kdims)
    weight_bytes = 4 * k * sum(a * b for a, b in kdims)
    bias_bytes = 4 * (a1c + a2c + a3c + oc)
    io_bytes = 4 * (n_steps * (RT * xc + R * oc) + R)
    cost = pl.CostEstimate(flops=flops, transcendentals=n_steps * R * oc,
                           bytes_accessed=io_bytes + weight_bytes + bias_bytes)

    def full(shape):
        return pl.BlockSpec(shape, lambda i, _s=shape: (0,) * len(_s))

    in_specs = [
        full((R, 1)),                                        # rowpos (row % S)
        pl.BlockSpec((None, RT, xc), lambda i: (i, 0, 0)),   # x: B_blk images / step
        full((k, xc, a1c)), full((1, a1c)),
        full((k, a1c, a2c)), full((1, a2c)),
        full((k, a2c, a3c)), full((1, a3c)),
        full((k, a3c, oc)), full((1, oc)),
    ]
    out_specs = pl.BlockSpec((None, R, oc), lambda i: (i, 0, 0))

    return pl.pallas_call(
        kernel,
        out_shape=jax.ShapeDtypeStruct((n_steps, R, oc), jnp.float32),
        grid=(n_steps,),
        in_specs=in_specs,
        out_specs=out_specs,
        scratch_shapes=[
            pltpu.VMEM((RT, a1c), jnp.float32),   # enc1 activations (stacked)
            pltpu.VMEM((RT, a2c), jnp.float32),   # enc2 activations (stacked, H-padded)
            pltpu.VMEM((RT, a3c), jnp.float32),   # dec1 activations (stacked, H-padded)
        ],
        compiler_params=pltpu.CompilerParams(
            dimension_semantics=("parallel",),          # batch blocks across TCs on v7x
            vmem_limit_bytes=48 * 1024 * 1024,          # B_blk cap keeps usage ~5 MiB
        ),
        cost_estimate=cost,
    )


def make_forward(n, h, w, b_blk=None):
    """Returns a jitted forward(x_nchw, prepped) using the fused batched kernel."""
    if b_blk is None:
        # Largest batch-per-step that (a) keeps >= 2 grid steps whenever n >= 2 so both
        # v7x TensorCores get work, and (b) caps per-step VMEM well under 64 MiB.
        b_blk = max(1, min(128, -(-n // 2)))
    n_steps = -(-n // b_blk)
    n_pad = n_steps * b_blk
    S = h + 2 * PAD
    R = b_blk * S

    fused = build_autoencoder(n_steps, b_blk, h, w)
    rowpos = jnp.asarray((np.arange(R, dtype=np.int32) % S).reshape(R, 1))

    @jax.jit
    def forward(x_nchw, prepped):
        xs = x_nchw.reshape(x_nchw.shape[0], h, w)            # Cin=1 -> free reshape
        if n_pad != n:
            xs = jnp.pad(xs, ((0, n_pad - n), (0, 0), (0, 0)))
        # Stack B_blk images per grid step along rows; each image gets a 2*PAD-row
        # zero header (also serves as the decoder's full-conv H padding).
        xs = xs.reshape(n_steps, b_blk, h, w)
        xs = jnp.pad(xs, ((0, 0), (0, 0), (2 * PAD, 0), (0, 0)))
        xs = xs.reshape(n_steps, R, w)
        xs = jnp.pad(xs, ((0, 0), (0, KSIZE - 1), (0, 0)))     # zero read tail
        y = fused(rowpos, xs, *prepped)                         # (n_steps, R, w)
        y = y.reshape(n_steps, b_blk, S, w)[:, :, :h, :]        # output rows at offset 0
        return y.reshape(n_pad, 1, h, w)[:n]

    return forward


# ---------------------------------------------------------------------------
# Pure-JAX reference (lax conv) for correctness check
# ---------------------------------------------------------------------------
def reference_forward(x_nchw, p):
    x = jnp.transpose(x_nchw, (0, 2, 3, 1))

    def conv(x, w_oihw, b):
        w_ = jnp.transpose(w_oihw, (2, 3, 1, 0))
        y = jax.lax.conv_general_dilated(x, w_, (1, 1), "VALID",
                                         dimension_numbers=("NHWC", "HWIO", "NHWC"))
        return jnp.maximum(y + b, 0.0)

    def convt(x, w_iohw, b, sig=False):
        kk = w_iohw.shape[2]
        w_ = jnp.transpose(w_iohw[:, :, ::-1, ::-1], (2, 3, 0, 1))
        xp = jnp.pad(x, ((0, 0), (kk - 1, kk - 1), (kk - 1, kk - 1), (0, 0)))
        y = jax.lax.conv_general_dilated(xp, w_, (1, 1), "VALID",
                                         dimension_numbers=("NHWC", "HWIO", "NHWC"))
        y = jnp.maximum(y + b, 0.0)
        return jax.nn.sigmoid(y) if sig else y

    x = conv(x, p["enc1_w"], p["enc1_b"])
    x = conv(x, p["enc2_w"], p["enc2_b"])
    x = convt(x, p["dec1_w"], p["dec1_b"])
    x = convt(x, p["dec2_w"], p["dec2_b"], sig=True)
    return jnp.transpose(x, (0, 3, 1, 2))


def init_params(key):
    def uni(k, shape, fan_in):
        bound = 1.0 / np.sqrt(fan_in)
        return jax.random.uniform(k, shape, jnp.float32, -bound, bound)

    ks = jax.random.split(key, 8)
    return {
        "enc1_w": uni(ks[0], (6, 1, 5, 5), 1 * 25),  "enc1_b": uni(ks[1], (6,), 1 * 25),
        "enc2_w": uni(ks[2], (16, 6, 5, 5), 6 * 25), "enc2_b": uni(ks[3], (16,), 6 * 25),
        "dec1_w": uni(ks[4], (16, 6, 5, 5), 16 * 25), "dec1_b": uni(ks[5], (6,), 16 * 25),
        "dec2_w": uni(ks[6], (6, 1, 5, 5), 6 * 25),  "dec2_b": uni(ks[7], (1,), 6 * 25),
    }


if __name__ == "__main__":
    key = jax.random.PRNGKey(0)
    k_x, k_p = jax.random.split(key)
    params = init_params(k_p)

    N, H, W = 8, 16, 16                       # module requires Cin = 1
    x = jax.random.normal(k_x, (N, 1, H, W), jnp.float32)

    prepped = prepare_params(params, H, W)    # one-time weight preparation
    forward = make_forward(N, H, W)           # B_blk=4 -> grid=(2,): 2 parallel steps

    out = jax.block_until_ready(forward(x, prepped))
    ref = jax.block_until_ready(reference_forward(x, params))

    assert out.shape == (N, 1, H, W), out.shape
    np.testing.assert_allclose(np.asarray(out), np.asarray(ref), rtol=1e-5, atol=1e-5)
    print("KERNEL_OK")
</pallas_src>

<mosaic_0001>
module attributes {stable_mosaic.version = 11 : i64} {
  func.func @kernel(%arg0: i32, %arg1: memref<96x1xi32, #tpu.memory_space<vmem>>, %arg2: memref<1x100x16xf32, #tpu.memory_space<vmem>>, %arg3: memref<5x16x72xf32, #tpu.memory_space<vmem>>, %arg4: memref<1x72xf32, #tpu.memory_space<vmem>>, %arg5: memref<5x72x128xf32, #tpu.memory_space<vmem>>, %arg6: memref<1x128xf32, #tpu.memory_space<vmem>>, %arg7: memref<5x128x72xf32, #tpu.memory_space<vmem>>, %arg8: memref<1x72xf32, #tpu.memory_space<vmem>>, %arg9: memref<5x72x16xf32, #tpu.memory_space<vmem>>, %arg10: memref<1x16xf32, #tpu.memory_space<vmem>>, %arg11: memref<1x96x16xf32, #tpu.memory_space<vmem>>, %arg12: memref<100x72xf32, #tpu.memory_space<vmem>>, %arg13: memref<100x128xf32, #tpu.memory_space<vmem>>, %arg14: memref<100x72xf32, #tpu.memory_space<vmem>>) attributes {dimension_semantics = [#tpu.dimension_semantics<parallel>], iteration_bounds = array<i64: 2>, scalar_prefetch = 0 : i64, scratch_operands = 3 : i64, tpu.core_type = #tpu.core_type<tc>, window_params = [{pipeline_mode = #tpu.pipeline_mode<synchronous>, transform_indices = @transform_0, window_bounds = array<i64: 96, 1>}, {transform_indices = @transform_1, window_bounds = array<i64: 1, 100, 16>}, {pipeline_mode = #tpu.pipeline_mode<synchronous>, transform_indices = @transform_2, window_bounds = array<i64: 5, 16, 72>}, {pipeline_mode = #tpu.pipeline_mode<synchronous>, transform_indices = @transform_3, window_bounds = array<i64: 1, 72>}, {pipeline_mode = #tpu.pipeline_mode<synchronous>, transform_indices = @transform_4, window_bounds = array<i64: 5, 72, 128>}, {pipeline_mode = #tpu.pipeline_mode<synchronous>, transform_indices = @transform_5, window_bounds = array<i64: 1, 128>}, {pipeline_mode = #tpu.pipeline_mode<synchronous>, transform_indices = @transform_6, window_bounds = array<i64: 5, 128, 72>}, {pipeline_mode = #tpu.pipeline_mode<synchronous>, transform_indices = @transform_7, window_bounds = array<i64: 1, 72>}, {pipeline_mode = #tpu.pipeline_mode<synchronous>, transform_indices = @transform_8, window_bounds = array<i64: 5, 72, 16>}, {pipeline_mode = #tpu.pipeline_mode<synchronous>, transform_indices = @transform_9, window_bounds = array<i64: 1, 16>}, {transform_indices = @transform_10, window_bounds = array<i64: 1, 96, 16>}]} {
    %cst = arith.constant 0.000000e+00 : f32
    %0 = vector.broadcast %cst : f32 to vector<4x72xf32>
    %c96 = arith.constant 96 : index
    %c0 = arith.constant 0 : index
    %1 = vector.load %arg12[%c96, %c0] : memref<100x72xf32, #tpu.memory_space<vmem>>, vector<4x72xf32>
    tpu.vector_store %arg12[%c96, %c0], %0 {strides = array<i32>} : memref<100x72xf32, #tpu.memory_space<vmem>>, vector<4x72xf32>,
    %cst_0 = arith.constant 0.000000e+00 : f32
    %2 = vector.broadcast %cst_0 : f32 to vector<4x128xf32>
    %c96_1 = arith.constant 96 : index
    %c0_2 = arith.constant 0 : index
    %3 = vector.load %arg13[%c96_1, %c0_2] : memref<100x128xf32, #tpu.memory_space<vmem>>, vector<4x128xf32>
    tpu.vector_store %arg13[%c96_1, %c0_2], %2 {strides = array<i32>} : memref<100x128xf32, #tpu.memory_space<vmem>>, vector<4x128xf32>,
    %cst_3 = arith.constant 0.000000e+00 : f32
    %4 = vector.broadcast %cst_3 : f32 to vector<4x72xf32>
    %c96_4 = arith.constant 96 : index
    %c0_5 = arith.constant 0 : index
    %5 = vector.load %arg14[%c96_4, %c0_5] : memref<100x72xf32, #tpu.memory_space<vmem>>, vector<4x72xf32>
    tpu.vector_store %arg14[%c96_4, %c0_5], %4 {strides = array<i32>} : memref<100x72xf32, #tpu.memory_space<vmem>>, vector<4x72xf32>,
    %c0_6 = arith.constant 0 : index
    %c0_7 = arith.constant 0 : index
    %6 = vector.load %arg1[%c0_6, %c0_7] : memref<96x1xi32, #tpu.memory_space<vmem>>, vector<96x1xi32>
    %c0_8 = arith.constant 0 : index
    %c0_9 = arith.constant 0 : index
    %c0_10 = arith.constant 0 : index
    %7 = vector.load %arg2[%c0_8, %c0_9, %c0_10] : memref<1x100x16xf32, #tpu.memory_space<vmem>>, vector<1x96x16xf32>
    %8 = vector.shape_cast %7 : vector<1x96x16xf32> to vector<96x16xf32>
    %c0_11 = arith.constant 0 : index
    %c0_12 = arith.constant 0 : index
    %c0_13 = arith.constant 0 : index
    %9 = vector.load %arg3[%c0_11, %c0_12, %c0_13] : memref<5x16x72xf32, #tpu.memory_space<vmem>>, vector<1x16x72xf32>
    %10 = vector.shape_cast %9 : vector<1x16x72xf32> to vector<16x72xf32>
    %cst_14 = arith.constant dense<0.000000e+00> : vector<96x72xf32>
    %11 = tpu.matmul %8, %10, %cst_14 {dimension_numbers = #tpu.dot_dimension_numbers<[1], [0], [0], [1], [0, 0, 1, 1], [], []>} : vector<96x16xf32>, vector<16x72xf32>, vector<96x72xf32> -> vector<96x72xf32>
    %c0_15 = arith.constant 0 : index
    %c1 = arith.constant 1 : index
    %c0_16 = arith.constant 0 : index
    %12 = vector.load %arg2[%c0_15, %c1, %c0_16] : memref<1x100x16xf32, #tpu.memory_space<vmem>>, vector<1x96x16xf32>
    %13 = vector.shape_cast %12 : vector<1x96x16xf32> to vector<96x16xf32>
    %c1_17 = arith.constant 1 : index
    %c0_18 = arith.constant 0 : index
    %c0_19 = arith.constant 0 : index
    %14 = vector.load %arg3[%c1_17, %c0_18, %c0_19] : memref<5x16x72xf32, #tpu.memory_space<vmem>>, vector<1x16x72xf32>
    %15 = vector.shape_cast %14 : vector<1x16x72xf32> to vector<16x72xf32>
    %cst_20 = arith.constant dense<0.000000e+00> : vector<96x72xf32>
    %16 = tpu.matmul %13, %15, %cst_20 {dimension_numbers = #tpu.dot_dimension_numbers<[1], [0], [0], [1], [0, 0, 1, 1], [], []>} : vector<96x16xf32>, vector<16x72xf32>, vector<96x72xf32> -> vector<96x72xf32>
    %17 = arith.addf %11, %16 : vector<96x72xf32>
    %c0_21 = arith.constant 0 : index
    %c2 = arith.constant 2 : index
    %c0_22 = arith.constant 0 : index
    %18 = vector.load %arg2[%c0_21, %c2, %c0_22] : memref<1x100x16xf32, #tpu.memory_space<vmem>>, vector<1x96x16xf32>
    %19 = vector.shape_cast %18 : vector<1x96x16xf32> to vector<96x16xf32>
    %c2_23 = arith.constant 2 : index
    %c0_24 = arith.constant 0 : index
    %c0_25 = arith.constant 0 : index
    %20 = vector.load %arg3[%c2_23, %c0_24, %c0_25] : memref<5x16x72xf32, #tpu.memory_space<vmem>>, vector<1x16x72xf32>
    %21 = vector.shape_cast %20 : vector<1x16x72xf32> to vector<16x72xf32>
    %cst_26 = arith.constant dense<0.000000e+00> : vector<96x72xf32>
    %22 = tpu.matmul %19, %21, %cst_26 {dimension_numbers = #tpu.dot_dimension_numbers<[1], [0], [0], [1], [0, 0, 1, 1], [], []>} : vector<96x16xf32>, vector<16x72xf32>, vector<96x72xf32> -> vector<96x72xf32>
    %23 = arith.addf %17, %22 : vector<96x72xf32>
    %c0_27 = arith.constant 0 : index
    %c3 = arith.constant 3 : index
    %c0_28 = arith.constant 0 : index
    %24 = vector.load %arg2[%c0_27, %c3, %c0_28] : memref<1x100x16xf32, #tpu.memory_space<vmem>>, vector<1x96x16xf32>
    %25 = vector.shape_cast %24 : vector<1x96x16xf32> to vector<96x16xf32>
    %c3_29 = arith.constant 3 : index
    %c0_30 = arith.constant 0 : index
    %c0_31 = arith.constant 0 : index
    %26 = vector.load %arg3[%c3_29, %c0_30, %c0_31] : memref<5x16x72xf32, #tpu.memory_space<vmem>>, vector<1x16x72xf32>
    %27 = vector.shape_cast %26 : vector<1x16x72xf32> to vector<16x72xf32>
    %cst_32 = arith.constant dense<0.000000e+00> : vector<96x72xf32>
    %28 = tpu.matmul %25, %27, %cst_32 {dimension_numbers = #tpu.dot_dimension_numbers<[1], [0], [0], [1], [0, 0, 1, 1], [], []>} : vector<96x16xf32>, vector<16x72xf32>, vector<96x72xf32> -> vector<96x72xf32>
    %29 = arith.addf %23, %28 : vector<96x72xf32>
    %c0_33 = arith.constant 0 : index
    %c4 = arith.constant 4 : index
    %c0_34 = arith.constant 0 : index
    %30 = vector.load %arg2[%c0_33, %c4, %c0_34] : memref<1x100x16xf32, #tpu.memory_space<vmem>>, vector<1x96x16xf32>
    %31 = vector.shape_cast %30 : vector<1x96x16xf32> to vector<96x16xf32>
    %c4_35 = arith.constant 4 : index
    %c0_36 = arith.constant 0 : index
    %c0_37 = arith.constant 0 : index
    %32 = vector.load %arg3[%c4_35, %c0_36, %c0_37] : memref<5x16x72xf32, #tpu.memory_space<vmem>>, vector<1x16x72xf32>
    %33 = vector.shape_cast %32 : vector<1x16x72xf32> to vector<16x72xf32>
    %cst_38 = arith.constant dense<0.000000e+00> : vector<96x72xf32>
    %34 = tpu.matmul %31, %33, %cst_38 {dimension_numbers = #tpu.dot_dimension_numbers<[1], [0], [0], [1], [0, 0, 1, 1], [], []>} : vector<96x16xf32>, vector<16x72xf32>, vector<96x72xf32> -> vector<96x72xf32>
    %35 = arith.addf %29, %34 : vector<96x72xf32>
    %c0_39 = arith.constant 0 : index
    %c0_40 = arith.constant 0 : index
    %36 = vector.load %arg4[%c0_39, %c0_40] : memref<1x72xf32, #tpu.memory_space<vmem>>, vector<1x72xf32>
    %37 = vector.broadcast %36 : vector<1x72xf32> to vector<96x72xf32>
    %38 = arith.addf %35, %37 : vector<96x72xf32>
    %cst_41 = arith.constant 0.000000e+00 : f32
    %39 = vector.broadcast %cst_41 : f32 to vector<96x72xf32>
    %40 = arith.maximumf %38, %39 : vector<96x72xf32>
    %c0_42 = arith.constant 0 : index
    %c0_43 = arith.constant 0 : index
    %41 = vector.load %arg12[%c0_42, %c0_43] : memref<100x72xf32, #tpu.memory_space<vmem>>, vector<96x72xf32>
    tpu.vector_store %arg12[%c0_42, %c0_43], %40 {strides = array<i32>} : memref<100x72xf32, #tpu.memory_space<vmem>>, vector<96x72xf32>,
    %c8_i32 = arith.constant 8 : i32
    %42 = vector.broadcast %c8_i32 : i32 to vector<96x1xi32>
    %43 = arith.cmpi sge, %6, %42 : vector<96x1xi32>
    %c16_i32 = arith.constant 16 : i32
    %44 = vector.broadcast %c16_i32 : i32 to vector<96x1xi32>
    %45 = arith.cmpi slt, %6, %44 : vector<96x1xi32>
    %46 = arith.andi %43, %45 : vector<96x1xi1>
    %c0_44 = arith.constant 0 : index
    %c0_45 = arith.constant 0 : index
    %47 = vector.load %arg12[%c0_44, %c0_45] : memref<100x72xf32, #tpu.memory_space<vmem>>, vector<96x72xf32>
    %c0_46 = arith.constant 0 : index
    %c0_47 = arith.constant 0 : index
    %c0_48 = arith.constant 0 : index
    %48 = vector.load %arg5[%c0_46, %c0_47, %c0_48] : memref<5x72x128xf32, #tpu.memory_space<vmem>>, vector<1x72x128xf32>
    %49 = vector.shape_cast %48 : vector<1x72x128xf32> to vector<72x128xf32>
    %cst_49 = arith.constant dense<0.000000e+00> : vector<96x128xf32>
    %50 = tpu.matmul %47, %49, %cst_49 {dimension_numbers = #tpu.dot_dimension_numbers<[1], [0], [0], [1], [0, 0, 1, 1], [], []>} : vector<96x72xf32>, vector<72x128xf32>, vector<96x128xf32> -> vector<96x128xf32>
    %c1_50 = arith.constant 1 : index
    %c0_51 = arith.constant 0 : index
    %51 = vector.load %arg12[%c1_50, %c0_51] : memref<100x72xf32, #tpu.memory_space<vmem>>, vector<96x72xf32>
    %c1_52 = arith.constant 1 : index
    %c0_53 = arith.constant 0 : index
    %c0_54 = arith.constant 0 : index
    %52 = vector.load %arg5[%c1_52, %c0_53, %c0_54] : memref<5x72x128xf32, #tpu.memory_space<vmem>>, vector<1x72x128xf32>
    %53 = vector.shape_cast %52 : vector<1x72x128xf32> to vector<72x128xf32>
    %cst_55 = arith.constant dense<0.000000e+00> : vector<96x128xf32>
    %54 = tpu.matmul %51, %53, %cst_55 {dimension_numbers = #tpu.dot_dimension_numbers<[1], [0], [0], [1], [0, 0, 1, 1], [], []>} : vector<96x72xf32>, vector<72x128xf32>, vector<96x128xf32> -> vector<96x128xf32>
    %55 = arith.addf %50, %54 : vector<96x128xf32>
    %c2_56 = arith.constant 2 : index
    %c0_57 = arith.constant 0 : index
    %56 = vector.load %arg12[%c2_56, %c0_57] : memref<100x72xf32, #tpu.memory_space<vmem>>, vector<96x72xf32>
    %c2_58 = arith.constant 2 : index
    %c0_59 = arith.constant 0 : index
    %c0_60 = arith.constant 0 : index
    %57 = vector.load %arg5[%c2_58, %c0_59, %c0_60] : memref<5x72x128xf32, #tpu.memory_space<vmem>>, vector<1x72x128xf32>
    %58 = vector.shape_cast %57 : vector<1x72x128xf32> to vector<72x128xf32>
    %cst_61 = arith.constant dense<0.000000e+00> : vector<96x128xf32>
    %59 = tpu.matmul %56, %58, %cst_61 {dimension_numbers = #tpu.dot_dimension_numbers<[1], [0], [0], [1], [0, 0, 1, 1], [], []>} : vector<96x72xf32>, vector<72x128xf32>, vector<96x128xf32> -> vector<96x128xf32>
    %60 = arith.addf %55, %59 : vector<96x128xf32>
    %c3_62 = arith.constant 3 : index
    %c0_63 = arith.constant 0 : index
    %61 = vector.load %arg12[%c3_62, %c0_63] : memref<100x72xf32, #tpu.memory_space<vmem>>, vector<96x72xf32>
    %c3_64 = arith.constant 3 : index
    %c0_65 = arith.constant 0 : index
    %c0_66 = arith.constant 0 : index
    %62 = vector.load %arg5[%c3_64, %c0_65, %c0_66] : memref<5x72x128xf32, #tpu.memory_space<vmem>>, vector<1x72x128xf32>
    %63 = vector.shape_cast %62 : vector<1x72x128xf32> to vector<72x128xf32>
    %cst_67 = arith.constant dense<0.000000e+00> : vector<96x128xf32>
    %64 = tpu.matmul %61, %63, %cst_67 {dimension_numbers = #tpu.dot_dimension_numbers<[1], [0], [0], [1], [0, 0, 1, 1], [], []>} : vector<96x72xf32>, vector<72x128xf32>, vector<96x128xf32> -> vector<96x128xf32>
    %65 = arith.addf %60, %64 : vector<96x128xf32>
    %c4_68 = arith.constant 4 : index
    %c0_69 = arith.constant 0 : index
    %66 = vector.load %arg12[%c4_68, %c0_69] : memref<100x72xf32, #tpu.memory_space<vmem>>, vector<96x72xf32>
    %c4_70 = arith.constant 4 : index
    %c0_71 = arith.constant 0 : index
    %c0_72 = arith.constant 0 : index
    %67 = vector.load %arg5[%c4_70, %c0_71, %c0_72] : memref<5x72x128xf32, #tpu.memory_space<vmem>>, vector<1x72x128xf32>
    %68 = vector.shape_cast %67 : vector<1x72x128xf32> to vector<72x128xf32>
    %cst_73 = arith.constant dense<0.000000e+00> : vector<96x128xf32>
    %69 = tpu.matmul %66, %68, %cst_73 {dimension_numbers = #tpu.dot_dimension_numbers<[1], [0], [0], [1], [0, 0, 1, 1], [], []>} : vector<96x72xf32>, vector<72x128xf32>, vector<96x128xf32> -> vector<96x128xf32>
    %70 = arith.addf %65, %69 : vector<96x128xf32>
    %c0_74 = arith.constant 0 : index
    %c0_75 = arith.constant 0 : index
    %71 = vector.load %arg6[%c0_74, %c0_75] : memref<1x128xf32, #tpu.memory_space<vmem>>, vector<1x128xf32>
    %72 = vector.broadcast %71 : vector<1x128xf32> to vector<96x128xf32>
    %73 = arith.addf %70, %72 : vector<96x128xf32>
    %cst_76 = arith.constant 0.000000e+00 : f32
    %74 = vector.broadcast %cst_76 : f32 to vector<96x128xf32>
    %75 = arith.maximumf %73, %74 : vector<96x128xf32>
    %cst_77 = arith.constant 0.000000e+00 : f32
    %76 = vector.shape_cast %46 : vector<96x1xi1> to vector<96x1xi1>
    %77 = vector.broadcast %76 : vector<96x1xi1> to vector<96x128xi1>
    %78 = vector.broadcast %cst_77 : f32 to vector<96x128xf32>
    %79 = arith.select %77, %75, %78 : vector<96x128xi1>, vector<96x128xf32>
    %c0_78 = arith.constant 0 : index
    %c0_79 = arith.constant 0 : index
    %80 = vector.load %arg13[%c0_78, %c0_79] : memref<100x128xf32, #tpu.memory_space<vmem>>, vector<96x128xf32>
    tpu.vector_store %arg13[%c0_78, %c0_79], %79 {strides = array<i32>} : memref<100x128xf32, #tpu.memory_space<vmem>>, vector<96x128xf32>,
    %c4_i32 = arith.constant 4 : i32
    %81 = vector.broadcast %c4_i32 : i32 to vector<96x1xi32>
    %82 = arith.cmpi sge, %6, %81 : vector<96x1xi32>
    %c16_i32_80 = arith.constant 16 : i32
    %83 = vector.broadcast %c16_i32_80 : i32 to vector<96x1xi32>
    %84 = arith.cmpi slt, %6, %83 : vector<96x1xi32>
    %85 = arith.andi %82, %84 : vector<96x1xi1>
    %c0_81 = arith.constant 0 : index
    %c0_82 = arith.constant 0 : index
    %86 = vector.load %arg13[%c0_81, %c0_82] : memref<100x128xf32, #tpu.memory_space<vmem>>, vector<96x128xf32>
    %c0_83 = arith.constant 0 : index
    %c0_84 = arith.constant 0 : index
    %c0_85 = arith.constant 0 : index
    %87 = vector.load %arg7[%c0_83, %c0_84, %c0_85] : memref<5x128x72xf32, #tpu.memory_space<vmem>>, vector<1x128x72xf32>
    %88 = vector.shape_cast %87 : vector<1x128x72xf32> to vector<128x72xf32>
    %cst_86 = arith.constant dense<0.000000e+00> : vector<96x72xf32>
    %89 = tpu.matmul %86, %88, %cst_86 {dimension_numbers = #tpu.dot_dimension_numbers<[1], [0], [0], [1], [0, 0, 1, 1], [], []>} : vector<96x128xf32>, vector<128x72xf32>, vector<96x72xf32> -> vector<96x72xf32>
    %c1_87 = arith.constant 1 : index
    %c0_88 = arith.constant 0 : index
    %90 = vector.load %arg13[%c1_87, %c0_88] : memref<100x128xf32, #tpu.memory_space<vmem>>, vector<96x128xf32>
    %c1_89 = arith.constant 1 : index
    %c0_90 = arith.constant 0 : index
    %c0_91 = arith.constant 0 : index
    %91 = vector.load %arg7[%c1_89, %c0_90, %c0_91] : memref<5x128x72xf32, #tpu.memory_space<vmem>>, vector<1x128x72xf32>
    %92 = vector.shape_cast %91 : vector<1x128x72xf32> to vector<128x72xf32>
    %cst_92 = arith.constant dense<0.000000e+00> : vector<96x72xf32>
    %93 = tpu.matmul %90, %92, %cst_92 {dimension_numbers = #tpu.dot_dimension_numbers<[1], [0], [0], [1], [0, 0, 1, 1], [], []>} : vector<96x128xf32>, vector<128x72xf32>, vector<96x72xf32> -> vector<96x72xf32>
    %94 = arith.addf %89, %93 : vector<96x72xf32>
    %c2_93 = arith.constant 2 : index
    %c0_94 = arith.constant 0 : index
    %95 = vector.load %arg13[%c2_93, %c0_94] : memref<100x128xf32, #tpu.memory_space<vmem>>, vector<96x128xf32>
    %c2_95 = arith.constant 2 : index
    %c0_96 = arith.constant 0 : index
    %c0_97 = arith.constant 0 : index
    %96 = vector.load %arg7[%c2_95, %c0_96, %c0_97] : memref<5x128x72xf32, #tpu.memory_space<vmem>>, vector<1x128x72xf32>
    %97 = vector.shape_cast %96 : vector<1x128x72xf32> to vector<128x72xf32>
    %cst_98 = arith.constant dense<0.000000e+00> : vector<96x72xf32>
    %98 = tpu.matmul %95, %97, %cst_98 {dimension_numbers = #tpu.dot_dimension_numbers<[1], [0], [0], [1], [0, 0, 1, 1], [], []>} : vector<96x128xf32>, vector<128x72xf32>, vector<96x72xf32> -> vector<96x72xf32>
    %99 = arith.addf %94, %98 : vector<96x72xf32>
    %c3_99 = arith.constant 3 : index
    %c0_100 = arith.constant 0 : index
    %100 = vector.load %arg13[%c3_99, %c0_100] : memref<100x128xf32, #tpu.memory_space<vmem>>, vector<96x128xf32>
    %c3_101 = arith.constant 3 : index
    %c0_102 = arith.constant 0 : index
    %c0_103 = arith.constant 0 : index
    %101 = vector.load %arg7[%c3_101, %c0_102, %c0_103] : memref<5x128x72xf32, #tpu.memory_space<vmem>>, vector<1x128x72xf32>
    %102 = vector.shape_cast %101 : vector<1x128x72xf32> to vector<128x72xf32>
    %cst_104 = arith.constant dense<0.000000e+00> : vector<96x72xf32>
    %103 = tpu.matmul %100, %102, %cst_104 {dimension_numbers = #tpu.dot_dimension_numbers<[1], [0], [0], [1], [0, 0, 1, 1], [], []>} : vector<96x128xf32>, vector<128x72xf32>, vector<96x72xf32> -> vector<96x72xf32>
    %104 = arith.addf %99, %103 : vector<96x72xf32>
    %c4_105 = arith.constant 4 : index
    %c0_106 = arith.constant 0 : index
    %105 = vector.load %arg13[%c4_105, %c0_106] : memref<100x128xf32, #tpu.memory_space<vmem>>, vector<96x128xf32>
    %c4_107 = arith.constant 4 : index
    %c0_108 = arith.constant 0 : index
    %c0_109 = arith.constant 0 : index
    %106 = vector.load %arg7[%c4_107, %c0_108, %c0_109] : memref<5x128x72xf32, #tpu.memory_space<vmem>>, vector<1x128x72xf32>
    %107 = vector.shape_cast %106 : vector<1x128x72xf32> to vector<128x72xf32>
    %cst_110 = arith.constant dense<0.000000e+00> : vector<96x72xf32>
    %108 = tpu.matmul %105, %107, %cst_110 {dimension_numbers = #tpu.dot_dimension_numbers<[1], [0], [0], [1], [0, 0, 1, 1], [], []>} : vector<96x128xf32>, vector<128x72xf32>, vector<96x72xf32> -> vector<96x72xf32>
    %109 = arith.addf %104, %108 : vector<96x72xf32>
    %c0_111 = arith.constant 0 : index
    %c0_112 = arith.constant 0 : index
    %110 = vector.load %arg8[%c0_111, %c0_112] : memref<1x72xf32, #tpu.memory_space<vmem>>, vector<1x72xf32>
    %111 = vector.broadcast %110 : vector<1x72xf32> to vector<96x72xf32>
    %112 = arith.addf %109, %111 : vector<96x72xf32>
    %cst_113 = arith.constant 0.000000e+00 : f32
    %113 = vector.broadcast %cst_113 : f32 to vector<96x72xf32>
    %114 = arith.maximumf %112, %113 : vector<96x72xf32>
    %cst_114 = arith.constant 0.000000e+00 : f32
    %115 = vector.shape_cast %85 : vector<96x1xi1> to vector<96x1xi1>
    %116 = vector.broadcast %115 : vector<96x1xi1> to vector<96x72xi1>
    %117 = vector.broadcast %cst_114 : f32 to vector<96x72xf32>
    %118 = arith.select %116, %114, %117 : vector<96x72xi1>, vector<96x72xf32>
    %c0_115 = arith.constant 0 : index
    %c0_116 = arith.constant 0 : index
    %119 = vector.load %arg14[%c0_115, %c0_116] : memref<100x72xf32, #tpu.memory_space<vmem>>, vector<96x72xf32>
    tpu.vector_store %arg14[%c0_115, %c0_116], %118 {strides = array<i32>} : memref<100x72xf32, #tpu.memory_space<vmem>>, vector<96x72xf32>,
    %c0_117 = arith.constant 0 : index
    %c0_118 = arith.constant 0 : index
    %120 = vector.load %arg14[%c0_117, %c0_118] : memref<100x72xf32, #tpu.memory_space<vmem>>, vector<96x72xf32>
    %c0_119 = arith.constant 0 : index
    %c0_120 = arith.constant 0 : index
    %c0_121 = arith.constant 0 : index
    %121 = vector.load %arg9[%c0_119, %c0_120, %c0_121] : memref<5x72x16xf32, #tpu.memory_space<vmem>>, vector<1x72x16xf32>
    %122 = vector.shape_cast %121 : vector<1x72x16xf32> to vector<72x16xf32>
    %cst_122 = arith.constant dense<0.000000e+00> : vector<96x16xf32>
    %123 = tpu.matmul %120, %122, %cst_122 {dimension_numbers = #tpu.dot_dimension_numbers<[1], [0], [0], [1], [0, 0, 1, 1], [], []>} : vector<96x72xf32>, vector<72x16xf32>, vector<96x16xf32> -> vector<96x16xf32>
    %c1_123 = arith.constant 1 : index
    %c0_124 = arith.constant 0 : index
    %124 = vector.load %arg14[%c1_123, %c0_124] : memref<100x72xf32, #tpu.memory_space<vmem>>, vector<96x72xf32>
    %c1_125 = arith.constant 1 : index
    %c0_126 = arith.constant 0 : index
    %c0_127 = arith.constant 0 : index
    %125 = vector.load %arg9[%c1_125, %c0_126, %c0_127] : memref<5x72x16xf32, #tpu.memory_space<vmem>>, vector<1x72x16xf32>
    %126 = vector.shape_cast %125 : vector<1x72x16xf32> to vector<72x16xf32>
    %cst_128 = arith.constant dense<0.000000e+00> : vector<96x16xf32>
    %127 = tpu.matmul %124, %126, %cst_128 {dimension_numbers = #tpu.dot_dimension_numbers<[1], [0], [0], [1], [0, 0, 1, 1], [], []>} : vector<96x72xf32>, vector<72x16xf32>, vector<96x16xf32> -> vector<96x16xf32>
    %128 = arith.addf %123, %127 : vector<96x16xf32>
    %c2_129 = arith.constant 2 : index
    %c0_130 = arith.constant 0 : index
    %129 = vector.load %arg14[%c2_129, %c0_130] : memref<100x72xf32, #tpu.memory_space<vmem>>, vector<96x72xf32>
    %c2_131 = arith.constant 2 : index
    %c0_132 = arith.constant 0 : index
    %c0_133 = arith.constant 0 : index
    %130 = vector.load %arg9[%c2_131, %c0_132, %c0_133] : memref<5x72x16xf32, #tpu.memory_space<vmem>>, vector<1x72x16xf32>
    %131 = vector.shape_cast %130 : vector<1x72x16xf32> to vector<72x16xf32>
    %cst_134 = arith.constant dense<0.000000e+00> : vector<96x16xf32>
    %132 = tpu.matmul %129, %131, %cst_134 {dimension_numbers = #tpu.dot_dimension_numbers<[1], [0], [0], [1], [0, 0, 1, 1], [], []>} : vector<96x72xf32>, vector<72x16xf32>, vector<96x16xf32> -> vector<96x16xf32>
    %133 = arith.addf %128, %132 : vector<96x16xf32>
    %c3_135 = arith.constant 3 : index
    %c0_136 = arith.constant 0 : index
    %134 = vector.load %arg14[%c3_135, %c0_136] : memref<100x72xf32, #tpu.memory_space<vmem>>, vector<96x72xf32>
    %c3_137 = arith.constant 3 : index
    %c0_138 = arith.constant 0 : index
    %c0_139 = arith.constant 0 : index
    %135 = vector.load %arg9[%c3_137, %c0_138, %c0_139] : memref<5x72x16xf32, #tpu.memory_space<vmem>>, vector<1x72x16xf32>
    %136 = vector.shape_cast %135 : vector<1x72x16xf32> to vector<72x16xf32>
    %cst_140 = arith.constant dense<0.000000e+00> : vector<96x16xf32>
    %137 = tpu.matmul %134, %136, %cst_140 {dimension_numbers = #tpu.dot_dimension_numbers<[1], [0], [0], [1], [0, 0, 1, 1], [], []>} : vector<96x72xf32>, vector<72x16xf32>, vector<96x16xf32> -> vector<96x16xf32>
    %138 = arith.addf %133, %137 : vector<96x16xf32>
    %c4_141 = arith.constant 4 : index
    %c0_142 = arith.constant 0 : index
    %139 = vector.load %arg14[%c4_141, %c0_142] : memref<100x72xf32, #tpu.memory_space<vmem>>, vector<96x72xf32>
    %c4_143 = arith.constant 4 : index
    %c0_144 = arith.constant 0 : index
    %c0_145 = arith.constant 0 : index
    %140 = vector.load %arg9[%c4_143, %c0_144, %c0_145] : memref<5x72x16xf32, #tpu.memory_space<vmem>>, vector<1x72x16xf32>
    %141 = vector.shape_cast %140 : vector<1x72x16xf32> to vector<72x16xf32>
    %cst_146 = arith.constant dense<0.000000e+00> : vector<96x16xf32>
    %142 = tpu.matmul %139, %141, %cst_146 {dimension_numbers = #tpu.dot_dimension_numbers<[1], [0], [0], [1], [0, 0, 1, 1], [], []>} : vector<96x72xf32>, vector<72x16xf32>, vector<96x16xf32> -> vector<96x16xf32>
    %143 = arith.addf %138, %142 : vector<96x16xf32>
    %c0_147 = arith.constant 0 : index
    %c0_148 = arith.constant 0 : index
    %144 = vector.load %arg10[%c0_147, %c0_148] : memref<1x16xf32, #tpu.memory_space<vmem>>, vector<1x16xf32>
    %145 = vector.broadcast %144 : vector<1x16xf32> to vector<96x16xf32>
    %146 = arith.addf %143, %145 : vector<96x16xf32>
    %cst_149 = arith.constant 0.000000e+00 : f32
    %147 = vector.broadcast %cst_149 : f32 to vector<96x16xf32>
    %148 = arith.maximumf %146, %147 : vector<96x16xf32>
    %cst_150 = arith.constant 5.000000e-01 : f32
    %149 = vector.broadcast %cst_150 : f32 to vector<96x16xf32>
    %150 = arith.mulf %149, %148 : vector<96x16xf32>
    %151 = math.tanh %150 : vector<96x16xf32>
    %cst_151 = arith.constant 1.000000e+00 : f32
    %152 = vector.broadcast %cst_151 : f32 to vector<96x16xf32>
    %153 = arith.addf %151, %152 : vector<96x16xf32>
    %cst_152 = arith.constant 5.000000e-01 : f32
    %154 = vector.broadcast %cst_152 : f32 to vector<96x16xf32>
    %155 = arith.mulf %154, %153 : vector<96x16xf32>
    %c0_153 = arith.constant 0 : index
    %c0_154 = arith.constant 0 : index
    %c0_155 = arith.constant 0 : index
    %156 = vector.load %arg11[%c0_153, %c0_154, %c0_155] : memref<1x96x16xf32, #tpu.memory_space<vmem>>, vector<1x96x16xf32>
    %157 = vector.shape_cast %156 : vector<1x96x16xf32> to vector<96x16xf32>
    %158 = vector.shape_cast %155 : vector<96x16xf32> to vector<1x96x16xf32>
    tpu.vector_store %arg11[%c0_153, %c0_154, %c0_155], %158 {strides = array<i32>} : memref<1x96x16xf32, #tpu.memory_space<vmem>>, vector<1x96x16xf32>,
    return
  }
  func.func @transform_0(%arg0: i32) -> (i32, i32) {
    %c0_i32 = arith.constant 0 : i32
    %c0_i32_0 = arith.constant 0 : i32
    %c0_i32_1 = arith.constant 0 : i32
    return %c0_i32, %c0_i32_0 : i32, i32
  }
  func.func @transform_1(%arg0: i32) -> (i32, i32, i32) {
    %c0_i32 = arith.constant 0 : i32
    %c0_i32_0 = arith.constant 0 : i32
    %c0_i32_1 = arith.constant 0 : i32
    return %arg0, %c0_i32, %c0_i32_0 : i32, i32, i32
  }
  func.func @transform_2(%arg0: i32) -> (i32, i32, i32) {
    %c0_i32 = arith.constant 0 : i32
    %c0_i32_0 = arith.constant 0 : i32
    %c0_i32_1 = arith.constant 0 : i32
    %c0_i32_2 = arith.constant 0 : i32
    return %c0_i32, %c0_i32_0, %c0_i32_1 : i32, i32, i32
  }
  func.func @transform_3(%arg0: i32) -> (i32, i32) {
    %c0_i32 = arith.constant 0 : i32
    %c0_i32_0 = arith.constant 0 : i32
    %c0_i32_1 = arith.constant 0 : i32
    return %c0_i32, %c0_i32_0 : i32, i32
  }
  func.func @transform_4(%arg0: i32) -> (i32, i32, i32) {
    %c0_i32 = arith.constant 0 : i32
    %c0_i32_0 = arith.constant 0 : i32
    %c0_i32_1 = arith.constant 0 : i32
    %c0_i32_2 = arith.constant 0 : i32
    return %c0_i32, %c0_i32_0, %c0_i32_1 : i32, i32, i32
  }
  func.func @transform_5(%arg0: i32) -> (i32, i32) {
    %c0_i32 = arith.constant 0 : i32
    %c0_i32_0 = arith.constant 0 : i32
    %c0_i32_1 = arith.constant 0 : i32
    return %c0_i32, %c0_i32_0 : i32, i32
  }
  func.func @transform_6(%arg0: i32) -> (i32, i32, i32) {
    %c0_i32 = arith.constant 0 : i32
    %c0_i32_0 = arith.constant 0 : i32
    %c0_i32_1 = arith.constant 0 : i32
    %c0_i32_2 = arith.constant 0 : i32
    return %c0_i32, %c0_i32_0, %c0_i32_1 : i32, i32, i32
  }
  func.func @transform_7(%arg0: i32) -> (i32, i32) {
    %c0_i32 = arith.constant 0 : i32
    %c0_i32_0 = arith.constant 0 : i32
    %c0_i32_1 = arith.constant 0 : i32
    return %c0_i32, %c0_i32_0 : i32, i32
  }
  func.func @transform_8(%arg0: i32) -> (i32, i32, i32) {
    %c0_i32 = arith.constant 0 : i32
    %c0_i32_0 = arith.constant 0 : i32
    %c0_i32_1 = arith.constant 0 : i32
    %c0_i32_2 = arith.constant 0 : i32
    return %c0_i32, %c0_i32_0, %c0_i32_1 : i32, i32, i32
  }
  func.func @transform_9(%arg0: i32) -> (i32, i32) {
    %c0_i32 = arith.constant 0 : i32
    %c0_i32_0 = arith.constant 0 : i32
    %c0_i32_1 = arith.constant 0 : i32
    return %c0_i32, %c0_i32_0 : i32, i32
  }
  func.func @transform_10(%arg0: i32) -> (i32, i32, i32) {
    %c0_i32 = arith.constant 0 : i32
    %c0_i32_0 = arith.constant 0 : i32
    %c0_i32_1 = arith.constant 0 : i32
    return %arg0, %c0_i32, %c0_i32_0 : i32, i32, i32
  }
}

</mosaic_0001>

<llo_original>
// kernel: forward.1
$region0: #{forward.1}
  #allocation0 [shape = 'u32[]', space=smem, size = 0x4, offset = 0x4, fixed_abs, tag = 'smem constant byte address 0x4 - core index']
  #allocation1 [shape = 'u32[144,128]{1,0:T(1,128)}', space=vmem, size = 0x12000, scoped, tag = 'internal scratch']
  #allocation2 [shape = 'f32[100,72]{1,0:T(8,128)}', space=vmem, size = 0xd000, scoped, tag = 'scratch operand']
  #allocation3 [shape = 'f32[100,128]{1,0:T(8,128)}', space=vmem, size = 0xd000, scoped, tag = 'scratch operand']
  #allocation4 [shape = 'f32[100,72]{1,0:T(8,128)}', space=vmem, size = 0xd000, scoped, tag = 'scratch operand']
  %s0 = inlined_call_operand.vmem [shape: s32[96,1], index: 0, kind: input, shape index: {}]
  %s1 = inlined_call_operand.vmem [shape: f32[2,100,16], index: 1, kind: input, shape index: {}]
  %s2 = inlined_call_operand.vmem [shape: f32[5,16,72], index: 2, kind: input, shape index: {}]
  %s3 = inlined_call_operand.vmem [shape: f32[1,72], index: 3, kind: input, shape index: {}]
  %s4 = inlined_call_operand.vmem [shape: f32[5,72,128], index: 4, kind: input, shape index: {}]
  %s5 = inlined_call_operand.vmem [shape: f32[1,128], index: 5, kind: input, shape index: {}]
  %s6 = inlined_call_operand.vmem [shape: f32[5,128,72], index: 6, kind: input, shape index: {}]
  %s7 = inlined_call_operand.vmem [shape: f32[1,72], index: 7, kind: input, shape index: {}]
  %s8 = inlined_call_operand.vmem [shape: f32[5,72,16], index: 8, kind: input, shape index: {}]
  %s9 = inlined_call_operand.vmem [shape: f32[1,16], index: 9, kind: input, shape index: {}]
  %s10 = inlined_call_operand.vmem [shape: f32[2,96,16], index: 10, kind: output, shape index: {}]
  %s11 = sld [smem:[#allocation0]]
  $region73: #{forward.1} parent=0
    _
  %s13 = ssub.s32 1, %s11
  %s14 = scalar_select 0, %s13, %s11
  loop: start=0, step=1, limit=4
  $region2: #{forward.1} parent=0 // loop_pre_header
    _
  $region3: #{forward.1} parent=0 // loop_header
    %s16 = sphi 0, %s20
    %p17 = scmp.ge.s32.totalorder %s16, 4
    %s24 = sphi 0, %s24
    %s26 = sphi 0, %s24
    %s27 = sphi 0, %s26
    %s41 = sphi 0, %s27
    %s47 = sphi 0, %s49
    %s50 = sphi 0, %s47
    %s51 = sphi 0, %s50
    %s67 = sphi 0, %s51
    %s71 = sphi 0, %s71
    %s73 = sphi 0, %s71
    %s74 = sphi 0, %s73
    %s88 = sphi 0, %s74
    %s92 = sphi 0, %s92
    %s94 = sphi 0, %s92
    %s95 = sphi 0, %s94
    %s109 = sphi 0, %s95
    %s113 = sphi 0, %s113
    %s115 = sphi 0, %s113
    %s116 = sphi 0, %s115
    %s130 = sphi 0, %s116
    %s134 = sphi 0, %s134
    %s136 = sphi 0, %s134
    %s137 = sphi 0, %s136
    %s151 = sphi 0, %s137
    %s155 = sphi 0, %s155
    %s157 = sphi 0, %s155
    %s158 = sphi 0, %s157
    %s172 = sphi 0, %s158
    %s176 = sphi 0, %s176
    %s178 = sphi 0, %s176
    %s179 = sphi 0, %s178
    %s193 = sphi 0, %s179
    %s197 = sphi 0, %s197
    %s199 = sphi 0, %s197
    %s200 = sphi 0, %s199
    %s214 = sphi 0, %s200
    %s218 = sphi 0, %s218
    %s220 = sphi 0, %s218
    %s221 = sphi 0, %s220
    %s235 = sphi 0, %s221
    %s241 = sphi 0, %s243
    %s244 = sphi 0, %s241
    %s245 = sphi 0, %s244
    %s261 = sphi 0, %s245
  $region4: #{forward.1} parent=0 // loop_header_branch
    %19 = sbr.rel (%p17) target = $region8
  $region5: #{forward.1} parent=0 // loop_body
    %s21 = ssub.s32 %s16, 1
    %s22 = ssub.s32 %s16, 2
    %s23 = sadd.s32 %s16, 1
    %s25 = sadd.s32 %s24, 1
    %p28 = scmp.eq.s32.totalorder %s16, 1
    %p29 = scmp.ne.s32.totalorder %s24, %s26
    %p30 = scmp.eq.s32.totalorder %s16, 0
    %p31 = por %p29, %p30
    %p32 = scmp.ne.s32.totalorder %s24, %s26
    %p33 = scmp.eq.s32.totalorder %s21, 1
    %p34 = por %p32, %p33
    %p35 = scmp.ne.s32.totalorder %s26, %s27
    %p36 = scmp.eq.s32.totalorder %s21, 0
    %p37 = por %p35, %p36
    %p38 = scmp.ne.s32.totalorder %s26, %s27
    %p39 = scmp.eq.s32.totalorder %s22, 1
    %p40 = por %p38, %p39
    %p42 = scmp.ne.s32.totalorder %s27, %s41
    %p43 = scmp.eq.s32.totalorder %s22, 0
    %p44 = por %p42, %p43
    %s45 = ssub.s32 %s16, %s23
    %p46 = scmp.eq.s32.totalorder %s45, 0
    %s48 = sadd.s32 %s47, 1
    %s49 = scalar_select %p46, %s47, %s48
    %p52 = pneg %p46
    %p53 = scmp.eq.s32.totalorder %s16, 1
    %p54 = por %p52, %p53
    %p55 = scmp.ne.s32.totalorder %s47, %s50
    %p56 = scmp.eq.s32.totalorder %s16, 0
    %p57 = por %p55, %p56
    %p58 = scmp.ne.s32.totalorder %s47, %s50
    %p59 = scmp.eq.s32.totalorder %s21, 1
    %p60 = por %p58, %p59
    %p61 = scmp.ne.s32.totalorder %s50, %s51
    %p62 = scmp.eq.s32.totalorder %s21, 0
    %p63 = por %p61, %p62
    %p64 = scmp.ne.s32.totalorder %s50, %s51
    %p65 = scmp.eq.s32.totalorder %s22, 1
    %p66 = por %p64, %p65
    %p68 = scmp.ne.s32.totalorder %s51, %s67
    %p69 = scmp.eq.s32.totalorder %s22, 0
    %p70 = por %p68, %p69
    %s72 = sadd.s32 %s71, 1
    %p75 = scmp.eq.s32.totalorder %s16, 1
    %p76 = scmp.ne.s32.totalorder %s71, %s73
    %p77 = scmp.eq.s32.totalorder %s16, 0
    %p78 = por %p76, %p77
    %p79 = scmp.ne.s32.totalorder %s71, %s73
    %p80 = scmp.eq.s32.totalorder %s21, 1
    %p81 = por %p79, %p80
    %p82 = scmp.ne.s32.totalorder %s73, %s74
    %p83 = scmp.eq.s32.totalorder %s21, 0
    %p84 = por %p82, %p83
    %p85 = scmp.ne.s32.totalorder %s73, %s74
    %p86 = scmp.eq.s32.totalorder %s22, 1
    %p87 = por %p85, %p86
    %p89 = scmp.ne.s32.totalorder %s74, %s88
    %p90 = scmp.eq.s32.totalorder %s22, 0
    %p91 = por %p89, %p90
    %s93 = sadd.s32 %s92, 1
    %p96 = scmp.eq.s32.totalorder %s16, 1
    %p97 = scmp.ne.s32.totalorder %s92, %s94
    %p98 = scmp.eq.s32.totalorder %s16, 0
    %p99 = por %p97, %p98
    %p100 = scmp.ne.s32.totalorder %s92, %s94
    %p101 = scmp.eq.s32.totalorder %s21, 1
    %p102 = por %p100, %p101
    %p103 = scmp.ne.s32.totalorder %s94, %s95
    %p104 = scmp.eq.s32.totalorder %s21, 0
    %p105 = por %p103, %p104
    %p106 = scmp.ne.s32.totalorder %s94, %s95
    %p107 = scmp.eq.s32.totalorder %s22, 1
    %p108 = por %p106, %p107
    %p110 = scmp.ne.s32.totalorder %s95, %s109
    %p111 = scmp.eq.s32.totalorder %s22, 0
    %p112 = por %p110, %p111
    %s114 = sadd.s32 %s113, 1
    %p117 = scmp.eq.s32.totalorder %s16, 1
    %p118 = scmp.ne.s32.totalorder %s113, %s115
    %p119 = scmp.eq.s32.totalorder %s16, 0
    %p120 = por %p118, %p119
    %p121 = scmp.ne.s32.totalorder %s113, %s115
    %p122 = scmp.eq.s32.totalorder %s21, 1
    %p123 = por %p121, %p122
    %p124 = scmp.ne.s32.totalorder %s115, %s116
    %p125 = scmp.eq.s32.totalorder %s21, 0
    %p126 = por %p124, %p125
    %p127 = scmp.ne.s32.totalorder %s115, %s116
    %p128 = scmp.eq.s32.totalorder %s22, 1
    %p129 = por %p127, %p128
    %p131 = scmp.ne.s32.totalorder %s116, %s130
    %p132 = scmp.eq.s32.totalorder %s22, 0
    %p133 = por %p131, %p132
    %s135 = sadd.s32 %s134, 1
    %p138 = scmp.eq.s32.totalorder %s16, 1
    %p139 = scmp.ne.s32.totalorder %s134, %s136
    %p140 = scmp.eq.s32.totalorder %s16, 0
    %p141 = por %p139, %p140
    %p142 = scmp.ne.s32.totalorder %s134, %s136
    %p143 = scmp.eq.s32.totalorder %s21, 1
    %p144 = por %p142, %p143
    %p145 = scmp.ne.s32.totalorder %s136, %s137
    %p146 = scmp.eq.s32.totalorder %s21, 0
    %p147 = por %p145, %p146
    %p148 = scmp.ne.s32.totalorder %s136, %s137
    %p149 = scmp.eq.s32.totalorder %s22, 1
    %p150 = por %p148, %p149
    %p152 = scmp.ne.s32.totalorder %s137, %s151
    %p153 = scmp.eq.s32.totalorder %s22, 0
    %p154 = por %p152, %p153
    %s156 = sadd.s32 %s155, 1
    %p159 = scmp.eq.s32.totalorder %s16, 1
    %p160 = scmp.ne.s32.totalorder %s155, %s157
    %p161 = scmp.eq.s32.totalorder %s16, 0
    %p162 = por %p160, %p161
    %p163 = scmp.ne.s32.totalorder %s155, %s157
    %p164 = scmp.eq.s32.totalorder %s21, 1
    %p165 = por %p163, %p164
    %p166 = scmp.ne.s32.totalorder %s157, %s158
    %p167 = scmp.eq.s32.totalorder %s21, 0
    %p168 = por %p166, %p167
    %p169 = scmp.ne.s32.totalorder %s157, %s158
    %p170 = scmp.eq.s32.totalorder %s22, 1
    %p171 = por %p169, %p170
    %p173 = scmp.ne.s32.totalorder %s158, %s172
    %p174 = scmp.eq.s32.totalorder %s22, 0
    %p175 = por %p173, %p174
    %s177 = sadd.s32 %s176, 1
    %p180 = scmp.eq.s32.totalorder %s16, 1
    %p181 = scmp.ne.s32.totalorder %s176, %s178
    %p182 = scmp.eq.s32.totalorder %s16, 0
    %p183 = por %p181, %p182
    %p184 = scmp.ne.s32.totalorder %s176, %s178
    %p185 = scmp.eq.s32.totalorder %s21, 1
    %p186 = por %p184, %p185
    %p187 = scmp.ne.s32.totalorder %s178, %s179
    %p188 = scmp.eq.s32.totalorder %s21, 0
    %p189 = por %p187, %p188
    %p190 = scmp.ne.s32.totalorder %s178, %s179
    %p191 = scmp.eq.s32.totalorder %s22, 1
    %p192 = por %p190, %p191
    %p194 = scmp.ne.s32.totalorder %s179, %s193
    %p195 = scmp.eq.s32.totalorder %s22, 0
    %p196 = por %p194, %p195
    %s198 = sadd.s32 %s197, 1
    %p201 = scmp.eq.s32.totalorder %s16, 1
    %p202 = scmp.ne.s32.totalorder %s197, %s199
    %p203 = scmp.eq.s32.totalorder %s16, 0
    %p204 = por %p202, %p203
    %p205 = scmp.ne.s32.totalorder %s197, %s199
    %p206 = scmp.eq.s32.totalorder %s21, 1
    %p207 = por %p205, %p206
    %p208 = scmp.ne.s32.totalorder %s199, %s200
    %p209 = scmp.eq.s32.totalorder %s21, 0
    %p210 = por %p208, %p209
    %p211 = scmp.ne.s32.totalorder %s199, %s200
    %p212 = scmp.eq.s32.totalorder %s22, 1
    %p213 = por %p211, %p212
    %p215 = scmp.ne.s32.totalorder %s200, %s214
    %p216 = scmp.eq.s32.totalorder %s22, 0
    %p217 = por %p215, %p216
    %s219 = sadd.s32 %s218, 1
    %p222 = scmp.eq.s32.totalorder %s16, 1
    %p223 = scmp.ne.s32.totalorder %s218, %s220
    %p224 = scmp.eq.s32.totalorder %s16, 0
    %p225 = por %p223, %p224
    %p226 = scmp.ne.s32.totalorder %s218, %s220
    %p227 = scmp.eq.s32.totalorder %s21, 1
    %p228 = por %p226, %p227
    %p229 = scmp.ne.s32.totalorder %s220, %s221
    %p230 = scmp.eq.s32.totalorder %s21, 0
    %p231 = por %p229, %p230
    %p232 = scmp.ne.s32.totalorder %s220, %s221
    %p233 = scmp.eq.s32.totalorder %s22, 1
    %p234 = por %p232, %p233
    %p236 = scmp.ne.s32.totalorder %s221, %s235
    %p237 = scmp.eq.s32.totalorder %s22, 0
    %p238 = por %p236, %p237
    %s239 = ssub.s32 %s16, %s23
    %p240 = scmp.eq.s32.totalorder %s239, 0
    %s242 = sadd.s32 %s241, 1
    %s243 = scalar_select %p240, %s241, %s242
    %p246 = pneg %p240
    %p247 = scmp.eq.s32.totalorder %s16, 1
    %p248 = por %p246, %p247
    %p249 = scmp.ne.s32.totalorder %s241, %s244
    %p250 = scmp.eq.s32.totalorder %s16, 0
    %p251 = por %p249, %p250
    %p252 = scmp.ne.s32.totalorder %s241, %s244
    %p253 = scmp.eq.s32.totalorder %s21, 1
    %p254 = por %p252, %p253
    %p255 = scmp.ne.s32.totalorder %s244, %s245
    %p256 = scmp.eq.s32.totalorder %s21, 0
    %p257 = por %p255, %p256
    %p258 = scmp.ne.s32.totalorder %s244, %s245
    %p259 = scmp.eq.s32.totalorder %s22, 1
    %p260 = por %p258, %p259
    %p262 = scmp.ne.s32.totalorder %s245, %s261
    %p263 = scmp.eq.s32.totalorder %s22, 0
    %p264 = por %p262, %p263
    %p265 = scmp.le.s32.totalorder 1, %s16
    %p266 = scmp.lt.s32.totalorder %s16, 3
    %p267 = pnand %p265, %p266
    %p268 = pneg %p267
    // Predicated region
    $region9: #{forward.1} parent=5 // pred_check
      _
    $region10: #{forward.1} parent=5 // pred_check_branch
      %270 = sbr.rel (%p267) target = $region12
    $region11: #{forward.1} parent=5 // pred_region
      %s271 = ssub.s32 %s16, 1
      // Predicated region
      $region13: #{forward.1} parent=11 // pred_check
        %p272 = pneg %p37
      $region14: #{forward.1} parent=11 // pred_check_branch
        %274 = sbr.rel (%p272) target = $region16
      $region15: #{forward.1} parent=11 // pred_region
        _
      $region16: #{forward.1} parent=11 // pred_fallthru
        _
      // Predicated region
      $region17: #{forward.1} parent=11 // pred_check
        %p275 = pneg %p84
      $region18: #{forward.1} parent=11 // pred_check_branch
        %277 = sbr.rel (%p275) target = $region20
      $region19: #{forward.1} parent=11 // pred_region
        _
      $region20: #{forward.1} parent=11 // pred_fallthru
        _
      // Predicated region
      $region21: #{forward.1} parent=11 // pred_check
        %p278 = pneg %p105
      $region22: #{forward.1} parent=11 // pred_check_branch
        %280 = sbr.rel (%p278) target = $region24
      $region23: #{forward.1} parent=11 // pred_region
        _
      $region24: #{forward.1} parent=11 // pred_fallthru
        _
      // Predicated region
      $region25: #{forward.1} parent=11 // pred_check
        %p281 = pneg %p126
      $region26: #{forward.1} parent=11 // pred_check_branch
        %283 = sbr.rel (%p281) target = $region28
      $region27: #{forward.1} parent=11 // pred_region
        _
      $region28: #{forward.1} parent=11 // pred_fallthru
        _
      // Predicated region
      $region29: #{forward.1} parent=11 // pred_check
        %p284 = pneg %p147
      $region30: #{forward.1} parent=11 // pred_check_branch
        %286 = sbr.rel (%p284) target = $region32
      $region31: #{forward.1} parent=11 // pred_region
        _
      $region32: #{forward.1} parent=11 // pred_fallthru
        _
      // Predicated region
      $region33: #{forward.1} parent=11 // pred_check
        %p287 = pneg %p168
      $region34: #{forward.1} parent=11 // pred_check_branch
        %289 = sbr.rel (%p287) target = $region36
      $region35: #{forward.1} parent=11 // pred_region
        _
      $region36: #{forward.1} parent=11 // pred_fallthru
        _
      // Predicated region
      $region37: #{forward.1} parent=11 // pred_check
        %p290 = pneg %p189
      $region38: #{forward.1} parent=11 // pred_check_branch
        %292 = sbr.rel (%p290) target = $region40
      $region39: #{forward.1} parent=11 // pred_region
        _
      $region40: #{forward.1} parent=11 // pred_fallthru
        _
      // Predicated region
      $region41: #{forward.1} parent=11 // pred_check
        %p293 = pneg %p210
      $region42: #{forward.1} parent=11 // pred_check_branch
        %295 = sbr.rel (%p293) target = $region44
      $region43: #{forward.1} parent=11 // pred_region
        _
      $region44: #{forward.1} parent=11 // pred_fallthru
        _
      // Predicated region
      $region45: #{forward.1} parent=11 // pred_check
        %p296 = pneg %p231
      $region46: #{forward.1} parent=11 // pred_check_branch
        %298 = sbr.rel (%p296) target = $region48
      $region47: #{forward.1} parent=11 // pred_region
        _
      $region48: #{forward.1} parent=11 // pred_fallthru
        _
    $region12: #{forward.1} parent=5 // pred_fallthru
      _
    %p299 = scmp.lt.s32.totalorder %s16, 2
    // Predicated region
    $region49: #{forward.1} parent=5 // pred_check
      %p300 = pneg %p299
    $region50: #{forward.1} parent=5 // pred_check_branch
      %302 = sbr.rel (%p300) target = $region52
    $region51: #{forward.1} parent=5 // pred_region
      // Predicated region
      $region53: #{forward.1} parent=51 // pred_check
        %p303 = pneg %p57
      $region54: #{forward.1} parent=51 // pred_check_branch
        %305 = sbr.rel (%p303) target = $region56
      $region55: #{forward.1} parent=51 // pred_region
        %p306 = scmp.lt.s32.totalorder %s16, 1
        %s307 = scalar_select %p306, %s16, 1
        %s308 = smul.addr %s307, 13
        %s309 = smul.addr %s308, 8
        %s310 = scalar_lea.vmem %s1, %s309
      $region56: #{forward.1} parent=51 // pred_fallthru
        _
    $region52: #{forward.1} parent=5 // pred_fallthru
      _
    %p311 = scmp.le.s32.totalorder 1, %s16
    %p312 = scmp.lt.s32.totalorder %s16, 3
    %p313 = pnand %p311, %p312
    %p314 = pneg %p313
    // Predicated region
    $region57: #{forward.1} parent=5 // pred_check
      _
    $region58: #{forward.1} parent=5 // pred_check_branch
      %316 = sbr.rel (%p313) target = $region60
    $region59: #{forward.1} parent=5 // pred_region
      %s317 = ssub.s32 %s16, 1
      %p318 = pneg %p37
      %p319 = pneg %p34
      %p320 = scmp.lt.s32.totalorder %s21, 1
      %s321 = scalar_select %p320, %s21, 1
      %s322 = smul.addr %s321, 13
      %s323 = smul.addr %s322, 8
      %s324 = scalar_lea.vmem %s1, %s323
      %p325 = pneg %p63
      %p326 = pneg %p60
      %p327 = pneg %p84
      %p328 = pneg %p81
      %p329 = pneg %p105
      %p330 = pneg %p102
      %p331 = pneg %p126
      %p332 = pneg %p123
      %p333 = pneg %p147
      %p334 = pneg %p144
      %p335 = pneg %p168
      %p336 = pneg %p165
      %p337 = pneg %p189
      %p338 = pneg %p186
      %p339 = pneg %p210
      %p340 = pneg %p207
      %p341 = pneg %p231
      %p342 = pneg %p228
      %p343 = pneg %p257
      %p344 = pneg %p254
      %p345 = scmp.lt.s32.totalorder %s21, 1
      %s346 = scalar_select %p345, %s21, 1
      %s347 = smul.addr %s346, 12
      %s348 = smul.addr %s347, 8
      %s349 = scalar_lea.vmem %s10, %s348
      %p350 = scmp.lt.s32.totalorder %s21, 1
      %s351 = scalar_select %p350, %s21, 1
      %s352 = smul.addr %s351, 13
      %s353 = smul.addr %s352, 8
      %s354 = scalar_lea.vmem %s1, %s353
      %p355 = scmp.lt.s32.totalorder %s21, 1
      %s356 = scalar_select %p355, %s21, 1
      %s357 = smul.addr %s356, 12
      %s358 = smul.addr %s357, 8
      %s359 = scalar_lea.vmem %s10, %s358
      %vm360 = vcmask 584704
      %361 = vst.msk [vmem:[#allocation2 + $0x60] sm:$0xf] %vm360, 0.0
      %362 = vst [vmem:[#allocation3 + $0x60] sm:$0xf] 0.0
      %363 = vst.msk [vmem:[#allocation4 + $0x60] sm:$0xf] %vm360, 0.0
      %v364 = vld [vmem:[%s0] sm:$0xff]
      %v365 = vld [vmem:[%s0 + $0x8] sm:$0xff]
      %v366 = vld [vmem:[%s0 + $0x10] sm:$0xff]
      %v367 = vld [vmem:[%s0 + $0x18] sm:$0xff]
      %v368 = vld [vmem:[%s0 + $0x20] sm:$0xff]
      %v369 = vld [vmem:[%s0 + $0x28] sm:$0xff]
      %v370 = vld [vmem:[%s0 + $0x30] sm:$0xff]
      %v371 = vld [vmem:[%s0 + $0x38] sm:$0xff]
      %v372 = vld [vmem:[%s0 + $0x40] sm:$0xff]
      %v373 = vld [vmem:[%s0 + $0x48] sm:$0xff]
      %v374 = vld [vmem:[%s0 + $0x50] sm:$0xff]
      %v375 = vld [vmem:[%s0 + $0x58] sm:$0xff]
      %v376 = vld [vmem:[%s354] sm:$0xff]
      %v377 = vld [vmem:[%s354 + $0x8] sm:$0xff]
      %v378 = vld [vmem:[%s354 + $0x10] sm:$0xff]
      %v379 = vld [vmem:[%s354 + $0x18] sm:$0xff]
      %v380 = vld [vmem:[%s354 + $0x20] sm:$0xff]
      %v381 = vld [vmem:[%s354 + $0x28] sm:$0xff]
      %v382 = vld [vmem:[%s354 + $0x30] sm:$0xff]
      %v383 = vld [vmem:[%s354 + $0x38] sm:$0xff]
      %v384 = vld [vmem:[%s354 + $0x40] sm:$0xff]
      %v385 = vld [vmem:[%s354 + $0x48] sm:$0xff]
      %v386 = vld [vmem:[%s354 + $0x50] sm:$0xff]
      %v387 = vld [vmem:[%s354 + $0x58] sm:$0xff]
      %v388 = vld [vmem:[%s2] sm:$0xff]
      %v389 = vld [vmem:[%s2 + $0x8] sm:$0xff]
      %v390 = vld [vmem:[%s354 + $0x1] sm:$0xff]
      %v391 = vld [vmem:[%s354 + $0x9] sm:$0xff]
      %v392 = vld [vmem:[%s354 + $0x11] sm:$0xff]
      %v393 = vld [vmem:[%s354 + $0x19] sm:$0xff]
      %v394 = vld [vmem:[%s354 + $0x21] sm:$0xff]
      %v395 = vld [vmem:[%s354 + $0x29] sm:$0xff]
      %v396 = vld [vmem:[%s354 + $0x31] sm:$0xff]
      %v397 = vld [vmem:[%s354 + $0x39] sm:$0xff]
      %v398 = vld [vmem:[%s354 + $0x41] sm:$0xff]
      %v399 = vld [vmem:[%s354 + $0x49] sm:$0xff]
      %v400 = vld [vmem:[%s354 + $0x51] sm:$0xff]
      %v401 = vld [vmem:[%s354 + $0x59] sm:$0xff]
      %s402 = scalar_lea.vmem %s2, 16
      %v403 = vld [vmem:[%s402] sm:$0xff]
      %v404 = vld [vmem:[%s402 + $0x8] sm:$0xff]
      %vm405 = vcmask 130048
      %v407 = vsel %vm405, %v390, 0
      %v410 = vsel %vm405, %v391, 0
      %v413 = vsel %vm405, %v392, 0
      %v416 = vsel %vm405, %v393, 0
      %v419 = vsel %vm405, %v394, 0
      %v422 = vsel %vm405, %v395, 0
      %v425 = vsel %vm405, %v396, 0
      %v428 = vsel %vm405, %v397, 0
      %v431 = vsel %vm405, %v398, 0
      %v434 = vsel %vm405, %v399, 0
      %v437 = vsel %vm405, %v400, 0
      %v440 = vsel %vm405, %v401, 0
      %442 = vmatprep.subr.mxu0 0.0
      %443 = vmatpush1.msra.mxu0 %v403
      %444 = vmatprep.subr.mxu0 0.0
      %445 = vmatpush1.msra.mxu0 %v404
      %446 = vmatprep.subr.mxu0 0.0
      %447 = vmatpush1.msra.mxu0 0.0
      %448 = vmatprep.subr.mxu0 0.0
      %449 = vmatpush1.msra.mxu0 0.0
      %450 = vmatprep.subr.mxu0 0.0
      %451 = vmatpush1.msra.mxu0 0.0
      %452 = vmatprep.subr.mxu0 0.0
      %453 = vmatpush1.msra.mxu0 0.0
      %454 = vmatprep.subr.mxu0 0.0
      %455 = vmatpush1.msra.mxu0 0.0
      %456 = vmatprep.subr.mxu0 0.0
      %457 = vmatpush1.msra.mxu0 0.0
      %458 = vmatprep.subr.mxu0 0.0
      %459 = vmatpush1.msra.mxu0 0.0
      %460 = vmatprep.subr.mxu0 0.0
      %461 = vmatpush1.msra.mxu0 0.0
      %462 = vmatprep.subr.mxu0 0.0
      %463 = vmatpush1.msra.mxu0 0.0
      %464 = vmatprep.subr.mxu0 0.0
      %465 = vmatpush1.msra.mxu0 0.0
      %466 = vmatprep.subr.mxu0 0.0
      %467 = vmatpush1.msra.mxu0 0.0
      %468 = vmatprep.subr.mxu0 0.0
      %469 = vmatpush1.msra.mxu0 0.0
      %470 = vmatprep.subr.mxu0 0.0
      %471 = vmatpush1.msra.mxu0 0.0
      %472 = vmatprep.subr.mxu0 0.0
      %473 = vmatpush1.msra.mxu0 0.0
      %474 = vmatprep.subr.mxu0 0.0
      %475 = vmatpush1.msra.mxu0 0.0
      %476 = vmatprep.subr.mxu0 0.0
      %477 = vmatpush1.msra.mxu0 0.0
      %478 = vmatprep.subr.mxu0 0.0
      %479 = vmatpush1.msra.mxu0 0.0
      %480 = vmatprep.subr.mxu0 0.0
      %481 = vmatpush1.msra.mxu0 0.0
      %482 = vmatprep.subr.mxu0 0.0
      %483 = vmatpush1.msra.mxu0 0.0
      %484 = vmatprep.subr.mxu0 0.0
      %485 = vmatpush1.msra.mxu0 0.0
      %486 = vmatprep.subr.mxu0 0.0
      %487 = vmatpush1.msra.mxu0 0.0
      %488 = vmatprep.subr.mxu0 0.0
      %489 = vmatpush1.msra.mxu0 0.0
      %490 = vmatprep.subr.mxu0 0.0
      %491 = vmatpush1.msra.mxu0 0.0
      %492 = vmatprep.subr.mxu0 0.0
      %493 = vmatpush1.msra.mxu0 0.0
      %494 = vmatprep.subr.mxu0 0.0
      %495 = vmatpush1.msra.mxu0 0.0
      %496 = vmatprep.subr.mxu0 0.0
      %497 = vmatpush1.msra.mxu0 0.0
      %498 = vmatprep.subr.mxu0 0.0
      %499 = vmatpush1.msra.mxu0 0.0
      %500 = vmatprep.subr.mxu0 0.0
      %501 = vmatpush1.msra.mxu0 0.0
      %502 = vmatprep.subr.mxu0 0.0
      %503 = vmatpush1.msra.mxu0 0.0
      %504 = vmatprep.subr.mxu0 0.0
      %505 = vmatpush1.msra.mxu0 0.0
      %506 = vmatprep.mubr.f32.mxu0 0.0
      %507 = vmatmul.mubr.f32.gmra.mrb[0].mxu0 %v407
      %v508 = vpop.f32.mrb[0].mxu0
      %v509 = vadd.f32 0.0, %v508
      %v510 = vpop.f32.mrb[0].mxu0
      %511 = vmatprep.mubr.f32.mxu0 0.0
      %512 = vmatmul.mubr.f32.gmra.mrb[0].mxu0 %v410
      %v513 = vpop.f32.mrb[0].mxu0
      %v514 = vadd.f32 0.0, %v513
      %v515 = vpop.f32.mrb[0].mxu0
      %516 = vmatprep.mubr.f32.mxu0 0.0
      %517 = vmatmul.mubr.f32.gmra.mrb[0].mxu0 %v413
      %v518 = vpop.f32.mrb[0].mxu0
      %v519 = vadd.f32 0.0, %v518
      %v520 = vpop.f32.mrb[0].mxu0
      %521 = vmatprep.mubr.f32.mxu0 0.0
      %522 = vmatmul.mubr.f32.gmra.mrb[0].mxu0 %v416
      %v523 = vpop.f32.mrb[0].mxu0
      %v524 = vadd.f32 0.0, %v523
      %v525 = vpop.f32.mrb[0].mxu0
      %526 = vmatprep.mubr.f32.mxu0 0.0
      %527 = vmatmul.mubr.f32.gmra.mrb[0].mxu0 %v419
      %v528 = vpop.f32.mrb[0].mxu0
      %v529 = vadd.f32 0.0, %v528
      %v530 = vpop.f32.mrb[0].mxu0
      %531 = vmatprep.mubr.f32.mxu0 0.0
      %532 = vmatmul.mubr.f32.gmra.mrb[0].mxu0 %v422
      %v533 = vpop.f32.mrb[0].mxu0
      %v534 = vadd.f32 0.0, %v533
      %v535 = vpop.f32.mrb[0].mxu0
      %536 = vmatprep.mubr.f32.mxu0 0.0
      %537 = vmatmul.mubr.f32.gmra.mrb[0].mxu0 %v425
      %v538 = vpop.f32.mrb[0].mxu0
      %v539 = vadd.f32 0.0, %v538
      %v540 = vpop.f32.mrb[0].mxu0
      %541 = vmatprep.mubr.f32.mxu0 0.0
      %542 = vmatmul.mubr.f32.gmra.mrb[0].mxu0 %v428
      %v543 = vpop.f32.mrb[0].mxu0
      %v544 = vadd.f32 0.0, %v543
      %v545 = vpop.f32.mrb[0].mxu0
      %546 = vmatprep.mubr.f32.mxu0 0.0
      %547 = vmatmul.mubr.f32.gmra.mrb[0].mxu0 %v431
      %v548 = vpop.f32.mrb[0].mxu0
      %v549 = vadd.f32 0.0, %v548
      %v550 = vpop.f32.mrb[0].mxu0
      %551 = vmatprep.mubr.f32.mxu0 0.0
      %552 = vmatmul.mubr.f32.gmra.mrb[0].mxu0 %v434
      %v553 = vpop.f32.mrb[0].mxu0
      %v554 = vadd.f32 0.0, %v553
      %v555 = vpop.f32.mrb[0].mxu0
      %556 = vmatprep.mubr.f32.mxu0 0.0
      %557 = vmatmul.mubr.f32.gmra.mrb[0].mxu0 %v437
      %v558 = vpop.f32.mrb[0].mxu0
      %v559 = vadd.f32 0.0, %v558
      %v560 = vpop.f32.mrb[0].mxu0
      %561 = vmatprep.mubr.f32.mxu0 0.0
      %562 = vmatmul.mubr.f32.gmra.mrb[0].mxu0 %v440
      %v563 = vpop.f32.mrb[0].mxu0
      %v564 = vadd.f32 0.0, %v563
      %v565 = vpop.f32.mrb[0].mxu0
      %566 = vdwg.mxu0
      %v568 = vsel %vm405, %v376, 0
      %v571 = vsel %vm405, %v377, 0
      %v574 = vsel %vm405, %v378, 0
      %v577 = vsel %vm405, %v379, 0
      %v580 = vsel %vm405, %v380, 0
      %v583 = vsel %vm405, %v381, 0
      %v586 = vsel %vm405, %v382, 0
      %v589 = vsel %vm405, %v383, 0
      %v592 = vsel %vm405, %v384, 0
      %v595 = vsel %vm405, %v385, 0
      %v598 = vsel %vm405, %v386, 0
      %v601 = vsel %vm405, %v387, 0
      %603 = vmatprep.subr.mxu0 0.0
      %604 = vmatpush1.msra.mxu0 %v388
      %605 = vmatprep.subr.mxu0 0.0
      %606 = vmatpush1.msra.mxu0 %v389
      %607 = vmatprep.subr.mxu0 0.0
      %608 = vmatpush1.msra.mxu0 0.0
      %609 = vmatprep.subr.mxu0 0.0
      %610 = vmatpush1.msra.mxu0 0.0
      %611 = vmatprep.subr.mxu0 0.0
      %612 = vmatpush1.msra.mxu0 0.0
      %613 = vmatprep.subr.mxu0 0.0
      %614 = vmatpush1.msra.mxu0 0.0
      %615 = vmatprep.subr.mxu0 0.0
      %616 = vmatpush1.msra.mxu0 0.0
      %617 = vmatprep.subr.mxu0 0.0
      %618 = vmatpush1.msra.mxu0 0.0
      %619 = vmatprep.subr.mxu0 0.0
      %620 = vmatpush1.msra.mxu0 0.0
      %621 = vmatprep.subr.mxu0 0.0
      %622 = vmatpush1.msra.mxu0 0.0
      %623 = vmatprep.subr.mxu0 0.0
      %624 = vmatpush1.msra.mxu0 0.0
      %625 = vmatprep.subr.mxu0 0.0
      %626 = vmatpush1.msra.mxu0 0.0
      %627 = vmatprep.subr.mxu0 0.0
      %628 = vmatpush1.msra.mxu0 0.0
      %629 = vmatprep.subr.mxu0 0.0
      %630 = vmatpush1.msra.mxu0 0.0
      %631 = vmatprep.subr.mxu0 0.0
      %632 = vmatpush1.msra.mxu0 0.0
      %633 = vmatprep.subr.mxu0 0.0
      %634 = vmatpush1.msra.mxu0 0.0
      %635 = vmatprep.subr.mxu0 0.0
      %636 = vmatpush1.msra.mxu0 0.0
      %637 = vmatprep.subr.mxu0 0.0
      %638 = vmatpush1.msra.mxu0 0.0
      %639 = vmatprep.subr.mxu0 0.0
      %640 = vmatpush1.msra.mxu0 0.0
      %641 = vmatprep.subr.mxu0 0.0
      %642 = vmatpush1.msra.mxu0 0.0
      %643 = vmatprep.subr.mxu0 0.0
      %644 = vmatpush1.msra.mxu0 0.0
      %645 = vmatprep.subr.mxu0 0.0
      %646 = vmatpush1.msra.mxu0 0.0
      %647 = vmatprep.subr.mxu0 0.0
      %648 = vmatpush1.msra.mxu0 0.0
      %649 = vmatprep.subr.mxu0 0.0
      %650 = vmatpush1.msra.mxu0 0.0
      %651 = vmatprep.subr.mxu0 0.0
      %652 = vmatpush1.msra.mxu0 0.0
      %653 = vmatprep.subr.mxu0 0.0
      %654 = vmatpush1.msra.mxu0 0.0
      %655 = vmatprep.subr.mxu0 0.0
      %656 = vmatpush1.msra.mxu0 0.0
      %657 = vmatprep.subr.mxu0 0.0
      %658 = vmatpush1.msra.mxu0 0.0
      %659 = vmatprep.subr.mxu0 0.0
      %660 = vmatpush1.msra.mxu0 0.0
      %661 = vmatprep.subr.mxu0 0.0
      %662 = vmatpush1.msra.mxu0 0.0
      %663 = vmatprep.subr.mxu0 0.0
      %664 = vmatpush1.msra.mxu0 0.0
      %665 = vmatprep.subr.mxu0 0.0
      %666 = vmatpush1.msra.mxu0 0.0
      %667 = vmatprep.mubr.f32.mxu0 0.0
      %668 = vmatmul.mubr.f32.gmra.mrb[0].mxu0 %v568
      %v669 = vpop.f32.mrb[0].mxu0
      %v670 = vadd.f32 %v509, %v669
      %v671 = vpop.f32.mrb[0].mxu0
      %672 = vmatprep.mubr.f32.mxu0 0.0
      %673 = vmatmul.mubr.f32.gmra.mrb[0].mxu0 %v571
      %v674 = vpop.f32.mrb[0].mxu0
      %v675 = vadd.f32 %v514, %v674
      %v676 = vpop.f32.mrb[0].mxu0
      %677 = vmatprep.mubr.f32.mxu0 0.0
      %678 = vmatmul.mubr.f32.gmra.mrb[0].mxu0 %v574
      %v679 = vpop.f32.mrb[0].mxu0
      %v680 = vadd.f32 %v519, %v679
      %v681 = vpop.f32.mrb[0].mxu0
      %682 = vmatprep.mubr.f32.mxu0 0.0
      %683 = vmatmul.mubr.f32.gmra.mrb[0].mxu0 %v577
      %v684 = vpop.f32.mrb[0].mxu0
      %v685 = vadd.f32 %v524, %v684
      %v686 = vpop.f32.mrb[0].mxu0
      %687 = vmatprep.mubr.f32.mxu0 0.0
      %688 = vmatmul.mubr.f32.gmra.mrb[0].mxu0 %v580
      %v689 = vpop.f32.mrb[0].mxu0
      %v690 = vadd.f32 %v529, %v689
      %v691 = vpop.f32.mrb[0].mxu0
      %692 = vmatprep.mubr.f32.mxu0 0.0
      %693 = vmatmul.mubr.f32.gmra.mrb[0].mxu0 %v583
      %v694 = vpop.f32.mrb[0].mxu0
      %v695 = vadd.f32 %v534, %v694
      %v696 = vpop.f32.mrb[0].mxu0
      %697 = vmatprep.mubr.f32.mxu0 0.0
      %698 = vmatmul.mubr.f32.gmra.mrb[0].mxu0 %v586
      %v699 = vpop.f32.mrb[0].mxu0
      %v700 = vadd.f32 %v539, %v699
      %v701 = vpop.f32.mrb[0].mxu0
      %702 = vmatprep.mubr.f32.mxu0 0.0
      %703 = vmatmul.mubr.f32.gmra.mrb[0].mxu0 %v589
      %v704 = vpop.f32.mrb[0].mxu0
      %v705 = vadd.f32 %v544, %v704
      %v706 = vpop.f32.mrb[0].mxu0
      %707 = vmatprep.mubr.f32.mxu0 0.0
      %708 = vmatmul.mubr.f32.gmra.mrb[0].mxu0 %v592
      %v709 = vpop.f32.mrb[0].mxu0
      %v710 = vadd.f32 %v549, %v709
      %v711 = vpop.f32.mrb[0].mxu0
      %712 = vmatprep.mubr.f32.mxu0 0.0
      %713 = vmatmul.mubr.f32.gmra.mrb[0].mxu0 %v595
      %v714 = vpop.f32.mrb[0].mxu0
      %v715 = vadd.f32 %v554, %v714
      %v716 = vpop.f32.mrb[0].mxu0
      %717 = vmatprep.mubr.f32.mxu0 0.0
      %718 = vmatmul.mubr.f32.gmra.mrb[0].mxu0 %v598
      %v719 = vpop.f32.mrb[0].mxu0
      %v720 = vadd.f32 %v559, %v719
      %v721 = vpop.f32.mrb[0].mxu0
      %722 = vmatprep.mubr.f32.mxu0 0.0
      %723 = vmatmul.mubr.f32.gmra.mrb[0].mxu0 %v601
      %v724 = vpop.f32.mrb[0].mxu0
      %v725 = vadd.f32 %v564, %v724
      %v726 = vpop.f32.mrb[0].mxu0
      %727 = vdwg.mxu0
      %v728 = vld [vmem:[%s354 + $0x2] sm:$0xff]
      %v729 = vld [vmem:[%s354 + $0xa] sm:$0xff]
      %v730 = vld [vmem:[%s354 + $0x12] sm:$0xff]
      %v731 = vld [vmem:[%s354 + $0x1a] sm:$0xff]
      %v732 = vld [vmem:[%s354 + $0x22] sm:$0xff]
      %v733 = vld [vmem:[%s354 + $0x2a] sm:$0xff]
      %v734 = vld [vmem:[%s354 + $0x32] sm:$0xff]
      %v735 = vld [vmem:[%s354 + $0x3a] sm:$0xff]
      %v736 = vld [vmem:[%s354 + $0x42] sm:$0xff]
      %v737 = vld [vmem:[%s354 + $0x4a] sm:$0xff]
      %v738 = vld [vmem:[%s354 + $0x52] sm:$0xff]
      %v739 = vld [vmem:[%s354 + $0x5a] sm:$0xff]
      %s740 = scalar_lea.vmem %s2, 32
      %v741 = vld [vmem:[%s740] sm:$0xff]
      %v742 = vld [vmem:[%s740 + $0x8] sm:$0xff]
      %v744 = vsel %vm405, %v728, 0
      %v747 = vsel %vm405, %v729, 0
      %v750 = vsel %vm405, %v730, 0
      %v753 = vsel %vm405, %v731, 0
      %v756 = vsel %vm405, %v732, 0
      %v759 = vsel %vm405, %v733, 0
      %v762 = vsel %vm405, %v734, 0
      %v765 = vsel %vm405, %v735, 0
      %v768 = vsel %vm405, %v736, 0
      %v771 = vsel %vm405, %v737, 0
      %v774 = vsel %vm405, %v738, 0
      %v777 = vsel %vm405, %v739, 0
      %779 = vmatprep.subr.mxu0 0.0
      %780 = vmatpush1.msra.mxu0 %v741
      %781 = vmatprep.subr.mxu0 0.0
      %782 = vmatpush1.msra.mxu0 %v742
      %783 = vmatprep.subr.mxu0 0.0
      %784 = vmatpush1.msra.mxu0 0.0
      %785 = vmatprep.subr.mxu0 0.0
      %786 = vmatpush1.msra.mxu0 0.0
      %787 = vmatprep.subr.mxu0 0.0
      %788 = vmatpush1.msra.mxu0 0.0
      %789 = vmatprep.subr.mxu0 0.0
      %790 = vmatpush1.msra.mxu0 0.0
      %791 = vmatprep.subr.mxu0 0.0
      %792 = vmatpush1.msra.mxu0 0.0
      %793 = vmatprep.subr.mxu0 0.0
      %794 = vmatpush1.msra.mxu0 0.0
      %795 = vmatprep.subr.mxu0 0.0
      %796 = vmatpush1.msra.mxu0 0.0
      %797 = vmatprep.subr.mxu0 0.0
      %798 = vmatpush1.msra.mxu0 0.0
      %799 = vmatprep.subr.mxu0 0.0
      %800 = vmatpush1.msra.mxu0 0.0
      %801 = vmatprep.subr.mxu0 0.0
      %802 = vmatpush1.msra.mxu0 0.0
      %803 = vmatprep.subr.mxu0 0.0
      %804 = vmatpush1.msra.mxu0 0.0
      %805 = vmatprep.subr.mxu0 0.0
      %806 = vmatpush1.msra.mxu0 0.0
      %807 = vmatprep.subr.mxu0 0.0
      %808 = vmatpush1.msra.mxu0 0.0
      %809 = vmatprep.subr.mxu0 0.0
      %810 = vmatpush1.msra.mxu0 0.0
      %811 = vmatprep.subr.mxu0 0.0
      %812 = vmatpush1.msra.mxu0 0.0
      %813 = vmatprep.subr.mxu0 0.0
      %814 = vmatpush1.msra.mxu0 0.0
      %815 = vmatprep.subr.mxu0 0.0
      %816 = vmatpush1.msra.mxu0 0.0
      %817 = vmatprep.subr.mxu0 0.0
      %818 = vmatpush1.msra.mxu0 0.0
      %819 = vmatprep.subr.mxu0 0.0
      %820 = vmatpush1.msra.mxu0 0.0
      %821 = vmatprep.subr.mxu0 0.0
      %822 = vmatpush1.msra.mxu0 0.0
      %823 = vmatprep.subr.mxu0 0.0
      %824 = vmatpush1.msra.mxu0 0.0
      %825 = vmatprep.subr.mxu0 0.0
      %826 = vmatpush1.msra.mxu0 0.0
      %827 = vmatprep.subr.mxu0 0.0
      %828 = vmatpush1.msra.mxu0 0.0
      %829 = vmatprep.subr.mxu0 0.0
      %830 = vmatpush1.msra.mxu0 0.0
      %831 = vmatprep.subr.mxu0 0.0
      %832 = vmatpush1.msra.mxu0 0.0
      %833 = vmatprep.subr.mxu0 0.0
      %834 = vmatpush1.msra.mxu0 0.0
      %835 = vmatprep.subr.mxu0 0.0
      %836 = vmatpush1.msra.mxu0 0.0
      %837 = vmatprep.subr.mxu0 0.0
      %838 = vmatpush1.msra.mxu0 0.0
      %839 = vmatprep.subr.mxu0 0.0
      %840 = vmatpush1.msra.mxu0 0.0
      %841 = vmatprep.subr.mxu0 0.0
      %842 = vmatpush1.msra.mxu0 0.0
      %843 = vmatprep.mubr.f32.mxu0 0.0
      %844 = vmatmul.mubr.f32.gmra.mrb[0].mxu0 %v744
      %v845 = vpop.f32.mrb[0].mxu0
      %v846 = vadd.f32 0.0, %v845
      %v847 = vpop.f32.mrb[0].mxu0
      %848 = vmatprep.mubr.f32.mxu0 0.0
      %849 = vmatmul.mubr.f32.gmra.mrb[0].mxu0 %v747
      %v850 = vpop.f32.mrb[0].mxu0
      %v851 = vadd.f32 0.0, %v850
      %v852 = vpop.f32.mrb[0].mxu0
      %853 = vmatprep.mubr.f32.mxu0 0.0
      %854 = vmatmul.mubr.f32.gmra.mrb[0].mxu0 %v750
      %v855 = vpop.f32.mrb[0].mxu0
      %v856 = vadd.f32 0.0, %v855
      %v857 = vpop.f32.mrb[0].mxu0
      %858 = vmatprep.mubr.f32.mxu0 0.0
      %859 = vmatmul.mubr.f32.gmra.mrb[0].mxu0 %v753
      %v860 = vpop.f32.mrb[0].mxu0
      %v861 = vadd.f32 0.0, %v860
      %v862 = vpop.f32.mrb[0].mxu0
      %863 = vmatprep.mubr.f32.mxu0 0.0
      %864 = vmatmul.mubr.f32.gmra.mrb[0].mxu0 %v756
      %v865 = vpop.f32.mrb[0].mxu0
      %v866 = vadd.f32 0.0, %v865
      %v867 = vpop.f32.mrb[0].mxu0
      %868 = vmatprep.mubr.f32.mxu0 0.0
      %869 = vmatmul.mubr.f32.gmra.mrb[0].mxu0 %v759
      %v870 = vpop.f32.mrb[0].mxu0
      %v871 = vadd.f32 0.0, %v870
      %v872 = vpop.f32.mrb[0].mxu0
      %873 = vmatprep.mubr.f32.mxu0 0.0
      %874 = vmatmul.mubr.f32.gmra.mrb[0].mxu0 %v762
      %v875 = vpop.f32.mrb[0].mxu0
      %v876 = vadd.f32 0.0, %v875
      %v877 = vpop.f32.mrb[0].mxu0
      %878 = vmatprep.mubr.f32.mxu0 0.0
      %879 = vmatmul.mubr.f32.gmra.mrb[0].mxu0 %v765
      %v880 = vpop.f32.mrb[0].mxu0
      %v881 = vadd.f32 0.0, %v880
      %v882 = vpop.f32.mrb[0].mxu0
      %883 = vmatprep.mubr.f32.mxu0 0.0
      %884 = vmatmul.mubr.f32.gmra.mrb[0].mxu0 %v768
      %v885 = vpop.f32.mrb[0].mxu0
      %v886 = vadd.f32 0.0, %v885
      %v887 = vpop.f32.mrb[0].mxu0
      %888 = vmatprep.mubr.f32.mxu0 0.0
      %889 = vmatmul.mubr.f32.gmra.mrb[0].mxu0 %v771
      %v890 = vpop.f32.mrb[0].mxu0
      %v891 = vadd.f32 0.0, %v890
      %v892 = vpop.f32.mrb[0].mxu0
      %893 = vmatprep.mubr.f32.mxu0 0.0
      %894 = vmatmul.mubr.f32.gmra.mrb[0].mxu0 %v774
      %v895 = vpop.f32.mrb[0].mxu0
      %v896 = vadd.f32 0.0, %v895
      %v897 = vpop.f32.mrb[0].mxu0
      %898 = vmatprep.mubr.f32.mxu0 0.0
      %899 = vmatmul.mubr.f32.gmra.mrb[0].mxu0 %v777
      %v900 = vpop.f32.mrb[0].mxu0
      %v901 = vadd.f32 0.0, %v900
      %v902 = vpop.f32.mrb[0].mxu0
      %903 = vdwg.mxu0
      %v904 = vadd.f32 %v670, %v846
      %v905 = vadd.f32 %v675, %v851
      %v906 = vadd.f32 %v680, %v856
      %v907 = vadd.f32 %v685, %v861
      %v908 = vadd.f32 %v690, %v866
      %v909 = vadd.f32 %v695, %v871
      %v910 = vadd.f32 %v700, %v876
      %v911 = vadd.f32 %v705, %v881
      %v912 = vadd.f32 %v710, %v886
      %v913 = vadd.f32 %v715, %v891
      %v914 = vadd.f32 %v720, %v896
      %v915 = vadd.f32 %v725, %v901
      %v916 = vld [vmem:[%s354 + $0x3] sm:$0xff]
      %v917 = vld [vmem:[%s354 + $0xb] sm:$0xff]
      %v918 = vld [vmem:[%s354 + $0x13] sm:$0xff]
      %v919 = vld [vmem:[%s354 + $0x1b] sm:$0xff]
      %v920 = vld [vmem:[%s354 + $0x23] sm:$0xff]
      %v921 = vld [vmem:[%s354 + $0x2b] sm:$0xff]
      %v922 = vld [vmem:[%s354 + $0x33] sm:$0xff]
      %v923 = vld [vmem:[%s354 + $0x3b] sm:$0xff]
      %v924 = vld [vmem:[%s354 + $0x43] sm:$0xff]
      %v925 = vld [vmem:[%s354 + $0x4b] sm:$0xff]
      %v926 = vld [vmem:[%s354 + $0x53] sm:$0xff]
      %v927 = vld [vmem:[%s354 + $0x5b] sm:$0xff]
      %s928 = scalar_lea.vmem %s2, 48
      %v929 = vld [vmem:[%s928] sm:$0xff]
      %v930 = vld [vmem:[%s928 + $0x8] sm:$0xff]
      %v932 = vsel %vm405, %v916, 0
      %v935 = vsel %vm405, %v917, 0
      %v938 = vsel %vm405, %v918, 0
      %v941 = vsel %vm405, %v919, 0
      %v944 = vsel %vm405, %v920, 0
      %v947 = vsel %vm405, %v921, 0
      %v950 = vsel %vm405, %v922, 0
      %v953 = vsel %vm405, %v923, 0
      %v956 = vsel %vm405, %v924, 0
      %v959 = vsel %vm405, %v925, 0
      %v962 = vsel %vm405, %v926, 0
      %v965 = vsel %vm405, %v927, 0
      %967 = vmatprep.subr.mxu0 0.0
      %968 = vmatpush1.msra.mxu0 %v929
      %969 = vmatprep.subr.mxu0 0.0
      %970 = vmatpush1.msra.mxu0 %v930
      %971 = vmatprep.subr.mxu0 0.0
      %972 = vmatpush1.msra.mxu0 0.0
      %973 = vmatprep.subr.mxu0 0.0
      %974 = vmatpush1.msra.mxu0 0.0
      %975 = vmatprep.subr.mxu0 0.0
      %976 = vmatpush1.msra.mxu0 0.0
      %977 = vmatprep.subr.mxu0 0.0
      %978 = vmatpush1.msra.mxu0 0.0
      %979 = vmatprep.subr.mxu0 0.0
      %980 = vmatpush1.msra.mxu0 0.0
      %981 = vmatprep.subr.mxu0 0.0
      %982 = vmatpush1.msra.mxu0 0.0
      %983 = vmatprep.subr.mxu0 0.0
      %984 = vmatpush1.msra.mxu0 0.0
      %985 = vmatprep.subr.mxu0 0.0
      %986 = vmatpush1.msra.mxu0 0.0
      %987 = vmatprep.subr.mxu0 0.0
      %988 = vmatpush1.msra.mxu0 0.0
      %989 = vmatprep.subr.mxu0 0.0
      %990 = vmatpush1.msra.mxu0 0.0
      %991 = vmatprep.subr.mxu0 0.0
      %992 = vmatpush1.msra.mxu0 0.0
      %993 = vmatprep.subr.mxu0 0.0
      %994 = vmatpush1.msra.mxu0 0.0
      %995 = vmatprep.subr.mxu0 0.0
      %996 = vmatpush1.msra.mxu0 0.0
      %997 = vmatprep.subr.mxu0 0.0
      %998 = vmatpush1.msra.mxu0 0.0
      %999 = vmatprep.subr.mxu0 0.0
      %1000 = vmatpush1.msra.mxu0 0.0
      %1001 = vmatprep.subr.mxu0 0.0
      %1002 = vmatpush1.msra.mxu0 0.0
      %1003 = vmatprep.subr.mxu0 0.0
      %1004 = vmatpush1.msra.mxu0 0.0
      %1005 = vmatprep.subr.mxu0 0.0
      %1006 = vmatpush1.msra.mxu0 0.0
      %1007 = vmatprep.subr.mxu0 0.0
      %1008 = vmatpush1.msra.mxu0 0.0
      %1009 = vmatprep.subr.mxu0 0.0
      %1010 = vmatpush1.msra.mxu0 0.0
      %1011 = vmatprep.subr.mxu0 0.0
      %1012 = vmatpush1.msra.mxu0 0.0
      %1013 = vmatprep.subr.mxu0 0.0
      %1014 = vmatpush1.msra.mxu0 0.0
      %1015 = vmatprep.subr.mxu0 0.0
      %1016 = vmatpush1.msra.mxu0 0.0
      %1017 = vmatprep.subr.mxu0 0.0
      %1018 = vmatpush1.msra.mxu0 0.0
      %1019 = vmatprep.subr.mxu0 0.0
      %1020 = vmatpush1.msra.mxu0 0.0
      %1021 = vmatprep.subr.mxu0 0.0
      %1022 = vmatpush1.msra.mxu0 0.0
      %1023 = vmatprep.subr.mxu0 0.0
      %1024 = vmatpush1.msra.mxu0 0.0
      %1025 = vmatprep.subr.mxu0 0.0
      %1026 = vmatpush1.msra.mxu0 0.0
      %1027 = vmatprep.subr.mxu0 0.0
      %1028 = vmatpush1.msra.mxu0 0.0
      %1029 = vmatprep.subr.mxu0 0.0
      %1030 = vmatpush1.msra.mxu0 0.0
      %1031 = vmatprep.mubr.f32.mxu0 0.0
      %1032 = vmatmul.mubr.f32.gmra.mrb[0].mxu0 %v932
      %v1033 = vpop.f32.mrb[0].mxu0
      %v1034 = vadd.f32 0.0, %v1033
      %v1035 = vpop.f32.mrb[0].mxu0
      %1036 = vmatprep.mubr.f32.mxu0 0.0
      %1037 = vmatmul.mubr.f32.gmra.mrb[0].mxu0 %v935
      %v1038 = vpop.f32.mrb[0].mxu0
      %v1039 = vadd.f32 0.0, %v1038
      %v1040 = vpop.f32.mrb[0].mxu0
      %1041 = vmatprep.mubr.f32.mxu0 0.0
      %1042 = vmatmul.mubr.f32.gmra.mrb[0].mxu0 %v938
      %v1043 = vpop.f32.mrb[0].mxu0
      %v1044 = vadd.f32 0.0, %v1043
      %v1045 = vpop.f32.mrb[0].mxu0
      %1046 = vmatprep.mubr.f32.mxu0 0.0
      %1047 = vmatmul.mubr.f32.gmra.mrb[0].mxu0 %v941
      %v1048 = vpop.f32.mrb[0].mxu0
      %v1049 = vadd.f32 0.0, %v1048
      %v1050 = vpop.f32.mrb[0].mxu0
      %1051 = vmatprep.mubr.f32.mxu0 0.0
      %1052 = vmatmul.mubr.f32.gmra.mrb[0].mxu0 %v944
      %v1053 = vpop.f32.mrb[0].mxu0
      %v1054 = vadd.f32 0.0, %v1053
      %v1055 = vpop.f32.mrb[0].mxu0
      %1056 = vmatprep.mubr.f32.mxu0 0.0
      %1057 = vmatmul.mubr.f32.gmra.mrb[0].mxu0 %v947
      %v1058 = vpop.f32.mrb[0].mxu0
      %v1059 = vadd.f32 0.0, %v1058
      %v1060 = vpop.f32.mrb[0].mxu0
      %1061 = vmatprep.mubr.f32.mxu0 0.0
      %1062 = vmatmul.mubr.f32.gmra.mrb[0].mxu0 %v950
      %v1063 = vpop.f32.mrb[0].mxu0
      %v1064 = vadd.f32 0.0, %v1063
      %v1065 = vpop.f32.mrb[0].mxu0
      %1066 = vmatprep.mubr.f32.mxu0 0.0
      %1067 = vmatmul.mubr.f32.gmra.mrb[0].mxu0 %v953
      %v1068 = vpop.f32.mrb[0].mxu0
      %v1069 = vadd.f32 0.0, %v1068
      %v1070 = vpop.f32.mrb[0].mxu0
      %1071 = vmatprep.mubr.f32.mxu0 0.0
      %1072 = vmatmul.mubr.f32.gmra.mrb[0].mxu0 %v956
      %v1073 = vpop.f32.mrb[0].mxu0
      %v1074 = vadd.f32 0.0, %v1073
      %v1075 = vpop.f32.mrb[0].mxu0
      %1076 = vmatprep.mubr.f32.mxu0 0.0
      %1077 = vmatmul.mubr.f32.gmra.mrb[0].mxu0 %v959
      %v1078 = vpop.f32.mrb[0].mxu0
      %v1079 = vadd.f32 0.0, %v1078
      %v1080 = vpop.f32.mrb[0].mxu0
      %1081 = vmatprep.mubr.f32.mxu0 0.0
      %1082 = vmatmul.mubr.f32.gmra.mrb[0].mxu0 %v962
      %v1083 = vpop.f32.mrb[0].mxu0
      %v1084 = vadd.f32 0.0, %v1083
      %v1085 = vpop.f32.mrb[0].mxu0
      %1086 = vmatprep.mubr.f32.mxu0 0.0
      %1087 = vmatmul.mubr.f32.gmra.mrb[0].mxu0 %v965
      %v1088 = vpop.f32.mrb[0].mxu0
      %v1089 = vadd.f32 0.0, %v1088
      %v1090 = vpop.f32.mrb[0].mxu0
      %1091 = vdwg.mxu0
      %v1092 = vadd.f32 %v904, %v1034
      %v1093 = vadd.f32 %v905, %v1039
      %v1094 = vadd.f32 %v906, %v1044
      %v1095 = vadd.f32 %v907, %v1049
      %v1096 = vadd.f32 %v908, %v1054
      %v1097 = vadd.f32 %v909, %v1059
      %v1098 = vadd.f32 %v910, %v1064
      %v1099 = vadd.f32 %v911, %v1069
      %v1100 = vadd.f32 %v912, %v1074
      %v1101 = vadd.f32 %v913, %v1079
      %v1102 = vadd.f32 %v914, %v1084
      %v1103 = vadd.f32 %v915, %v1089
      %v1104 = vld [vmem:[%s354 + $0x4] sm:$0xff]
      %v1105 = vld [vmem:[%s354 + $0xc] sm:$0xff]
      %v1106 = vld [vmem:[%s354 + $0x14] sm:$0xff]
      %v1107 = vld [vmem:[%s354 + $0x1c] sm:$0xff]
      %v1108 = vld [vmem:[%s354 + $0x24] sm:$0xff]
      %v1109 = vld [vmem:[%s354 + $0x2c] sm:$0xff]
      %v1110 = vld [vmem:[%s354 + $0x34] sm:$0xff]
      %v1111 = vld [vmem:[%s354 + $0x3c] sm:$0xff]
      %v1112 = vld [vmem:[%s354 + $0x44] sm:$0xff]
      %v1113 = vld [vmem:[%s354 + $0x4c] sm:$0xff]
      %v1114 = vld [vmem:[%s354 + $0x54] sm:$0xff]
      %v1115 = vld [vmem:[%s354 + $0x5c] sm:$0xff]
      %s1116 = scalar_lea.vmem %s2, 64
      %v1117 = vld [vmem:[%s1116] sm:$0xff]
      %v1118 = vld [vmem:[%s1116 + $0x8] sm:$0xff]
      %v1120 = vsel %vm405, %v1104, 0
      %v1123 = vsel %vm405, %v1105, 0
      %v1126 = vsel %vm405, %v1106, 0
      %v1129 = vsel %vm405, %v1107, 0
      %v1132 = vsel %vm405, %v1108, 0
      %v1135 = vsel %vm405, %v1109, 0
      %v1138 = vsel %vm405, %v1110, 0
      %v1141 = vsel %vm405, %v1111, 0
      %v1144 = vsel %vm405, %v1112, 0
      %v1147 = vsel %vm405, %v1113, 0
      %v1150 = vsel %vm405, %v1114, 0
      %v1153 = vsel %vm405, %v1115, 0
      %1155 = vmatprep.subr.mxu0 0.0
      %1156 = vmatpush1.msra.mxu0 %v1117
      %1157 = vmatprep.subr.mxu0 0.0
      %1158 = vmatpush1.msra.mxu0 %v1118
      %1159 = vmatprep.subr.mxu0 0.0
      %1160 = vmatpush1.msra.mxu0 0.0
      %1161 = vmatprep.subr.mxu0 0.0
      %1162 = vmatpush1.msra.mxu0 0.0
      %1163 = vmatprep.subr.mxu0 0.0
      %1164 = vmatpush1.msra.mxu0 0.0
      %1165 = vmatprep.subr.mxu0 0.0
      %1166 = vmatpush1.msra.mxu0 0.0
      %1167 = vmatprep.subr.mxu0 0.0
      %1168 = vmatpush1.msra.mxu0 0.0
      %1169 = vmatprep.subr.mxu0 0.0
      %1170 = vmatpush1.msra.mxu0 0.0
      %1171 = vmatprep.subr.mxu0 0.0
      %1172 = vmatpush1.msra.mxu0 0.0
      %1173 = vmatprep.subr.mxu0 0.0
      %1174 = vmatpush1.msra.mxu0 0.0
      %1175 = vmatprep.subr.mxu0 0.0
      %1176 = vmatpush1.msra.mxu0 0.0
      %1177 = vmatprep.subr.mxu0 0.0
      %1178 = vmatpush1.msra.mxu0 0.0
      %1179 = vmatprep.subr.mxu0 0.0
      %1180 = vmatpush1.msra.mxu0 0.0
      %1181 = vmatprep.subr.mxu0 0.0
      %1182 = vmatpush1.msra.mxu0 0.0
      %1183 = vmatprep.subr.mxu0 0.0
      %1184 = vmatpush1.msra.mxu0 0.0
      %1185 = vmatprep.subr.mxu0 0.0
      %1186 = vmatpush1.msra.mxu0 0.0
      %1187 = vmatprep.subr.mxu0 0.0
      %1188 = vmatpush1.msra.mxu0 0.0
      %1189 = vmatprep.subr.mxu0 0.0
      %1190 = vmatpush1.msra.mxu0 0.0
      %1191 = vmatprep.subr.mxu0 0.0
      %1192 = vmatpush1.msra.mxu0 0.0
      %1193 = vmatprep.subr.mxu0 0.0
      %1194 = vmatpush1.msra.mxu0 0.0
      %1195 = vmatprep.subr.mxu0 0.0
      %1196 = vmatpush1.msra.mxu0 0.0
      %1197 = vmatprep.subr.mxu0 0.0
      %1198 = vmatpush1.msra.mxu0 0.0
      %1199 = vmatprep.subr.mxu0 0.0
      %1200 = vmatpush1.msra.mxu0 0.0
      %1201 = vmatprep.subr.mxu0 0.0
      %1202 = vmatpush1.msra.mxu0 0.0
      %1203 = vmatprep.subr.mxu0 0.0
      %1204 = vmatpush1.msra.mxu0 0.0
      %1205 = vmatprep.subr.mxu0 0.0
      %1206 = vmatpush1.msra.mxu0 0.0
      %1207 = vmatprep.subr.mxu0 0.0
      %1208 = vmatpush1.msra.mxu0 0.0
      %1209 = vmatprep.subr.mxu0 0.0
      %1210 = vmatpush1.msra.mxu0 0.0
      %1211 = vmatprep.subr.mxu0 0.0
      %1212 = vmatpush1.msra.mxu0 0.0
      %1213 = vmatprep.subr.mxu0 0.0
      %1214 = vmatpush1.msra.mxu0 0.0
      %1215 = vmatprep.subr.mxu0 0.0
      %1216 = vmatpush1.msra.mxu0 0.0
      %1217 = vmatprep.subr.mxu0 0.0
      %1218 = vmatpush1.msra.mxu0 0.0
      %1219 = vmatprep.mubr.f32.mxu0 0.0
      %1220 = vmatmul.mubr.f32.gmra.mrb[0].mxu0 %v1120
      %v1221 = vpop.f32.mrb[0].mxu0
      %v1222 = vadd.f32 0.0, %v1221
      %v1223 = vpop.f32.mrb[0].mxu0
      %1224 = vmatprep.mubr.f32.mxu0 0.0
      %1225 = vmatmul.mubr.f32.gmra.mrb[0].mxu0 %v1123
      %v1226 = vpop.f32.mrb[0].mxu0
      %v1227 = vadd.f32 0.0, %v1226
      %v1228 = vpop.f32.mrb[0].mxu0
      %1229 = vmatprep.mubr.f32.mxu0 0.0
      %1230 = vmatmul.mubr.f32.gmra.mrb[0].mxu0 %v1126
      %v1231 = vpop.f32.mrb[0].mxu0
      %v1232 = vadd.f32 0.0, %v1231
      %v1233 = vpop.f32.mrb[0].mxu0
      %1234 = vmatprep.mubr.f32.mxu0 0.0
      %1235 = vmatmul.mubr.f32.gmra.mrb[0].mxu0 %v1129
      %v1236 = vpop.f32.mrb[0].mxu0
      %v1237 = vadd.f32 0.0, %v1236
      %v1238 = vpop.f32.mrb[0].mxu0
      %1239 = vmatprep.mubr.f32.mxu0 0.0
      %1240 = vmatmul.mubr.f32.gmra.mrb[0].mxu0 %v1132
      %v1241 = vpop.f32.mrb[0].mxu0
      %v1242 = vadd.f32 0.0, %v1241
      %v1243 = vpop.f32.mrb[0].mxu0
      %1244 = vmatprep.mubr.f32.mxu0 0.0
      %1245 = vmatmul.mubr.f32.gmra.mrb[0].mxu0 %v1135
      %v1246 = vpop.f32.mrb[0].mxu0
      %v1247 = vadd.f32 0.0, %v1246
      %v1248 = vpop.f32.mrb[0].mxu0
      %1249 = vmatprep.mubr.f32.mxu0 0.0
      %1250 = vmatmul.mubr.f32.gmra.mrb[0].mxu0 %v1138
      %v1251 = vpop.f32.mrb[0].mxu0
      %v1252 = vadd.f32 0.0, %v1251
      %v1253 = vpop.f32.mrb[0].mxu0
      %1254 = vmatprep.mubr.f32.mxu0 0.0
      %1255 = vmatmul.mubr.f32.gmra.mrb[0].mxu0 %v1141
      %v1256 = vpop.f32.mrb[0].mxu0
      %v1257 = vadd.f32 0.0, %v1256
      %v1258 = vpop.f32.mrb[0].mxu0
      %1259 = vmatprep.mubr.f32.mxu0 0.0
      %1260 = vmatmul.mubr.f32.gmra.mrb[0].mxu0 %v1144
      %v1261 = vpop.f32.mrb[0].mxu0
      %v1262 = vadd.f32 0.0, %v1261
      %v1263 = vpop.f32.mrb[0].mxu0
      %1264 = vmatprep.mubr.f32.mxu0 0.0
      %1265 = vmatmul.mubr.f32.gmra.mrb[0].mxu0 %v1147
      %v1266 = vpop.f32.mrb[0].mxu0
      %v1267 = vadd.f32 0.0, %v1266
      %v1268 = vpop.f32.mrb[0].mxu0
      %1269 = vmatprep.mubr.f32.mxu0 0.0
      %1270 = vmatmul.mubr.f32.gmra.mrb[0].mxu0 %v1150
      %v1271 = vpop.f32.mrb[0].mxu0
      %v1272 = vadd.f32 0.0, %v1271
      %v1273 = vpop.f32.mrb[0].mxu0
      %1274 = vmatprep.mubr.f32.mxu0 0.0
      %1275 = vmatmul.mubr.f32.gmra.mrb[0].mxu0 %v1153
      %v1276 = vpop.f32.mrb[0].mxu0
      %v1277 = vadd.f32 0.0, %v1276
      %v1278 = vpop.f32.mrb[0].mxu0
      %1279 = vdwg.mxu0
      %v1280 = vadd.f32 %v1092, %v1222
      %v1281 = vadd.f32 %v1093, %v1227
      %v1282 = vadd.f32 %v1094, %v1232
      %v1283 = vadd.f32 %v1095, %v1237
      %v1284 = vadd.f32 %v1096, %v1242
      %v1285 = vadd.f32 %v1097, %v1247
      %v1286 = vadd.f32 %v1098, %v1252
      %v1287 = vadd.f32 %v1099, %v1257
      %v1288 = vadd.f32 %v1100, %v1262
      %v1289 = vadd.f32 %v1101, %v1267
      %v1290 = vadd.f32 %v1102, %v1272
      %v1291 = vadd.f32 %v1103, %v1277
      %v1292 = vld [vmem:[%s3] sm:$0x1]
      %v1294 = vlaneseq
      %v1295 = vshrl.u32 %v1294, 7
      %v1296 = vsub.s32 0, %v1295
      %v1297 = vrot.slane %v1292, %v1296
      %v1299 = vadd.f32 %v1280, %v1297
      %v1300 = vadd.f32 %v1281, %v1297
      %v1301 = vadd.f32 %v1282, %v1297
      %v1302 = vadd.f32 %v1283, %v1297
      %v1303 = vadd.f32 %v1284, %v1297
      %v1304 = vadd.f32 %v1285, %v1297
      %v1305 = vadd.f32 %v1286, %v1297
      %v1306 = vadd.f32 %v1287, %v1297
      %v1307 = vadd.f32 %v1288, %v1297
      %v1308 = vadd.f32 %v1289, %v1297
      %v1309 = vadd.f32 %v1290, %v1297
      %v1310 = vadd.f32 %v1291, %v1297
      %v1311 = vmax.f32 %v1299, 0.0
      %v1312 = vmax.f32 %v1300, 0.0
      %v1313 = vmax.f32 %v1301, 0.0
      %v1314 = vmax.f32 %v1302, 0.0
      %v1315 = vmax.f32 %v1303, 0.0
      %v1316 = vmax.f32 %v1304, 0.0
      %v1317 = vmax.f32 %v1305, 0.0
      %v1318 = vmax.f32 %v1306, 0.0
      %v1319 = vmax.f32 %v1307, 0.0
      %v1320 = vmax.f32 %v1308, 0.0
      %v1321 = vmax.f32 %v1309, 0.0
      %v1322 = vmax.f32 %v1310, 0.0
      %vm1323 = vcmask 588800
      %1324 = vst.msk [vmem:[#allocation2] sm:$0xff] %vm1323, %v1311
      %1325 = vst.msk [vmem:[#allocation2 + $0x8] sm:$0xff] %vm1323, %v1312
      %1326 = vst.msk [vmem:[#allocation2 + $0x10] sm:$0xff] %vm1323, %v1313
      %1327 = vst.msk [vmem:[#allocation2 + $0x18] sm:$0xff] %vm1323, %v1314
      %1328 = vst.msk [vmem:[#allocation2 + $0x20] sm:$0xff] %vm1323, %v1315
      %1329 = vst.msk [vmem:[#allocation2 + $0x28] sm:$0xff] %vm1323, %v1316
      %1330 = vst.msk [vmem:[#allocation2 + $0x30] sm:$0xff] %vm1323, %v1317
      %1331 = vst.msk [vmem:[#allocation2 + $0x38] sm:$0xff] %vm1323, %v1318
      %1332 = vst.msk [vmem:[#allocation2 + $0x40] sm:$0xff] %vm1323, %v1319
      %1333 = vst.msk [vmem:[#allocation2 + $0x48] sm:$0xff] %vm1323, %v1320
      %1334 = vst.msk [vmem:[#allocation2 + $0x50] sm:$0xff] %vm1323, %v1321
      %1335 = vst.msk [vmem:[#allocation2 + $0x58] sm:$0xff] %vm1323, %v1322
      %vm1336 = vcmp.ge.s32.totalorder %v364, 8
      %vm1337 = vcmp.ge.s32.totalorder %v365, 8
      %vm1338 = vcmp.ge.s32.totalorder %v366, 8
      %vm1339 = vcmp.ge.s32.totalorder %v367, 8
      %vm1340 = vcmp.ge.s32.totalorder %v368, 8
      %vm1341 = vcmp.ge.s32.totalorder %v369, 8
      %vm1342 = vcmp.ge.s32.totalorder %v370, 8
      %vm1343 = vcmp.ge.s32.totalorder %v371, 8
      %vm1344 = vcmp.ge.s32.totalorder %v372, 8
      %vm1345 = vcmp.ge.s32.totalorder %v373, 8
      %vm1346 = vcmp.ge.s32.totalorder %v374, 8
      %vm1347 = vcmp.ge.s32.totalorder %v375, 8
      %vm1348 = vcmp.lt.s32.totalorder %v364, 16
      %vm1349 = vcmp.lt.s32.totalorder %v365, 16
      %vm1350 = vcmp.lt.s32.totalorder %v366, 16
      %vm1351 = vcmp.lt.s32.totalorder %v367, 16
      %vm1352 = vcmp.lt.s32.totalorder %v368, 16
      %vm1353 = vcmp.lt.s32.totalorder %v369, 16
      %vm1354 = vcmp.lt.s32.totalorder %v370, 16
      %vm1355 = vcmp.lt.s32.totalorder %v371, 16
      %vm1356 = vcmp.lt.s32.totalorder %v372, 16
      %vm1357 = vcmp.lt.s32.totalorder %v373, 16
      %vm1358 = vcmp.lt.s32.totalorder %v374, 16
      %vm1359 = vcmp.lt.s32.totalorder %v375, 16
      %vm1360 = vmand %vm1336, %vm1348
      %vm1361 = vmand %vm1337, %vm1349
      %vm1362 = vmand %vm1338, %vm1350
      %vm1363 = vmand %vm1339, %vm1351
      %vm1364 = vmand %vm1340, %vm1352
      %vm1365 = vmand %vm1341, %vm1353
      %vm1366 = vmand %vm1342, %vm1354
      %vm1367 = vmand %vm1343, %vm1355
      %vm1368 = vmand %vm1344, %vm1356
      %vm1369 = vmand %vm1345, %vm1357
      %vm1370 = vmand %vm1346, %vm1358
      %vm1371 = vmand %vm1347, %vm1359
      %v1372 = vld [vmem:[#allocation2] sm:$0xff]
      %v1373 = vld [vmem:[#allocation2 + $0x8] sm:$0xff]
      %v1374 = vld [vmem:[#allocation2 + $0x10] sm:$0xff]
      %v1375 = vld [vmem:[#allocation2 + $0x18] sm:$0xff]
      %v1376 = vld [vmem:[#allocation2 + $0x20] sm:$0xff]
      %v1377 = vld [vmem:[#allocation2 + $0x28] sm:$0xff]
      %v1378 = vld [vmem:[#allocation2 + $0x30] sm:$0xff]
      %v1379 = vld [vmem:[#allocation2 + $0x38] sm:$0xff]
      %v1380 = vld [vmem:[#allocation2 + $0x40] sm:$0xff]
      %v1381 = vld [vmem:[#allocation2 + $0x48] sm:$0xff]
      %v1382 = vld [vmem:[#allocation2 + $0x50] sm:$0xff]
      %v1383 = vld [vmem:[#allocation2 + $0x58] sm:$0xff]
      %v1384 = vld [vmem:[%s4] sm:$0xff]
      %v1385 = vld [vmem:[%s4 + $0x8] sm:$0xff]
      %v1386 = vld [vmem:[%s4 + $0x10] sm:$0xff]
      %v1387 = vld [vmem:[%s4 + $0x18] sm:$0xff]
      %v1388 = vld [vmem:[%s4 + $0x20] sm:$0xff]
      %v1389 = vld [vmem:[%s4 + $0x28] sm:$0xff]
      %v1390 = vld [vmem:[%s4 + $0x30] sm:$0xff]
      %v1391 = vld [vmem:[%s4 + $0x38] sm:$0xff]
      %v1392 = vld [vmem:[%s4 + $0x40] sm:$0xff]
      %v1393 = vld [vmem:[#allocation2 + $0x1] sm:$0xff]
      %v1394 = vld [vmem:[#allocation2 + $0x9] sm:$0xff]
      %v1395 = vld [vmem:[#allocation2 + $0x11] sm:$0xff]
      %v1396 = vld [vmem:[#allocation2 + $0x19] sm:$0xff]
      %v1397 = vld [vmem:[#allocation2 + $0x21] sm:$0xff]
      %v1398 = vld [vmem:[#allocation2 + $0x29] sm:$0xff]
      %v1399 = vld [vmem:[#allocation2 + $0x31] sm:$0xff]
      %v1400 = vld [vmem:[#allocation2 + $0x39] sm:$0xff]
      %v1401 = vld [vmem:[#allocation2 + $0x41] sm:$0xff]
      %v1402 = vld [vmem:[#allocation2 + $0x49] sm:$0xff]
      %v1403 = vld [vmem:[#allocation2 + $0x51] sm:$0xff]
      %v1404 = vld [vmem:[#allocation2 + $0x59] sm:$0xff]
      %s1405 = scalar_lea.vmem %s4, 72
      %v1406 = vld [vmem:[%s1405] sm:$0xff]
      %v1407 = vld [vmem:[%s1405 + $0x8] sm:$0xff]
      %v1408 = vld [vmem:[%s1405 + $0x10] sm:$0xff]
      %v1409 = vld [vmem:[%s1405 + $0x18] sm:$0xff]
      %v1410 = vld [vmem:[%s1405 + $0x20] sm:$0xff]
      %v1411 = vld [vmem:[%s1405 + $0x28] sm:$0xff]
      %v1412 = vld [vmem:[%s1405 + $0x30] sm:$0xff]
      %v1413 = vld [vmem:[%s1405 + $0x38] sm:$0xff]
      %v1414 = vld [vmem:[%s1405 + $0x40] sm:$0xff]
      %v1416 = vsel %vm1323, %v1393, 0
      %v1419 = vsel %vm1323, %v1394, 0
      %v1422 = vsel %vm1323, %v1395, 0
      %v1425 = vsel %vm1323, %v1396, 0
      %v1428 = vsel %vm1323, %v1397, 0
      %v1431 = vsel %vm1323, %v1398, 0
      %v1434 = vsel %vm1323, %v1399, 0
      %v1437 = vsel %vm1323, %v1400, 0
      %v1440 = vsel %vm1323, %v1401, 0
      %v1443 = vsel %vm1323, %v1402, 0
      %v1446 = vsel %vm1323, %v1403, 0
      %v1449 = vsel %vm1323, %v1404, 0
      %1451 = vmatprep.subr.mxu0 0.0
      %1452 = vmatpush1.msra.mxu0 %v1406
      %1453 = vmatprep.subr.mxu0 0.0
      %1454 = vmatpush1.msra.mxu0 %v1407
      %1455 = vmatprep.subr.mxu0 0.0
      %1456 = vmatpush1.msra.mxu0 %v1408
      %1457 = vmatprep.subr.mxu0 0.0
      %1458 = vmatpush1.msra.mxu0 %v1409
      %1459 = vmatprep.subr.mxu0 0.0
      %1460 = vmatpush1.msra.mxu0 %v1410
      %1461 = vmatprep.subr.mxu0 0.0
      %1462 = vmatpush1.msra.mxu0 %v1411
      %1463 = vmatprep.subr.mxu0 0.0
      %1464 = vmatpush1.msra.mxu0 %v1412
      %1465 = vmatprep.subr.mxu0 0.0
      %1466 = vmatpush1.msra.mxu0 %v1413
      %1467 = vmatprep.subr.mxu0 0.0
      %1468 = vmatpush1.msra.mxu0 %v1414
      %1469 = vmatprep.subr.mxu0 0.0
      %1470 = vmatpush1.msra.mxu0 0.0
      %1471 = vmatprep.subr.mxu0 0.0
      %1472 = vmatpush1.msra.mxu0 0.0
      %1473 = vmatprep.subr.mxu0 0.0
      %1474 = vmatpush1.msra.mxu0 0.0
      %1475 = vmatprep.subr.mxu0 0.0
      %1476 = vmatpush1.msra.mxu0 0.0
      %1477 = vmatprep.subr.mxu0 0.0
      %1478 = vmatpush1.msra.mxu0 0.0
      %1479 = vmatprep.subr.mxu0 0.0
      %1480 = vmatpush1.msra.mxu0 0.0
      %1481 = vmatprep.subr.mxu0 0.0
      %1482 = vmatpush1.msra.mxu0 0.0
      %1483 = vmatprep.subr.mxu0 0.0
      %1484 = vmatpush1.msra.mxu0 0.0
      %1485 = vmatprep.subr.mxu0 0.0
      %1486 = vmatpush1.msra.mxu0 0.0
      %1487 = vmatprep.subr.mxu0 0.0
      %1488 = vmatpush1.msra.mxu0 0.0
      %1489 = vmatprep.subr.mxu0 0.0
      %1490 = vmatpush1.msra.mxu0 0.0
      %1491 = vmatprep.subr.mxu0 0.0
      %1492 = vmatpush1.msra.mxu0 0.0
      %1493 = vmatprep.subr.mxu0 0.0
      %1494 = vmatpush1.msra.mxu0 0.0
      %1495 = vmatprep.subr.mxu0 0.0
      %1496 = vmatpush1.msra.mxu0 0.0
      %1497 = vmatprep.subr.mxu0 0.0
      %1498 = vmatpush1.msra.mxu0 0.0
      %1499 = vmatprep.subr.mxu0 0.0
      %1500 = vmatpush1.msra.mxu0 0.0
      %1501 = vmatprep.subr.mxu0 0.0
      %1502 = vmatpush1.msra.mxu0 0.0
      %1503 = vmatprep.subr.mxu0 0.0
      %1504 = vmatpush1.msra.mxu0 0.0
      %1505 = vmatprep.subr.mxu0 0.0
      %1506 = vmatpush1.msra.mxu0 0.0
      %1507 = vmatprep.subr.mxu0 0.0
      %1508 = vmatpush1.msra.mxu0 0.0
      %1509 = vmatprep.subr.mxu0 0.0
      %1510 = vmatpush1.msra.mxu0 0.0
      %1511 = vmatprep.subr.mxu0 0.0
      %1512 = vmatpush1.msra.mxu0 0.0
      %1513 = vmatprep.subr.mxu0 0.0
      %1514 = vmatpush1.msra.mxu0 0.0
      %1515 = vmatprep.mubr.f32.mxu0 0.0
      %1516 = vmatmul.mubr.f32.gmra.mrb[0].mxu0 %v1416
      %v1517 = vpop.f32.mrb[0].mxu0
      %v1518 = vadd.f32 0.0, %v1517
      %v1519 = vpop.f32.mrb[0].mxu0
      %1520 = vmatprep.mubr.f32.mxu0 0.0
      %1521 = vmatmul.mubr.f32.gmra.mrb[0].mxu0 %v1419
      %v1522 = vpop.f32.mrb[0].mxu0
      %v1523 = vadd.f32 0.0, %v1522
      %v1524 = vpop.f32.mrb[0].mxu0
      %1525 = vmatprep.mubr.f32.mxu0 0.0
      %1526 = vmatmul.mubr.f32.gmra.mrb[0].mxu0 %v1422
      %v1527 = vpop.f32.mrb[0].mxu0
      %v1528 = vadd.f32 0.0, %v1527
      %v1529 = vpop.f32.mrb[0].mxu0
      %1530 = vmatprep.mubr.f32.mxu0 0.0
      %1531 = vmatmul.mubr.f32.gmra.mrb[0].mxu0 %v1425
      %v1532 = vpop.f32.mrb[0].mxu0
      %v1533 = vadd.f32 0.0, %v1532
      %v1534 = vpop.f32.mrb[0].mxu0
      %1535 = vmatprep.mubr.f32.mxu0 0.0
      %1536 = vmatmul.mubr.f32.gmra.mrb[0].mxu0 %v1428
      %v1537 = vpop.f32.mrb[0].mxu0
      %v1538 = vadd.f32 0.0, %v1537
      %v1539 = vpop.f32.mrb[0].mxu0
      %1540 = vmatprep.mubr.f32.mxu0 0.0
      %1541 = vmatmul.mubr.f32.gmra.mrb[0].mxu0 %v1431
      %v1542 = vpop.f32.mrb[0].mxu0
      %v1543 = vadd.f32 0.0, %v1542
      %v1544 = vpop.f32.mrb[0].mxu0
      %1545 = vmatprep.mubr.f32.mxu0 0.0
      %1546 = vmatmul.mubr.f32.gmra.mrb[0].mxu0 %v1434
      %v1547 = vpop.f32.mrb[0].mxu0
      %v1548 = vadd.f32 0.0, %v1547
      %v1549 = vpop.f32.mrb[0].mxu0
      %1550 = vmatprep.mubr.f32.mxu0 0.0
      %1551 = vmatmul.mubr.f32.gmra.mrb[0].mxu0 %v1437
      %v1552 = vpop.f32.mrb[0].mxu0
      %v1553 = vadd.f32 0.0, %v1552
      %v1554 = vpop.f32.mrb[0].mxu0
      %1555 = vmatprep.mubr.f32.mxu0 0.0
      %1556 = vmatmul.mubr.f32.gmra.mrb[0].mxu0 %v1440
      %v1557 = vpop.f32.mrb[0].mxu0
      %v1558 = vadd.f32 0.0, %v1557
      %v1559 = vpop.f32.mrb[0].mxu0
      %1560 = vmatprep.mubr.f32.mxu0 0.0
      %1561 = vmatmul.mubr.f32.gmra.mrb[0].mxu0 %v1443
      %v1562 = vpop.f32.mrb[0].mxu0
      %v1563 = vadd.f32 0.0, %v1562
      %v1564 = vpop.f32.mrb[0].mxu0
      %1565 = vmatprep.mubr.f32.mxu0 0.0
      %1566 = vmatmul.mubr.f32.gmra.mrb[0].mxu0 %v1446
      %v1567 = vpop.f32.mrb[0].mxu0
      %v1568 = vadd.f32 0.0, %v1567
      %v1569 = vpop.f32.mrb[0].mxu0
      %1570 = vmatprep.mubr.f32.mxu0 0.0
      %1571 = vmatmul.mubr.f32.gmra.mrb[0].mxu0 %v1449
      %v1572 = vpop.f32.mrb[0].mxu0
      %v1573 = vadd.f32 0.0, %v1572
      %v1574 = vpop.f32.mrb[0].mxu0
      %1575 = vdwg.mxu0
      %v1577 = vsel %vm1323, %v1372, 0
      %v1580 = vsel %vm1323, %v1373, 0
      %v1583 = vsel %vm1323, %v1374, 0
      %v1586 = vsel %vm1323, %v1375, 0
      %v1589 = vsel %vm1323, %v1376, 0
      %v1592 = vsel %vm1323, %v1377, 0
      %v1595 = vsel %vm1323, %v1378, 0
      %v1598 = vsel %vm1323, %v1379, 0
      %v1601 = vsel %vm1323, %v1380, 0
      %v1604 = vsel %vm1323, %v1381, 0
      %v1607 = vsel %vm1323, %v1382, 0
      %v1610 = vsel %vm1323, %v1383, 0
      %1612 = vmatprep.subr.mxu0 0.0
      %1613 = vmatpush1.msra.mxu0 %v1384
      %1614 = vmatprep.subr.mxu0 0.0
      %1615 = vmatpush1.msra.mxu0 %v1385
      %1616 = vmatprep.subr.mxu0 0.0
      %1617 = vmatpush1.msra.mxu0 %v1386
      %1618 = vmatprep.subr.mxu0 0.0
      %1619 = vmatpush1.msra.mxu0 %v1387
      %1620 = vmatprep.subr.mxu0 0.0
      %1621 = vmatpush1.msra.mxu0 %v1388
      %1622 = vmatprep.subr.mxu0 0.0
      %1623 = vmatpush1.msra.mxu0 %v1389
      %1624 = vmatprep.subr.mxu0 0.0
      %1625 = vmatpush1.msra.mxu0 %v1390
      %1626 = vmatprep.subr.mxu0 0.0
      %1627 = vmatpush1.msra.mxu0 %v1391
      %1628 = vmatprep.subr.mxu0 0.0
      %1629 = vmatpush1.msra.mxu0 %v1392
      %1630 = vmatprep.subr.mxu0 0.0
      %1631 = vmatpush1.msra.mxu0 0.0
      %1632 = vmatprep.subr.mxu0 0.0
      %1633 = vmatpush1.msra.mxu0 0.0
      %1634 = vmatprep.subr.mxu0 0.0
      %1635 = vmatpush1.msra.mxu0 0.0
      %1636 = vmatprep.subr.mxu0 0.0
      %1637 = vmatpush1.msra.mxu0 0.0
      %1638 = vmatprep.subr.mxu0 0.0
      %1639 = vmatpush1.msra.mxu0 0.0
      %1640 = vmatprep.subr.mxu0 0.0
      %1641 = vmatpush1.msra.mxu0 0.0
      %1642 = vmatprep.subr.mxu0 0.0
      %1643 = vmatpush1.msra.mxu0 0.0
      %1644 = vmatprep.subr.mxu0 0.0
      %1645 = vmatpush1.msra.mxu0 0.0
      %1646 = vmatprep.subr.mxu0 0.0
      %1647 = vmatpush1.msra.mxu0 0.0
      %1648 = vmatprep.subr.mxu0 0.0
      %1649 = vmatpush1.msra.mxu0 0.0
      %1650 = vmatprep.subr.mxu0 0.0
      %1651 = vmatpush1.msra.mxu0 0.0
      %1652 = vmatprep.subr.mxu0 0.0
      %1653 = vmatpush1.msra.mxu0 0.0
      %1654 = vmatprep.subr.mxu0 0.0
      %1655 = vmatpush1.msra.mxu0 0.0
      %1656 = vmatprep.subr.mxu0 0.0
      %1657 = vmatpush1.msra.mxu0 0.0
      %1658 = vmatprep.subr.mxu0 0.0
      %1659 = vmatpush1.msra.mxu0 0.0
      %1660 = vmatprep.subr.mxu0 0.0
      %1661 = vmatpush1.msra.mxu0 0.0
      %1662 = vmatprep.subr.mxu0 0.0
      %1663 = vmatpush1.msra.mxu0 0.0
      %1664 = vmatprep.subr.mxu0 0.0
      %1665 = vmatpush1.msra.mxu0 0.0
      %1666 = vmatprep.subr.mxu0 0.0
      %1667 = vmatpush1.msra.mxu0 0.0
      %1668 = vmatprep.subr.mxu0 0.0
      %1669 = vmatpush1.msra.mxu0 0.0
      %1670 = vmatprep.subr.mxu0 0.0
      %1671 = vmatpush1.msra.mxu0 0.0
      %1672 = vmatprep.subr.mxu0 0.0
      %1673 = vmatpush1.msra.mxu0 0.0
      %1674 = vmatprep.subr.mxu0 0.0
      %1675 = vmatpush1.msra.mxu0 0.0
      %1676 = vmatprep.mubr.f32.mxu0 0.0
      %1677 = vmatmul.mubr.f32.gmra.mrb[0].mxu0 %v1577
      %v1678 = vpop.f32.mrb[0].mxu0
      %v1679 = vadd.f32 %v1518, %v1678
      %v1680 = vpop.f32.mrb[0].mxu0
      %1681 = vmatprep.mubr.f32.mxu0 0.0
      %1682 = vmatmul.mubr.f32.gmra.mrb[0].mxu0 %v1580
      %v1683 = vpop.f32.mrb[0].mxu0
      %v1684 = vadd.f32 %v1523, %v1683
      %v1685 = vpop.f32.mrb[0].mxu0
      %1686 = vmatprep.mubr.f32.mxu0 0.0
      %1687 = vmatmul.mubr.f32.gmra.mrb[0].mxu0 %v1583
      %v1688 = vpop.f32.mrb[0].mxu0
      %v1689 = vadd.f32 %v1528, %v1688
      %v1690 = vpop.f32.mrb[0].mxu0
      %1691 = vmatprep.mubr.f32.mxu0 0.0
      %1692 = vmatmul.mubr.f32.gmra.mrb[0].mxu0 %v1586
      %v1693 = vpop.f32.mrb[0].mxu0
      %v1694 = vadd.f32 %v1533, %v1693
      %v1695 = vpop.f32.mrb[0].mxu0
      %1696 = vmatprep.mubr.f32.mxu0 0.0
      %1697 = vmatmul.mubr.f32.gmra.mrb[0].mxu0 %v1589
      %v1698 = vpop.f32.mrb[0].mxu0
      %v1699 = vadd.f32 %v1538, %v1698
      %v1700 = vpop.f32.mrb[0].mxu0
      %1701 = vmatprep.mubr.f32.mxu0 0.0
      %1702 = vmatmul.mubr.f32.gmra.mrb[0].mxu0 %v1592
      %v1703 = vpop.f32.mrb[0].mxu0
      %v1704 = vadd.f32 %v1543, %v1703
      %v1705 = vpop.f32.mrb[0].mxu0
      %1706 = vmatprep.mubr.f32.mxu0 0.0
      %1707 = vmatmul.mubr.f32.gmra.mrb[0].mxu0 %v1595
      %v1708 = vpop.f32.mrb[0].mxu0
      %v1709 = vadd.f32 %v1548, %v1708
      %v1710 = vpop.f32.mrb[0].mxu0
      %1711 = vmatprep.mubr.f32.mxu0 0.0
      %1712 = vmatmul.mubr.f32.gmra.mrb[0].mxu0 %v1598
      %v1713 = vpop.f32.mrb[0].mxu0
      %v1714 = vadd.f32 %v1553, %v1713
      %v1715 = vpop.f32.mrb[0].mxu0
      %1716 = vmatprep.mubr.f32.mxu0 0.0
      %1717 = vmatmul.mubr.f32.gmra.mrb[0].mxu0 %v1601
      %v1718 = vpop.f32.mrb[0].mxu0
      %v1719 = vadd.f32 %v1558, %v1718
      %v1720 = vpop.f32.mrb[0].mxu0
      %1721 = vmatprep.mubr.f32.mxu0 0.0
      %1722 = vmatmul.mubr.f32.gmra.mrb[0].mxu0 %v1604
      %v1723 = vpop.f32.mrb[0].mxu0
      %v1724 = vadd.f32 %v1563, %v1723
      %v1725 = vpop.f32.mrb[0].mxu0
      %1726 = vmatprep.mubr.f32.mxu0 0.0
      %1727 = vmatmul.mubr.f32.gmra.mrb[0].mxu0 %v1607
      %v1728 = vpop.f32.mrb[0].mxu0
      %v1729 = vadd.f32 %v1568, %v1728
      %v1730 = vpop.f32.mrb[0].mxu0
      %1731 = vmatprep.mubr.f32.mxu0 0.0
      %1732 = vmatmul.mubr.f32.gmra.mrb[0].mxu0 %v1610
      %v1733 = vpop.f32.mrb[0].mxu0
      %v1734 = vadd.f32 %v1573, %v1733
      %v1735 = vpop.f32.mrb[0].mxu0
      %1736 = vdwg.mxu0
      %v1737 = vld [vmem:[#allocation2 + $0x2] sm:$0xff]
      %v1738 = vld [vmem:[#allocation2 + $0xa] sm:$0xff]
      %v1739 = vld [vmem:[#allocation2 + $0x12] sm:$0xff]
      %v1740 = vld [vmem:[#allocation2 + $0x1a] sm:$0xff]
      %v1741 = vld [vmem:[#allocation2 + $0x22] sm:$0xff]
      %v1742 = vld [vmem:[#allocation2 + $0x2a] sm:$0xff]
      %v1743 = vld [vmem:[#allocation2 + $0x32] sm:$0xff]
      %v1744 = vld [vmem:[#allocation2 + $0x3a] sm:$0xff]
      %v1745 = vld [vmem:[#allocation2 + $0x42] sm:$0xff]
      %v1746 = vld [vmem:[#allocation2 + $0x4a] sm:$0xff]
      %v1747 = vld [vmem:[#allocation2 + $0x52] sm:$0xff]
      %v1748 = vld [vmem:[#allocation2 + $0x5a] sm:$0xff]
      %s1749 = scalar_lea.vmem %s4, 144
      %v1750 = vld [vmem:[%s1749] sm:$0xff]
      %v1751 = vld [vmem:[%s1749 + $0x8] sm:$0xff]
      %v1752 = vld [vmem:[%s1749 + $0x10] sm:$0xff]
      %v1753 = vld [vmem:[%s1749 + $0x18] sm:$0xff]
      %v1754 = vld [vmem:[%s1749 + $0x20] sm:$0xff]
      %v1755 = vld [vmem:[%s1749 + $0x28] sm:$0xff]
      %v1756 = vld [vmem:[%s1749 + $0x30] sm:$0xff]
      %v1757 = vld [vmem:[%s1749 + $0x38] sm:$0xff]
      %v1758 = vld [vmem:[%s1749 + $0x40] sm:$0xff]
      %v1760 = vsel %vm1323, %v1737, 0
      %v1763 = vsel %vm1323, %v1738, 0
      %v1766 = vsel %vm1323, %v1739, 0
      %v1769 = vsel %vm1323, %v1740, 0
      %v1772 = vsel %vm1323, %v1741, 0
      %v1775 = vsel %vm1323, %v1742, 0
      %v1778 = vsel %vm1323, %v1743, 0
      %v1781 = vsel %vm1323, %v1744, 0
      %v1784 = vsel %vm1323, %v1745, 0
      %v1787 = vsel %vm1323, %v1746, 0
      %v1790 = vsel %vm1323, %v1747, 0
      %v1793 = vsel %vm1323, %v1748, 0
      %1795 = vmatprep.subr.mxu0 0.0
      %1796 = vmatpush1.msra.mxu0 %v1750
      %1797 = vmatprep.subr.mxu0 0.0
      %1798 = vmatpush1.msra.mxu0 %v1751
      %1799 = vmatprep.subr.mxu0 0.0
      %1800 = vmatpush1.msra.mxu0 %v1752
      %1801 = vmatprep.subr.mxu0 0.0
      %1802 = vmatpush1.msra.mxu0 %v1753
      %1803 = vmatprep.subr.mxu0 0.0
      %1804 = vmatpush1.msra.mxu0 %v1754
      %1805 = vmatprep.subr.mxu0 0.0
      %1806 = vmatpush1.msra.mxu0 %v1755
      %1807 = vmatprep.subr.mxu0 0.0
      %1808 = vmatpush1.msra.mxu0 %v1756
      %1809 = vmatprep.subr.mxu0 0.0
      %1810 = vmatpush1.msra.mxu0 %v1757
      %1811 = vmatprep.subr.mxu0 0.0
      %1812 = vmatpush1.msra.mxu0 %v1758
      %1813 = vmatprep.subr.mxu0 0.0
      %1814 = vmatpush1.msra.mxu0 0.0
      %1815 = vmatprep.subr.mxu0 0.0
      %1816 = vmatpush1.msra.mxu0 0.0
      %1817 = vmatprep.subr.mxu0 0.0
      %1818 = vmatpush1.msra.mxu0 0.0
      %1819 = vmatprep.subr.mxu0 0.0
      %1820 = vmatpush1.msra.mxu0 0.0
      %1821 = vmatprep.subr.mxu0 0.0
      %1822 = vmatpush1.msra.mxu0 0.0
      %1823 = vmatprep.subr.mxu0 0.0
      %1824 = vmatpush1.msra.mxu0 0.0
      %1825 = vmatprep.subr.mxu0 0.0
      %1826 = vmatpush1.msra.mxu0 0.0
      %1827 = vmatprep.subr.mxu0 0.0
      %1828 = vmatpush1.msra.mxu0 0.0
      %1829 = vmatprep.subr.mxu0 0.0
      %1830 = vmatpush1.msra.mxu0 0.0
      %1831 = vmatprep.subr.mxu0 0.0
      %1832 = vmatpush1.msra.mxu0 0.0
      %1833 = vmatprep.subr.mxu0 0.0
      %1834 = vmatpush1.msra.mxu0 0.0
      %1835 = vmatprep.subr.mxu0 0.0
      %1836 = vmatpush1.msra.mxu0 0.0
      %1837 = vmatprep.subr.mxu0 0.0
      %1838 = vmatpush1.msra.mxu0 0.0
      %1839 = vmatprep.subr.mxu0 0.0
      %1840 = vmatpush1.msra.mxu0 0.0
      %1841 = vmatprep.subr.mxu0 0.0
      %1842 = vmatpush1.msra.mxu0 0.0
      %1843 = vmatprep.subr.mxu0 0.0
      %1844 = vmatpush1.msra.mxu0 0.0
      %1845 = vmatprep.subr.mxu0 0.0
      %1846 = vmatpush1.msra.mxu0 0.0
      %1847 = vmatprep.subr.mxu0 0.0
      %1848 = vmatpush1.msra.mxu0 0.0
      %1849 = vmatprep.subr.mxu0 0.0
      %1850 = vmatpush1.msra.mxu0 0.0
      %1851 = vmatprep.subr.mxu0 0.0
      %1852 = vmatpush1.msra.mxu0 0.0
      %1853 = vmatprep.subr.mxu0 0.0
      %1854 = vmatpush1.msra.mxu0 0.0
      %1855 = vmatprep.subr.mxu0 0.0
      %1856 = vmatpush1.msra.mxu0 0.0
      %1857 = vmatprep.subr.mxu0 0.0
      %1858 = vmatpush1.msra.mxu0 0.0
      %1859 = vmatprep.mubr.f32.mxu0 0.0
      %1860 = vmatmul.mubr.f32.gmra.mrb[0].mxu0 %v1760
      %v1861 = vpop.f32.mrb[0].mxu0
      %v1862 = vadd.f32 0.0, %v1861
      %v1863 = vpop.f32.mrb[0].mxu0
      %1864 = vmatprep.mubr.f32.mxu0 0.0
      %1865 = vmatmul.mubr.f32.gmra.mrb[0].mxu0 %v1763
      %v1866 = vpop.f32.mrb[0].mxu0
      %v1867 = vadd.f32 0.0, %v1866
      %v1868 = vpop.f32.mrb[0].mxu0
      %1869 = vmatprep.mubr.f32.mxu0 0.0
      %1870 = vmatmul.mubr.f32.gmra.mrb[0].mxu0 %v1766
      %v1871 = vpop.f32.mrb[0].mxu0
      %v1872 = vadd.f32 0.0, %v1871
      %v1873 = vpop.f32.mrb[0].mxu0
      %1874 = vmatprep.mubr.f32.mxu0 0.0
      %1875 = vmatmul.mubr.f32.gmra.mrb[0].mxu0 %v1769
      %v1876 = vpop.f32.mrb[0].mxu0
      %v1877 = vadd.f32 0.0, %v1876
      %v1878 = vpop.f32.mrb[0].mxu0
      %1879 = vmatprep.mubr.f32.mxu0 0.0
      %1880 = vmatmul.mubr.f32.gmra.mrb[0].mxu0 %v1772
      %v1881 = vpop.f32.mrb[0].mxu0
      %v1882 = vadd.f32 0.0, %v1881
      %v1883 = vpop.f32.mrb[0].mxu0
      %1884 = vmatprep.mubr.f32.mxu0 0.0
      %1885 = vmatmul.mubr.f32.gmra.mrb[0].mxu0 %v1775
      %v1886 = vpop.f32.mrb[0].mxu0
      %v1887 = vadd.f32 0.0, %v1886
      %v1888 = vpop.f32.mrb[0].mxu0
      %1889 = vmatprep.mubr.f32.mxu0 0.0
      %1890 = vmatmul.mubr.f32.gmra.mrb[0].mxu0 %v1778
      %v1891 = vpop.f32.mrb[0].mxu0
      %v1892 = vadd.f32 0.0, %v1891
      %v1893 = vpop.f32.mrb[0].mxu0
      %1894 = vmatprep.mubr.f32.mxu0 0.0
      %1895 = vmatmul.mubr.f32.gmra.mrb[0].mxu0 %v1781
      %v1896 = vpop.f32.mrb[0].mxu0
      %v1897 = vadd.f32 0.0, %v1896
      %v1898 = vpop.f32.mrb[0].mxu0
      %1899 = vmatprep.mubr.f32.mxu0 0.0
      %1900 = vmatmul.mubr.f32.gmra.mrb[0].mxu0 %v1784
      %v1901 = vpop.f32.mrb[0].mxu0
      %v1902 = vadd.f32 0.0, %v1901
      %v1903 = vpop.f32.mrb[0].mxu0
      %1904 = vmatprep.mubr.f32.mxu0 0.0
      %1905 = vmatmul.mubr.f32.gmra.mrb[0].mxu0 %v1787
      %v1906 = vpop.f32.mrb[0].mxu0
      %v1907 = vadd.f32 0.0, %v1906
      %v1908 = vpop.f32.mrb[0].mxu0
      %1909 = vmatprep.mubr.f32.mxu0 0.0
      %1910 = vmatmul.mubr.f32.gmra.mrb[0].mxu0 %v1790
      %v1911 = vpop.f32.mrb[0].mxu0
      %v1912 = vadd.f32 0.0, %v1911
      %v1913 = vpop.f32.mrb[0].mxu0
      %1914 = vmatprep.mubr.f32.mxu0 0.0
      %1915 = vmatmul.mubr.f32.gmra.mrb[0].mxu0 %v1793
      %v1916 = vpop.f32.mrb[0].mxu0
      %v1917 = vadd.f32 0.0, %v1916
      %v1918 = vpop.f32.mrb[0].mxu0
      %1919 = vdwg.mxu0
      %v1920 = vadd.f32 %v1679, %v1862
      %v1921 = vadd.f32 %v1684, %v1867
      %v1922 = vadd.f32 %v1689, %v1872
      %v1923 = vadd.f32 %v1694, %v1877
      %v1924 = vadd.f32 %v1699, %v1882
      %v1925 = vadd.f32 %v1704, %v1887
      %v1926 = vadd.f32 %v1709, %v1892
      %v1927 = vadd.f32 %v1714, %v1897
      %v1928 = vadd.f32 %v1719, %v1902
      %v1929 = vadd.f32 %v1724, %v1907
      %v1930 = vadd.f32 %v1729, %v1912
      %v1931 = vadd.f32 %v1734, %v1917
      %v1932 = vld [vmem:[#allocation2 + $0x3] sm:$0xff]
      %v1933 = vld [vmem:[#allocation2 + $0xb] sm:$0xff]
      %v1934 = vld [vmem:[#allocation2 + $0x13] sm:$0xff]
      %v1935 = vld [vmem:[#allocation2 + $0x1b] sm:$0xff]
      %v1936 = vld [vmem:[#allocation2 + $0x23] sm:$0xff]
      %v1937 = vld [vmem:[#allocation2 + $0x2b] sm:$0xff]
      %v1938 = vld [vmem:[#allocation2 + $0x33] sm:$0xff]
      %v1939 = vld [vmem:[#allocation2 + $0x3b] sm:$0xff]
      %v1940 = vld [vmem:[#allocation2 + $0x43] sm:$0xff]
      %v1941 = vld [vmem:[#allocation2 + $0x4b] sm:$0xff]
      %v1942 = vld [vmem:[#allocation2 + $0x53] sm:$0xff]
      %v1943 = vld [vmem:[#allocation2 + $0x5b] sm:$0xff]
      %s1944 = scalar_lea.vmem %s4, 216
      %v1945 = vld [vmem:[%s1944] sm:$0xff]
      %v1946 = vld [vmem:[%s1944 + $0x8] sm:$0xff]
      %v1947 = vld [vmem:[%s1944 + $0x10] sm:$0xff]
      %v1948 = vld [vmem:[%s1944 + $0x18] sm:$0xff]
      %v1949 = vld [vmem:[%s1944 + $0x20] sm:$0xff]
      %v1950 = vld [vmem:[%s1944 + $0x28] sm:$0xff]
      %v1951 = vld [vmem:[%s1944 + $0x30] sm:$0xff]
      %v1952 = vld [vmem:[%s1944 + $0x38] sm:$0xff]
      %v1953 = vld [vmem:[%s1944 + $0x40] sm:$0xff]
      %v1955 = vsel %vm1323, %v1932, 0
      %v1958 = vsel %vm1323, %v1933, 0
      %v1961 = vsel %vm1323, %v1934, 0
      %v1964 = vsel %vm1323, %v1935, 0
      %v1967 = vsel %vm1323, %v1936, 0
      %v1970 = vsel %vm1323, %v1937, 0
      %v1973 = vsel %vm1323, %v1938, 0
      %v1976 = vsel %vm1323, %v1939, 0
      %v1979 = vsel %vm1323, %v1940, 0
      %v1982 = vsel %vm1323, %v1941, 0
      %v1985 = vsel %vm1323, %v1942, 0
      %v1988 = vsel %vm1323, %v1943, 0
      %1990 = vmatprep.subr.mxu0 0.0
      %1991 = vmatpush1.msra.mxu0 %v1945
      %1992 = vmatprep.subr.mxu0 0.0
      %1993 = vmatpush1.msra.mxu0 %v1946
      %1994 = vmatprep.subr.mxu0 0.0
      %1995 = vmatpush1.msra.mxu0 %v1947
      %1996 = vmatprep.subr.mxu0 0.0
      %1997 = vmatpush1.msra.mxu0 %v1948
      %1998 = vmatprep.subr.mxu0 0.0
      %1999 = vmatpush1.msra.mxu0 %v1949
      %2000 = vmatprep.subr.mxu0 0.0
      %2001 = vmatpush1.msra.mxu0 %v1950
      %2002 = vmatprep.subr.mxu0 0.0
      %2003 = vmatpush1.msra.mxu0 %v1951
      %2004 = vmatprep.subr.mxu0 0.0
      %2005 = vmatpush1.msra.mxu0 %v1952
      %2006 = vmatprep.subr.mxu0 0.0
      %2007 = vmatpush1.msra.mxu0 %v1953
      %2008 = vmatprep.subr.mxu0 0.0
      %2009 = vmatpush1.msra.mxu0 0.0
      %2010 = vmatprep.subr.mxu0 0.0
      %2011 = vmatpush1.msra.mxu0 0.0
      %2012 = vmatprep.subr.mxu0 0.0
      %2013 = vmatpush1.msra.mxu0 0.0
      %2014 = vmatprep.subr.mxu0 0.0
      %2015 = vmatpush1.msra.mxu0 0.0
      %2016 = vmatprep.subr.mxu0 0.0
      %2017 = vmatpush1.msra.mxu0 0.0
      %2018 = vmatprep.subr.mxu0 0.0
      %2019 = vmatpush1.msra.mxu0 0.0
      %2020 = vmatprep.subr.mxu0 0.0
      %2021 = vmatpush1.msra.mxu0 0.0
      %2022 = vmatprep.subr.mxu0 0.0
      %2023 = vmatpush1.msra.mxu0 0.0
      %2024 = vmatprep.subr.mxu0 0.0
      %2025 = vmatpush1.msra.mxu0 0.0
      %2026 = vmatprep.subr.mxu0 0.0
      %2027 = vmatpush1.msra.mxu0 0.0
      %2028 = vmatprep.subr.mxu0 0.0
      %2029 = vmatpush1.msra.mxu0 0.0
      %2030 = vmatprep.subr.mxu0 0.0
      %2031 = vmatpush1.msra.mxu0 0.0
      %2032 = vmatprep.subr.mxu0 0.0
      %2033 = vmatpush1.msra.mxu0 0.0
      %2034 = vmatprep.subr.mxu0 0.0
      %2035 = vmatpush1.msra.mxu0 0.0
      %2036 = vmatprep.subr.mxu0 0.0
      %2037 = vmatpush1.msra.mxu0 0.0
      %2038 = vmatprep.subr.mxu0 0.0
      %2039 = vmatpush1.msra.mxu0 0.0
      %2040 = vmatprep.subr.mxu0 0.0
      %2041 = vmatpush1.msra.mxu0 0.0
      %2042 = vmatprep.subr.mxu0 0.0
      %2043 = vmatpush1.msra.mxu0 0.0
      %2044 = vmatprep.subr.mxu0 0.0
      %2045 = vmatpush1.msra.mxu0 0.0
      %2046 = vmatprep.subr.mxu0 0.0
      %2047 = vmatpush1.msra.mxu0 0.0
      %2048 = vmatprep.subr.mxu0 0.0
      %2049 = vmatpush1.msra.mxu0 0.0
      %2050 = vmatprep.subr.mxu0 0.0
      %2051 = vmatpush1.msra.mxu0 0.0
      %2052 = vmatprep.subr.mxu0 0.0
      %2053 = vmatpush1.msra.mxu0 0.0
      %2054 = vmatprep.mubr.f32.mxu0 0.0
      %2055 = vmatmul.mubr.f32.gmra.mrb[0].mxu0 %v1955
      %v2056 = vpop.f32.mrb[0].mxu0
      %v2057 = vadd.f32 0.0, %v2056
      %v2058 = vpop.f32.mrb[0].mxu0
      %2059 = vmatprep.mubr.f32.mxu0 0.0
      %2060 = vmatmul.mubr.f32.gmra.mrb[0].mxu0 %v1958
      %v2061 = vpop.f32.mrb[0].mxu0
      %v2062 = vadd.f32 0.0, %v2061
      %v2063 = vpop.f32.mrb[0].mxu0
      %2064 = vmatprep.mubr.f32.mxu0 0.0
      %2065 = vmatmul.mubr.f32.gmra.mrb[0].mxu0 %v1961
      %v2066 = vpop.f32.mrb[0].mxu0
      %v2067 = vadd.f32 0.0, %v2066
      %v2068 = vpop.f32.mrb[0].mxu0
      %2069 = vmatprep.mubr.f32.mxu0 0.0
      %2070 = vmatmul.mubr.f32.gmra.mrb[0].mxu0 %v1964
      %v2071 = vpop.f32.mrb[0].mxu0
      %v2072 = vadd.f32 0.0, %v2071
      %v2073 = vpop.f32.mrb[0].mxu0
      %2074 = vmatprep.mubr.f32.mxu0 0.0
      %2075 = vmatmul.mubr.f32.gmra.mrb[0].mxu0 %v1967
      %v2076 = vpop.f32.mrb[0].mxu0
      %v2077 = vadd.f32 0.0, %v2076
      %v2078 = vpop.f32.mrb[0].mxu0
      %2079 = vmatprep.mubr.f32.mxu0 0.0
      %2080 = vmatmul.mubr.f32.gmra.mrb[0].mxu0 %v1970
      %v2081 = vpop.f32.mrb[0].mxu0
      %v2082 = vadd.f32 0.0, %v2081
      %v2083 = vpop.f32.mrb[0].mxu0
      %2084 = vmatprep.mubr.f32.mxu0 0.0
      %2085 = vmatmul.mubr.f32.gmra.mrb[0].mxu0 %v1973
      %v2086 = vpop.f32.mrb[0].mxu0
      %v2087 = vadd.f32 0.0, %v2086
      %v2088 = vpop.f32.mrb[0].mxu0
      %2089 = vmatprep.mubr.f32.mxu0 0.0
      %2090 = vmatmul.mubr.f32.gmra.mrb[0].mxu0 %v1976
      %v2091 = vpop.f32.mrb[0].mxu0
      %v2092 = vadd.f32 0.0, %v2091
      %v2093 = vpop.f32.mrb[0].mxu0
      %2094 = vmatprep.mubr.f32.mxu0 0.0
      %2095 = vmatmul.mubr.f32.gmra.mrb[0].mxu0 %v1979
      %v2096 = vpop.f32.mrb[0].mxu0
      %v2097 = vadd.f32 0.0, %v2096
      %v2098 = vpop.f32.mrb[0].mxu0
      %2099 = vmatprep.mubr.f32.mxu0 0.0
      %2100 = vmatmul.mubr.f32.gmra.mrb[0].mxu0 %v1982
      %v2101 = vpop.f32.mrb[0].mxu0
      %v2102 = vadd.f32 0.0, %v2101
      %v2103 = vpop.f32.mrb[0].mxu0
      %2104 = vmatprep.mubr.f32.mxu0 0.0
      %2105 = vmatmul.mubr.f32.gmra.mrb[0].mxu0 %v1985
      %v2106 = vpop.f32.mrb[0].mxu0
      %v2107 = vadd.f32 0.0, %v2106
      %v2108 = vpop.f32.mrb[0].mxu0
      %2109 = vmatprep.mubr.f32.mxu0 0.0
      %2110 = vmatmul.mubr.f32.gmra.mrb[0].mxu0 %v1988
      %v2111 = vpop.f32.mrb[0].mxu0
      %v2112 = vadd.f32 0.0, %v2111
      %v2113 = vpop.f32.mrb[0].mxu0
      %2114 = vdwg.mxu0
      %v2115 = vadd.f32 %v1920, %v2057
      %v2116 = vadd.f32 %v1921, %v2062
      %v2117 = vadd.f32 %v1922, %v2067
      %v2118 = vadd.f32 %v1923, %v2072
      %v2119 = vadd.f32 %v1924, %v2077
      %v2120 = vadd.f32 %v1925, %v2082
      %v2121 = vadd.f32 %v1926, %v2087
      %v2122 = vadd.f32 %v1927, %v2092
      %v2123 = vadd.f32 %v1928, %v2097
      %v2124 = vadd.f32 %v1929, %v2102
      %v2125 = vadd.f32 %v1930, %v2107
      %v2126 = vadd.f32 %v1931, %v2112
      %v2127 = vld [vmem:[#allocation2 + $0x4] sm:$0xff]
      %v2128 = vld [vmem:[#allocation2 + $0xc] sm:$0xff]
      %v2129 = vld [vmem:[#allocation2 + $0x14] sm:$0xff]
      %v2130 = vld [vmem:[#allocation2 + $0x1c] sm:$0xff]
      %v2131 = vld [vmem:[#allocation2 + $0x24] sm:$0xff]
      %v2132 = vld [vmem:[#allocation2 + $0x2c] sm:$0xff]
      %v2133 = vld [vmem:[#allocation2 + $0x34] sm:$0xff]
      %v2134 = vld [vmem:[#allocation2 + $0x3c] sm:$0xff]
      %v2135 = vld [vmem:[#allocation2 + $0x44] sm:$0xff]
      %v2136 = vld [vmem:[#allocation2 + $0x4c] sm:$0xff]
      %v2137 = vld [vmem:[#allocation2 + $0x54] sm:$0xff]
      %v2138 = vld [vmem:[#allocation2 + $0x5c] sm:$0xff]
      %s2139 = scalar_lea.vmem %s4, 288
      %v2140 = vld [vmem:[%s2139] sm:$0xff]
      %v2141 = vld [vmem:[%s2139 + $0x8] sm:$0xff]
      %v2142 = vld [vmem:[%s2139 + $0x10] sm:$0xff]
      %v2143 = vld [vmem:[%s2139 + $0x18] sm:$0xff]
      %v2144 = vld [vmem:[%s2139 + $0x20] sm:$0xff]
      %v2145 = vld [vmem:[%s2139 + $0x28] sm:$0xff]
      %v2146 = vld [vmem:[%s2139 + $0x30] sm:$0xff]
      %v2147 = vld [vmem:[%s2139 + $0x38] sm:$0xff]
      %v2148 = vld [vmem:[%s2139 + $0x40] sm:$0xff]
      %v2150 = vsel %vm1323, %v2127, 0
      %v2153 = vsel %vm1323, %v2128, 0
      %v2156 = vsel %vm1323, %v2129, 0
      %v2159 = vsel %vm1323, %v2130, 0
      %v2162 = vsel %vm1323, %v2131, 0
      %v2165 = vsel %vm1323, %v2132, 0
      %v2168 = vsel %vm1323, %v2133, 0
      %v2171 = vsel %vm1323, %v2134, 0
      %v2174 = vsel %vm1323, %v2135, 0
      %v2177 = vsel %vm1323, %v2136, 0
      %v2180 = vsel %vm1323, %v2137, 0
      %v2183 = vsel %vm1323, %v2138, 0
      %2185 = vmatprep.subr.mxu0 0.0
      %2186 = vmatpush1.msra.mxu0 %v2140
      %2187 = vmatprep.subr.mxu0 0.0
      %2188 = vmatpush1.msra.mxu0 %v2141
      %2189 = vmatprep.subr.mxu0 0.0
      %2190 = vmatpush1.msra.mxu0 %v2142
      %2191 = vmatprep.subr.mxu0 0.0
      %2192 = vmatpush1.msra.mxu0 %v2143
      %2193 = vmatprep.subr.mxu0 0.0
      %2194 = vmatpush1.msra.mxu0 %v2144
      %2195 = vmatprep.subr.mxu0 0.0
      %2196 = vmatpush1.msra.mxu0 %v2145
      %2197 = vmatprep.subr.mxu0 0.0
      %2198 = vmatpush1.msra.mxu0 %v2146
      %2199 = vmatprep.subr.mxu0 0.0
      %2200 = vmatpush1.msra.mxu0 %v2147
      %2201 = vmatprep.subr.mxu0 0.0
      %2202 = vmatpush1.msra.mxu0 %v2148
      %2203 = vmatprep.subr.mxu0 0.0
      %2204 = vmatpush1.msra.mxu0 0.0
      %2205 = vmatprep.subr.mxu0 0.0
      %2206 = vmatpush1.msra.mxu0 0.0
      %2207 = vmatprep.subr.mxu0 0.0
      %2208 = vmatpush1.msra.mxu0 0.0
      %2209 = vmatprep.subr.mxu0 0.0
      %2210 = vmatpush1.msra.mxu0 0.0
      %2211 = vmatprep.subr.mxu0 0.0
      %2212 = vmatpush1.msra.mxu0 0.0
      %2213 = vmatprep.subr.mxu0 0.0
      %2214 = vmatpush1.msra.mxu0 0.0
      %2215 = vmatprep.subr.mxu0 0.0
      %2216 = vmatpush1.msra.mxu0 0.0
      %2217 = vmatprep.subr.mxu0 0.0
      %2218 = vmatpush1.msra.mxu0 0.0
      %2219 = vmatprep.subr.mxu0 0.0
      %2220 = vmatpush1.msra.mxu0 0.0
      %2221 = vmatprep.subr.mxu0 0.0
      %2222 = vmatpush1.msra.mxu0 0.0
      %2223 = vmatprep.subr.mxu0 0.0
      %2224 = vmatpush1.msra.mxu0 0.0
      %2225 = vmatprep.subr.mxu0 0.0
      %2226 = vmatpush1.msra.mxu0 0.0
      %2227 = vmatprep.subr.mxu0 0.0
      %2228 = vmatpush1.msra.mxu0 0.0
      %2229 = vmatprep.subr.mxu0 0.0
      %2230 = vmatpush1.msra.mxu0 0.0
      %2231 = vmatprep.subr.mxu0 0.0
      %2232 = vmatpush1.msra.mxu0 0.0
      %2233 = vmatprep.subr.mxu0 0.0
      %2234 = vmatpush1.msra.mxu0 0.0
      %2235 = vmatprep.subr.mxu0 0.0
      %2236 = vmatpush1.msra.mxu0 0.0
      %2237 = vmatprep.subr.mxu0 0.0
      %2238 = vmatpush1.msra.mxu0 0.0
      %2239 = vmatprep.subr.mxu0 0.0
      %2240 = vmatpush1.msra.mxu0 0.0
      %2241 = vmatprep.subr.mxu0 0.0
      %2242 = vmatpush1.msra.mxu0 0.0
      %2243 = vmatprep.subr.mxu0 0.0
      %2244 = vmatpush1.msra.mxu0 0.0
      %2245 = vmatprep.subr.mxu0 0.0
      %2246 = vmatpush1.msra.mxu0 0.0
      %2247 = vmatprep.subr.mxu0 0.0
      %2248 = vmatpush1.msra.mxu0 0.0
      %2249 = vmatprep.mubr.f32.mxu0 0.0
      %2250 = vmatmul.mubr.f32.gmra.mrb[0].mxu0 %v2150
      %v2251 = vpop.f32.mrb[0].mxu0
      %v2252 = vadd.f32 0.0, %v2251
      %v2253 = vpop.f32.mrb[0].mxu0
      %2254 = vmatprep.mubr.f32.mxu0 0.0
      %2255 = vmatmul.mubr.f32.gmra.mrb[0].mxu0 %v2153
      %v2256 = vpop.f32.mrb[0].mxu0
      %v2257 = vadd.f32 0.0, %v2256
      %v2258 = vpop.f32.mrb[0].mxu0
      %2259 = vmatprep.mubr.f32.mxu0 0.0
      %2260 = vmatmul.mubr.f32.gmra.mrb[0].mxu0 %v2156
      %v2261 = vpop.f32.mrb[0].mxu0
      %v2262 = vadd.f32 0.0, %v2261
      %v2263 = vpop.f32.mrb[0].mxu0
      %2264 = vmatprep.mubr.f32.mxu0 0.0
      %2265 = vmatmul.mubr.f32.gmra.mrb[0].mxu0 %v2159
      %v2266 = vpop.f32.mrb[0].mxu0
      %v2267 = vadd.f32 0.0, %v2266
      %v2268 = vpop.f32.mrb[0].mxu0
      %2269 = vmatprep.mubr.f32.mxu0 0.0
      %2270 = vmatmul.mubr.f32.gmra.mrb[0].mxu0 %v2162
      %v2271 = vpop.f32.mrb[0].mxu0
      %v2272 = vadd.f32 0.0, %v2271
      %v2273 = vpop.f32.mrb[0].mxu0
      %2274 = vmatprep.mubr.f32.mxu0 0.0
      %2275 = vmatmul.mubr.f32.gmra.mrb[0].mxu0 %v2165
      %v2276 = vpop.f32.mrb[0].mxu0
      %v2277 = vadd.f32 0.0, %v2276
      %v2278 = vpop.f32.mrb[0].mxu0
      %2279 = vmatprep.mubr.f32.mxu0 0.0
      %2280 = vmatmul.mubr.f32.gmra.mrb[0].mxu0 %v2168
      %v2281 = vpop.f32.mrb[0].mxu0
      %v2282 = vadd.f32 0.0, %v2281
      %v2283 = vpop.f32.mrb[0].mxu0
      %2284 = vmatprep.mubr.f32.mxu0 0.0
      %2285 = vmatmul.mubr.f32.gmra.mrb[0].mxu0 %v2171
      %v2286 = vpop.f32.mrb[0].mxu0
      %v2287 = vadd.f32 0.0, %v2286
      %v2288 = vpop.f32.mrb[0].mxu0
      %2289 = vmatprep.mubr.f32.mxu0 0.0
      %2290 = vmatmul.mubr.f32.gmra.mrb[0].mxu0 %v2174
      %v2291 = vpop.f32.mrb[0].mxu0
      %v2292 = vadd.f32 0.0, %v2291
      %v2293 = vpop.f32.mrb[0].mxu0
      %2294 = vmatprep.mubr.f32.mxu0 0.0
      %2295 = vmatmul.mubr.f32.gmra.mrb[0].mxu0 %v2177
      %v2296 = vpop.f32.mrb[0].mxu0
      %v2297 = vadd.f32 0.0, %v2296
      %v2298 = vpop.f32.mrb[0].mxu0
      %2299 = vmatprep.mubr.f32.mxu0 0.0
      %2300 = vmatmul.mubr.f32.gmra.mrb[0].mxu0 %v2180
      %v2301 = vpop.f32.mrb[0].mxu0
      %v2302 = vadd.f32 0.0, %v2301
      %v2303 = vpop.f32.mrb[0].mxu0
      %2304 = vmatprep.mubr.f32.mxu0 0.0
      %2305 = vmatmul.mubr.f32.gmra.mrb[0].mxu0 %v2183
      %v2306 = vpop.f32.mrb[0].mxu0
      %v2307 = vadd.f32 0.0, %v2306
      %v2308 = vpop.f32.mrb[0].mxu0
      %2309 = vdwg.mxu0
      %v2310 = vadd.f32 %v2115, %v2252
      %v2311 = vadd.f32 %v2116, %v2257
      %v2312 = vadd.f32 %v2117, %v2262
      %v2313 = vadd.f32 %v2118, %v2267
      %v2314 = vadd.f32 %v2119, %v2272
      %v2315 = vadd.f32 %v2120, %v2277
      %v2316 = vadd.f32 %v2121, %v2282
      %v2317 = vadd.f32 %v2122, %v2287
      %v2318 = vadd.f32 %v2123, %v2292
      %v2319 = vadd.f32 %v2124, %v2297
      %v2320 = vadd.f32 %v2125, %v2302
      %v2321 = vadd.f32 %v2126, %v2307
      %v2322 = vld [vmem:[%s5] sm:$0x1]
      %v2324 = vlaneseq
      %v2325 = vshrl.u32 %v2324, 7
      %v2326 = vsub.s32 0, %v2325
      %v2327 = vrot.slane %v2322, %v2326
      %v2329 = vadd.f32 %v2310, %v2327
      %v2330 = vadd.f32 %v2311, %v2327
      %v2331 = vadd.f32 %v2312, %v2327
      %v2332 = vadd.f32 %v2313, %v2327
      %v2333 = vadd.f32 %v2314, %v2327
      %v2334 = vadd.f32 %v2315, %v2327
      %v2335 = vadd.f32 %v2316, %v2327
      %v2336 = vadd.f32 %v2317, %v2327
      %v2337 = vadd.f32 %v2318, %v2327
      %v2338 = vadd.f32 %v2319, %v2327
      %v2339 = vadd.f32 %v2320, %v2327
      %v2340 = vadd.f32 %v2321, %v2327
      %v2341 = vmax.f32 %v2329, 0.0
      %v2342 = vmax.f32 %v2330, 0.0
      %v2343 = vmax.f32 %v2331, 0.0
      %v2344 = vmax.f32 %v2332, 0.0
      %v2345 = vmax.f32 %v2333, 0.0
      %v2346 = vmax.f32 %v2334, 0.0
      %v2347 = vmax.f32 %v2335, 0.0
      %v2348 = vmax.f32 %v2336, 0.0
      %v2349 = vmax.f32 %v2337, 0.0
      %v2350 = vmax.f32 %v2338, 0.0
      %v2351 = vmax.f32 %v2339, 0.0
      %v2352 = vmax.f32 %v2340, 0.0
      %v2353 = vsel %vm1360, 1, 0
      %v2354 = vsel %vm1361, 1, 0
      %v2355 = vsel %vm1362, 1, 0
      %v2356 = vsel %vm1363, 1, 0
      %v2357 = vsel %vm1364, 1, 0
      %v2358 = vsel %vm1365, 1, 0
      %v2359 = vsel %vm1366, 1, 0
      %v2360 = vsel %vm1367, 1, 0
      %v2361 = vsel %vm1368, 1, 0
      %v2362 = vsel %vm1369, 1, 0
      %v2363 = vsel %vm1370, 1, 0
      %v2364 = vsel %vm1371, 1, 0
      %2365 = vset.pattern.permute.xlu0 0
      %2366 = vperm.xlu0 %2365, %v2353
      %v2367 = vpop.permute.xlu0 %2366
      %2368 = vset.pattern.permute.xlu0 0
      %2369 = vperm.xlu0 %2368, %v2354
      %v2370 = vpop.permute.xlu0 %2369
      %2371 = vset.pattern.permute.xlu0 0
      %2372 = vperm.xlu0 %2371, %v2355
      %v2373 = vpop.permute.xlu0 %2372
      %2374 = vset.pattern.permute.xlu0 0
      %2375 = vperm.xlu0 %2374, %v2356
      %v2376 = vpop.permute.xlu0 %2375
      %2377 = vset.pattern.permute.xlu0 0
      %2378 = vperm.xlu0 %2377, %v2357
      %v2379 = vpop.permute.xlu0 %2378
      %2380 = vset.pattern.permute.xlu0 0
      %2381 = vperm.xlu0 %2380, %v2358
      %v2382 = vpop.permute.xlu0 %2381
      %2383 = vset.pattern.permute.xlu0 0
      %2384 = vperm.xlu0 %2383, %v2359
      %v2385 = vpop.permute.xlu0 %2384
      %2386 = vset.pattern.permute.xlu0 0
      %2387 = vperm.xlu0 %2386, %v2360
      %v2388 = vpop.permute.xlu0 %2387
      %2389 = vset.pattern.permute.xlu0 0
      %2390 = vperm.xlu0 %2389, %v2361
      %v2391 = vpop.permute.xlu0 %2390
      %2392 = vset.pattern.permute.xlu0 0
      %2393 = vperm.xlu0 %2392, %v2362
      %v2394 = vpop.permute.xlu0 %2393
      %2395 = vset.pattern.permute.xlu0 0
      %2396 = vperm.xlu0 %2395, %v2363
      %v2397 = vpop.permute.xlu0 %2396
      %2398 = vset.pattern.permute.xlu0 0
      %2399 = vperm.xlu0 %2398, %v2364
      %v2400 = vpop.permute.xlu0 %2399
      %vm2401 = vcmp.eq.s32.totalorder %v2367, 1
      %vm2402 = vcmp.eq.s32.totalorder %v2370, 1
      %vm2403 = vcmp.eq.s32.totalorder %v2373, 1
      %vm2404 = vcmp.eq.s32.totalorder %v2376, 1
      %vm2405 = vcmp.eq.s32.totalorder %v2379, 1
      %vm2406 = vcmp.eq.s32.totalorder %v2382, 1
      %vm2407 = vcmp.eq.s32.totalorder %v2385, 1
      %vm2408 = vcmp.eq.s32.totalorder %v2388, 1
      %vm2409 = vcmp.eq.s32.totalorder %v2391, 1
      %vm2410 = vcmp.eq.s32.totalorder %v2394, 1
      %vm2411 = vcmp.eq.s32.totalorder %v2397, 1
      %vm2412 = vcmp.eq.s32.totalorder %v2400, 1
      %v2413 = vsel %vm2401, %v2341, 0.0
      %v2414 = vsel %vm2402, %v2342, 0.0
      %v2415 = vsel %vm2403, %v2343, 0.0
      %v2416 = vsel %vm2404, %v2344, 0.0
      %v2417 = vsel %vm2405, %v2345, 0.0
      %v2418 = vsel %vm2406, %v2346, 0.0
      %v2419 = vsel %vm2407, %v2347, 0.0
      %v2420 = vsel %vm2408, %v2348, 0.0
      %v2421 = vsel %vm2409, %v2349, 0.0
      %v2422 = vsel %vm2410, %v2350, 0.0
      %v2423 = vsel %vm2411, %v2351, 0.0
      %v2424 = vsel %vm2412, %v2352, 0.0
      %2425 = vst [vmem:[#allocation3] sm:$0xff] %v2413
      %2426 = vst [vmem:[#allocation3 + $0x8] sm:$0xff] %v2414
      %2427 = vst [vmem:[#allocation3 + $0x10] sm:$0xff] %v2415
      %2428 = vst [vmem:[#allocation3 + $0x18] sm:$0xff] %v2416
      %2429 = vst [vmem:[#allocation3 + $0x20] sm:$0xff] %v2417
      %2430 = vst [vmem:[#allocation3 + $0x28] sm:$0xff] %v2418
      %2431 = vst [vmem:[#allocation3 + $0x30] sm:$0xff] %v2419
      %2432 = vst [vmem:[#allocation3 + $0x38] sm:$0xff] %v2420
      %2433 = vst [vmem:[#allocation3 + $0x40] sm:$0xff] %v2421
      %2434 = vst [vmem:[#allocation3 + $0x48] sm:$0xff] %v2422
      %2435 = vst [vmem:[#allocation3 + $0x50] sm:$0xff] %v2423
      %2436 = vst [vmem:[#allocation3 + $0x58] sm:$0xff] %v2424
      %vm2437 = vcmp.ge.s32.totalorder %v364, 4
      %vm2438 = vcmp.ge.s32.totalorder %v365, 4
      %vm2439 = vcmp.ge.s32.totalorder %v366, 4
      %vm2440 = vcmp.ge.s32.totalorder %v367, 4
      %vm2441 = vcmp.ge.s32.totalorder %v368, 4
      %vm2442 = vcmp.ge.s32.totalorder %v369, 4
      %vm2443 = vcmp.ge.s32.totalorder %v370, 4
      %vm2444 = vcmp.ge.s32.totalorder %v371, 4
      %vm2445 = vcmp.ge.s32.totalorder %v372, 4
      %vm2446 = vcmp.ge.s32.totalorder %v373, 4
      %vm2447 = vcmp.ge.s32.totalorder %v374, 4
      %vm2448 = vcmp.ge.s32.totalorder %v375, 4
      %vm2449 = vmand %vm2437, %vm1348
      %vm2450 = vmand %vm2438, %vm1349
      %vm2451 = vmand %vm2439, %vm1350
      %vm2452 = vmand %vm2440, %vm1351
      %vm2453 = vmand %vm2441, %vm1352
      %vm2454 = vmand %vm2442, %vm1353
      %vm2455 = vmand %vm2443, %vm1354
      %vm2456 = vmand %vm2444, %vm1355
      %vm2457 = vmand %vm2445, %vm1356
      %vm2458 = vmand %vm2446, %vm1357
      %vm2459 = vmand %vm2447, %vm1358
      %vm2460 = vmand %vm2448, %vm1359
      %v2461 = vld [vmem:[#allocation3] sm:$0xff]
      %v2462 = vld [vmem:[#allocation3 + $0x8] sm:$0xff]
      %v2463 = vld [vmem:[#allocation3 + $0x10] sm:$0xff]
      %v2464 = vld [vmem:[#allocation3 + $0x18] sm:$0xff]
      %v2465 = vld [vmem:[#allocation3 + $0x20] sm:$0xff]
      %v2466 = vld [vmem:[#allocation3 + $0x28] sm:$0xff]
      %v2467 = vld [vmem:[#allocation3 + $0x30] sm:$0xff]
      %v2468 = vld [vmem:[#allocation3 + $0x38] sm:$0xff]
      %v2469 = vld [vmem:[#allocation3 + $0x40] sm:$0xff]
      %v2470 = vld [vmem:[#allocation3 + $0x48] sm:$0xff]
      %v2471 = vld [vmem:[#allocation3 + $0x50] sm:$0xff]
      %v2472 = vld [vmem:[#allocation3 + $0x58] sm:$0xff]
      %v2473 = vld [vmem:[%s6] sm:$0xff]
      %v2474 = vld [vmem:[%s6 + $0x8] sm:$0xff]
      %v2475 = vld [vmem:[%s6 + $0x10] sm:$0xff]
      %v2476 = vld [vmem:[%s6 + $0x18] sm:$0xff]
      %v2477 = vld [vmem:[%s6 + $0x20] sm:$0xff]
      %v2478 = vld [vmem:[%s6 + $0x28] sm:$0xff]
      %v2479 = vld [vmem:[%s6 + $0x30] sm:$0xff]
      %v2480 = vld [vmem:[%s6 + $0x38] sm:$0xff]
      %v2481 = vld [vmem:[%s6 + $0x40] sm:$0xff]
      %v2482 = vld [vmem:[%s6 + $0x48] sm:$0xff]
      %v2483 = vld [vmem:[%s6 + $0x50] sm:$0xff]
      %v2484 = vld [vmem:[%s6 + $0x58] sm:$0xff]
      %v2485 = vld [vmem:[%s6 + $0x60] sm:$0xff]
      %v2486 = vld [vmem:[%s6 + $0x68] sm:$0xff]
      %v2487 = vld [vmem:[%s6 + $0x70] sm:$0xff]
      %v2488 = vld [vmem:[%s6 + $0x78] sm:$0xff]
      %v2489 = vld [vmem:[#allocation3 + $0x1] sm:$0xff]
      %v2490 = vld [vmem:[#allocation3 + $0x9] sm:$0xff]
      %v2491 = vld [vmem:[#allocation3 + $0x11] sm:$0xff]
      %v2492 = vld [vmem:[#allocation3 + $0x19] sm:$0xff]
      %v2493 = vld [vmem:[#allocation3 + $0x21] sm:$0xff]
      %v2494 = vld [vmem:[#allocation3 + $0x29] sm:$0xff]
      %v2495 = vld [vmem:[#allocation3 + $0x31] sm:$0xff]
      %v2496 = vld [vmem:[#allocation3 + $0x39] sm:$0xff]
      %v2497 = vld [vmem:[#allocation3 + $0x41] sm:$0xff]
      %v2498 = vld [vmem:[#allocation3 + $0x49] sm:$0xff]
      %v2499 = vld [vmem:[#allocation3 + $0x51] sm:$0xff]
      %v2500 = vld [vmem:[#allocation3 + $0x59] sm:$0xff]
      %s2501 = scalar_lea.vmem %s6, 128
      %v2502 = vld [vmem:[%s2501] sm:$0xff]
      %v2503 = vld [vmem:[%s2501 + $0x8] sm:$0xff]
      %v2504 = vld [vmem:[%s2501 + $0x10] sm:$0xff]
      %v2505 = vld [vmem:[%s2501 + $0x18] sm:$0xff]
      %v2506 = vld [vmem:[%s2501 + $0x20] sm:$0xff]
      %v2507 = vld [vmem:[%s2501 + $0x28] sm:$0xff]
      %v2508 = vld [vmem:[%s2501 + $0x30] sm:$0xff]
      %v2509 = vld [vmem:[%s2501 + $0x38] sm:$0xff]
      %v2510 = vld [vmem:[%s2501 + $0x40] sm:$0xff]
      %v2511 = vld [vmem:[%s2501 + $0x48] sm:$0xff]
      %v2512 = vld [vmem:[%s2501 + $0x50] sm:$0xff]
      %v2513 = vld [vmem:[%s2501 + $0x58] sm:$0xff]
      %v2514 = vld [vmem:[%s2501 + $0x60] sm:$0xff]
      %v2515 = vld [vmem:[%s2501 + $0x68] sm:$0xff]
      %v2516 = vld [vmem:[%s2501 + $0x70] sm:$0xff]
      %v2517 = vld [vmem:[%s2501 + $0x78] sm:$0xff]
      %2518 = vmatprep.subr.mxu0 0.0
      %2519 = vmatpush1.msra.mxu0 %v2502
      %2520 = vmatprep.subr.mxu0 0.0
      %2521 = vmatpush1.msra.mxu0 %v2503
      %2522 = vmatprep.subr.mxu0 0.0
      %2523 = vmatpush1.msra.mxu0 %v2504
      %2524 = vmatprep.subr.mxu0 0.0
      %2525 = vmatpush1.msra.mxu0 %v2505
      %2526 = vmatprep.subr.mxu0 0.0
      %2527 = vmatpush1.msra.mxu0 %v2506
      %2528 = vmatprep.subr.mxu0 0.0
      %2529 = vmatpush1.msra.mxu0 %v2507
      %2530 = vmatprep.subr.mxu0 0.0
      %2531 = vmatpush1.msra.mxu0 %v2508
      %2532 = vmatprep.subr.mxu0 0.0
      %2533 = vmatpush1.msra.mxu0 %v2509
      %2534 = vmatprep.subr.mxu0 0.0
      %2535 = vmatpush1.msra.mxu0 %v2510
      %2536 = vmatprep.subr.mxu0 0.0
      %2537 = vmatpush1.msra.mxu0 %v2511
      %2538 = vmatprep.subr.mxu0 0.0
      %2539 = vmatpush1.msra.mxu0 %v2512
      %2540 = vmatprep.subr.mxu0 0.0
      %2541 = vmatpush1.msra.mxu0 %v2513
      %2542 = vmatprep.subr.mxu0 0.0
      %2543 = vmatpush1.msra.mxu0 %v2514
      %2544 = vmatprep.subr.mxu0 0.0
      %2545 = vmatpush1.msra.mxu0 %v2515
      %2546 = vmatprep.subr.mxu0 0.0
      %2547 = vmatpush1.msra.mxu0 %v2516
      %2548 = vmatprep.subr.mxu0 0.0
      %2549 = vmatpush1.msra.mxu0 %v2517
      %2550 = vmatprep.subr.mxu0 0.0
      %2551 = vmatpush1.msra.mxu0 0.0
      %2552 = vmatprep.subr.mxu0 0.0
      %2553 = vmatpush1.msra.mxu0 0.0
      %2554 = vmatprep.subr.mxu0 0.0
      %2555 = vmatpush1.msra.mxu0 0.0
      %2556 = vmatprep.subr.mxu0 0.0
      %2557 = vmatpush1.msra.mxu0 0.0
      %2558 = vmatprep.subr.mxu0 0.0
      %2559 = vmatpush1.msra.mxu0 0.0
      %2560 = vmatprep.subr.mxu0 0.0
      %2561 = vmatpush1.msra.mxu0 0.0
      %2562 = vmatprep.subr.mxu0 0.0
      %2563 = vmatpush1.msra.mxu0 0.0
      %2564 = vmatprep.subr.mxu0 0.0
      %2565 = vmatpush1.msra.mxu0 0.0
      %2566 = vmatprep.subr.mxu0 0.0
      %2567 = vmatpush1.msra.mxu0 0.0
      %2568 = vmatprep.subr.mxu0 0.0
      %2569 = vmatpush1.msra.mxu0 0.0
      %2570 = vmatprep.subr.mxu0 0.0
      %2571 = vmatpush1.msra.mxu0 0.0
      %2572 = vmatprep.subr.mxu0 0.0
      %2573 = vmatpush1.msra.mxu0 0.0
      %2574 = vmatprep.subr.mxu0 0.0
      %2575 = vmatpush1.msra.mxu0 0.0
      %2576 = vmatprep.subr.mxu0 0.0
      %2577 = vmatpush1.msra.mxu0 0.0
      %2578 = vmatprep.subr.mxu0 0.0
      %2579 = vmatpush1.msra.mxu0 0.0
      %2580 = vmatprep.subr.mxu0 0.0
      %2581 = vmatpush1.msra.mxu0 0.0
      %2582 = vmatprep.mubr.f32.mxu0 0.0
      %2583 = vmatmul.mubr.f32.gmra.mrb[0].mxu0 %v2489
      %v2584 = vpop.f32.mrb[0].mxu0
      %v2585 = vadd.f32 0.0, %v2584
      %v2586 = vpop.f32.mrb[0].mxu0
      %2587 = vmatprep.mubr.f32.mxu0 0.0
      %2588 = vmatmul.mubr.f32.gmra.mrb[0].mxu0 %v2490
      %v2589 = vpop.f32.mrb[0].mxu0
      %v2590 = vadd.f32 0.0, %v2589
      %v2591 = vpop.f32.mrb[0].mxu0
      %2592 = vmatprep.mubr.f32.mxu0 0.0
      %2593 = vmatmul.mubr.f32.gmra.mrb[0].mxu0 %v2491
      %v2594 = vpop.f32.mrb[0].mxu0
      %v2595 = vadd.f32 0.0, %v2594
      %v2596 = vpop.f32.mrb[0].mxu0
      %2597 = vmatprep.mubr.f32.mxu0 0.0
      %2598 = vmatmul.mubr.f32.gmra.mrb[0].mxu0 %v2492
      %v2599 = vpop.f32.mrb[0].mxu0
      %v2600 = vadd.f32 0.0, %v2599
      %v2601 = vpop.f32.mrb[0].mxu0
      %2602 = vmatprep.mubr.f32.mxu0 0.0
      %2603 = vmatmul.mubr.f32.gmra.mrb[0].mxu0 %v2493
      %v2604 = vpop.f32.mrb[0].mxu0
      %v2605 = vadd.f32 0.0, %v2604
      %v2606 = vpop.f32.mrb[0].mxu0
      %2607 = vmatprep.mubr.f32.mxu0 0.0
      %2608 = vmatmul.mubr.f32.gmra.mrb[0].mxu0 %v2494
      %v2609 = vpop.f32.mrb[0].mxu0
      %v2610 = vadd.f32 0.0, %v2609
      %v2611 = vpop.f32.mrb[0].mxu0
      %2612 = vmatprep.mubr.f32.mxu0 0.0
      %2613 = vmatmul.mubr.f32.gmra.mrb[0].mxu0 %v2495
      %v2614 = vpop.f32.mrb[0].mxu0
      %v2615 = vadd.f32 0.0, %v2614
      %v2616 = vpop.f32.mrb[0].mxu0
      %2617 = vmatprep.mubr.f32.mxu0 0.0
      %2618 = vmatmul.mubr.f32.gmra.mrb[0].mxu0 %v2496
      %v2619 = vpop.f32.mrb[0].mxu0
      %v2620 = vadd.f32 0.0, %v2619
      %v2621 = vpop.f32.mrb[0].mxu0
      %2622 = vmatprep.mubr.f32.mxu0 0.0
      %2623 = vmatmul.mubr.f32.gmra.mrb[0].mxu0 %v2497
      %v2624 = vpop.f32.mrb[0].mxu0
      %v2625 = vadd.f32 0.0, %v2624
      %v2626 = vpop.f32.mrb[0].mxu0
      %2627 = vmatprep.mubr.f32.mxu0 0.0
      %2628 = vmatmul.mubr.f32.gmra.mrb[0].mxu0 %v2498
      %v2629 = vpop.f32.mrb[0].mxu0
      %v2630 = vadd.f32 0.0, %v2629
      %v2631 = vpop.f32.mrb[0].mxu0
      %2632 = vmatprep.mubr.f32.mxu0 0.0
      %2633 = vmatmul.mubr.f32.gmra.mrb[0].mxu0 %v2499
      %v2634 = vpop.f32.mrb[0].mxu0
      %v2635 = vadd.f32 0.0, %v2634
      %v2636 = vpop.f32.mrb[0].mxu0
      %2637 = vmatprep.mubr.f32.mxu0 0.0
      %2638 = vmatmul.mubr.f32.gmra.mrb[0].mxu0 %v2500
      %v2639 = vpop.f32.mrb[0].mxu0
      %v2640 = vadd.f32 0.0, %v2639
      %v2641 = vpop.f32.mrb[0].mxu0
      %2642 = vdwg.mxu0
      %2643 = vmatprep.subr.mxu0 0.0
      %2644 = vmatpush1.msra.mxu0 %v2473
      %2645 = vmatprep.subr.mxu0 0.0
      %2646 = vmatpush1.msra.mxu0 %v2474
      %2647 = vmatprep.subr.mxu0 0.0
      %2648 = vmatpush1.msra.mxu0 %v2475
      %2649 = vmatprep.subr.mxu0 0.0
      %2650 = vmatpush1.msra.mxu0 %v2476
      %2651 = vmatprep.subr.mxu0 0.0
      %2652 = vmatpush1.msra.mxu0 %v2477
      %2653 = vmatprep.subr.mxu0 0.0
      %2654 = vmatpush1.msra.mxu0 %v2478
      %2655 = vmatprep.subr.mxu0 0.0
      %2656 = vmatpush1.msra.mxu0 %v2479
      %2657 = vmatprep.subr.mxu0 0.0
      %2658 = vmatpush1.msra.mxu0 %v2480
      %2659 = vmatprep.subr.mxu0 0.0
      %2660 = vmatpush1.msra.mxu0 %v2481
      %2661 = vmatprep.subr.mxu0 0.0
      %2662 = vmatpush1.msra.mxu0 %v2482
      %2663 = vmatprep.subr.mxu0 0.0
      %2664 = vmatpush1.msra.mxu0 %v2483
      %2665 = vmatprep.subr.mxu0 0.0
      %2666 = vmatpush1.msra.mxu0 %v2484
      %2667 = vmatprep.subr.mxu0 0.0
      %2668 = vmatpush1.msra.mxu0 %v2485
      %2669 = vmatprep.subr.mxu0 0.0
      %2670 = vmatpush1.msra.mxu0 %v2486
      %2671 = vmatprep.subr.mxu0 0.0
      %2672 = vmatpush1.msra.mxu0 %v2487
      %2673 = vmatprep.subr.mxu0 0.0
      %2674 = vmatpush1.msra.mxu0 %v2488
      %2675 = vmatprep.subr.mxu0 0.0
      %2676 = vmatpush1.msra.mxu0 0.0
      %2677 = vmatprep.subr.mxu0 0.0
      %2678 = vmatpush1.msra.mxu0 0.0
      %2679 = vmatprep.subr.mxu0 0.0
      %2680 = vmatpush1.msra.mxu0 0.0
      %2681 = vmatprep.subr.mxu0 0.0
      %2682 = vmatpush1.msra.mxu0 0.0
      %2683 = vmatprep.subr.mxu0 0.0
      %2684 = vmatpush1.msra.mxu0 0.0
      %2685 = vmatprep.subr.mxu0 0.0
      %2686 = vmatpush1.msra.mxu0 0.0
      %2687 = vmatprep.subr.mxu0 0.0
      %2688 = vmatpush1.msra.mxu0 0.0
      %2689 = vmatprep.subr.mxu0 0.0
      %2690 = vmatpush1.msra.mxu0 0.0
      %2691 = vmatprep.subr.mxu0 0.0
      %2692 = vmatpush1.msra.mxu0 0.0
      %2693 = vmatprep.subr.mxu0 0.0
      %2694 = vmatpush1.msra.mxu0 0.0
      %2695 = vmatprep.subr.mxu0 0.0
      %2696 = vmatpush1.msra.mxu0 0.0
      %2697 = vmatprep.subr.mxu0 0.0
      %2698 = vmatpush1.msra.mxu0 0.0
      %2699 = vmatprep.subr.mxu0 0.0
      %2700 = vmatpush1.msra.mxu0 0.0
      %2701 = vmatprep.subr.mxu0 0.0
      %2702 = vmatpush1.msra.mxu0 0.0
      %2703 = vmatprep.subr.mxu0 0.0
      %2704 = vmatpush1.msra.mxu0 0.0
      %2705 = vmatprep.subr.mxu0 0.0
      %2706 = vmatpush1.msra.mxu0 0.0
      %2707 = vmatprep.mubr.f32.mxu0 0.0
      %2708 = vmatmul.mubr.f32.gmra.mrb[0].mxu0 %v2461
      %v2709 = vpop.f32.mrb[0].mxu0
      %v2710 = vadd.f32 %v2585, %v2709
      %v2711 = vpop.f32.mrb[0].mxu0
      %2712 = vmatprep.mubr.f32.mxu0 0.0
      %2713 = vmatmul.mubr.f32.gmra.mrb[0].mxu0 %v2462
      %v2714 = vpop.f32.mrb[0].mxu0
      %v2715 = vadd.f32 %v2590, %v2714
      %v2716 = vpop.f32.mrb[0].mxu0
      %2717 = vmatprep.mubr.f32.mxu0 0.0
      %2718 = vmatmul.mubr.f32.gmra.mrb[0].mxu0 %v2463
      %v2719 = vpop.f32.mrb[0].mxu0
      %v2720 = vadd.f32 %v2595, %v2719
      %v2721 = vpop.f32.mrb[0].mxu0
      %2722 = vmatprep.mubr.f32.mxu0 0.0
      %2723 = vmatmul.mubr.f32.gmra.mrb[0].mxu0 %v2464
      %v2724 = vpop.f32.mrb[0].mxu0
      %v2725 = vadd.f32 %v2600, %v2724
      %v2726 = vpop.f32.mrb[0].mxu0
      %2727 = vmatprep.mubr.f32.mxu0 0.0
      %2728 = vmatmul.mubr.f32.gmra.mrb[0].mxu0 %v2465
      %v2729 = vpop.f32.mrb[0].mxu0
      %v2730 = vadd.f32 %v2605, %v2729
      %v2731 = vpop.f32.mrb[0].mxu0
      %2732 = vmatprep.mubr.f32.mxu0 0.0
      %2733 = vmatmul.mubr.f32.gmra.mrb[0].mxu0 %v2466
      %v2734 = vpop.f32.mrb[0].mxu0
      %v2735 = vadd.f32 %v2610, %v2734
      %v2736 = vpop.f32.mrb[0].mxu0
      %2737 = vmatprep.mubr.f32.mxu0 0.0
      %2738 = vmatmul.mubr.f32.gmra.mrb[0].mxu0 %v2467
      %v2739 = vpop.f32.mrb[0].mxu0
      %v2740 = vadd.f32 %v2615, %v2739
      %v2741 = vpop.f32.mrb[0].mxu0
      %2742 = vmatprep.mubr.f32.mxu0 0.0
      %2743 = vmatmul.mubr.f32.gmra.mrb[0].mxu0 %v2468
      %v2744 = vpop.f32.mrb[0].mxu0
      %v2745 = vadd.f32 %v2620, %v2744
      %v2746 = vpop.f32.mrb[0].mxu0
      %2747 = vmatprep.mubr.f32.mxu0 0.0
      %2748 = vmatmul.mubr.f32.gmra.mrb[0].mxu0 %v2469
      %v2749 = vpop.f32.mrb[0].mxu0
      %v2750 = vadd.f32 %v2625, %v2749
      %v2751 = vpop.f32.mrb[0].mxu0
      %2752 = vmatprep.mubr.f32.mxu0 0.0
      %2753 = vmatmul.mubr.f32.gmra.mrb[0].mxu0 %v2470
      %v2754 = vpop.f32.mrb[0].mxu0
      %v2755 = vadd.f32 %v2630, %v2754
      %v2756 = vpop.f32.mrb[0].mxu0
      %2757 = vmatprep.mubr.f32.mxu0 0.0
      %2758 = vmatmul.mubr.f32.gmra.mrb[0].mxu0 %v2471
      %v2759 = vpop.f32.mrb[0].mxu0
      %v2760 = vadd.f32 %v2635, %v2759
      %v2761 = vpop.f32.mrb[0].mxu0
      %2762 = vmatprep.mubr.f32.mxu0 0.0
      %2763 = vmatmul.mubr.f32.gmra.mrb[0].mxu0 %v2472
      %v2764 = vpop.f32.mrb[0].mxu0
      %v2765 = vadd.f32 %v2640, %v2764
      %v2766 = vpop.f32.mrb[0].mxu0
      %2767 = vdwg.mxu0
      %v2768 = vld [vmem:[#allocation3 + $0x2] sm:$0xff]
      %v2769 = vld [vmem:[#allocation3 + $0xa] sm:$0xff]
      %v2770 = vld [vmem:[#allocation3 + $0x12] sm:$0xff]
      %v2771 = vld [vmem:[#allocation3 + $0x1a] sm:$0xff]
      %v2772 = vld [vmem:[#allocation3 + $0x22] sm:$0xff]
      %v2773 = vld [vmem:[#allocation3 + $0x2a] sm:$0xff]
      %v2774 = vld [vmem:[#allocation3 + $0x32] sm:$0xff]
      %v2775 = vld [vmem:[#allocation3 + $0x3a] sm:$0xff]
      %v2776 = vld [vmem:[#allocation3 + $0x42] sm:$0xff]
      %v2777 = vld [vmem:[#allocation3 + $0x4a] sm:$0xff]
      %v2778 = vld [vmem:[#allocation3 + $0x52] sm:$0xff]
      %v2779 = vld [vmem:[#allocation3 + $0x5a] sm:$0xff]
      %s2780 = scalar_lea.vmem %s6, 256
      %v2781 = vld [vmem:[%s2780] sm:$0xff]
      %v2782 = vld [vmem:[%s2780 + $0x8] sm:$0xff]
      %v2783 = vld [vmem:[%s2780 + $0x10] sm:$0xff]
      %v2784 = vld [vmem:[%s2780 + $0x18] sm:$0xff]
      %v2785 = vld [vmem:[%s2780 + $0x20] sm:$0xff]
      %v2786 = vld [vmem:[%s2780 + $0x28] sm:$0xff]
      %v2787 = vld [vmem:[%s2780 + $0x30] sm:$0xff]
      %v2788 = vld [vmem:[%s2780 + $0x38] sm:$0xff]
      %v2789 = vld [vmem:[%s2780 + $0x40] sm:$0xff]
      %v2790 = vld [vmem:[%s2780 + $0x48] sm:$0xff]
      %v2791 = vld [vmem:[%s2780 + $0x50] sm:$0xff]
      %v2792 = vld [vmem:[%s2780 + $0x58] sm:$0xff]
      %v2793 = vld [vmem:[%s2780 + $0x60] sm:$0xff]
      %v2794 = vld [vmem:[%s2780 + $0x68] sm:$0xff]
      %v2795 = vld [vmem:[%s2780 + $0x70] sm:$0xff]
      %v2796 = vld [vmem:[%s2780 + $0x78] sm:$0xff]
      %2797 = vmatprep.subr.mxu0 0.0
      %2798 = vmatpush1.msra.mxu0 %v2781
      %2799 = vmatprep.subr.mxu0 0.0
      %2800 = vmatpush1.msra.mxu0 %v2782
      %2801 = vmatprep.subr.mxu0 0.0
      %2802 = vmatpush1.msra.mxu0 %v2783
      %2803 = vmatprep.subr.mxu0 0.0
      %2804 = vmatpush1.msra.mxu0 %v2784
      %2805 = vmatprep.subr.mxu0 0.0
      %2806 = vmatpush1.msra.mxu0 %v2785
      %2807 = vmatprep.subr.mxu0 0.0
      %2808 = vmatpush1.msra.mxu0 %v2786
      %2809 = vmatprep.subr.mxu0 0.0
      %2810 = vmatpush1.msra.mxu0 %v2787
      %2811 = vmatprep.subr.mxu0 0.0
      %2812 = vmatpush1.msra.mxu0 %v2788
      %2813 = vmatprep.subr.mxu0 0.0
      %2814 = vmatpush1.msra.mxu0 %v2789
      %2815 = vmatprep.subr.mxu0 0.0
      %2816 = vmatpush1.msra.mxu0 %v2790
      %2817 = vmatprep.subr.mxu0 0.0
      %2818 = vmatpush1.msra.mxu0 %v2791
      %2819 = vmatprep.subr.mxu0 0.0
      %2820 = vmatpush1.msra.mxu0 %v2792
      %2821 = vmatprep.subr.mxu0 0.0
      %2822 = vmatpush1.msra.mxu0 %v2793
      %2823 = vmatprep.subr.mxu0 0.0
      %2824 = vmatpush1.msra.mxu0 %v2794
      %2825 = vmatprep.subr.mxu0 0.0
      %2826 = vmatpush1.msra.mxu0 %v2795
      %2827 = vmatprep.subr.mxu0 0.0
      %2828 = vmatpush1.msra.mxu0 %v2796
      %2829 = vmatprep.subr.mxu0 0.0
      %2830 = vmatpush1.msra.mxu0 0.0
      %2831 = vmatprep.subr.mxu0 0.0
      %2832 = vmatpush1.msra.mxu0 0.0
      %2833 = vmatprep.subr.mxu0 0.0
      %2834 = vmatpush1.msra.mxu0 0.0
      %2835 = vmatprep.subr.mxu0 0.0
      %2836 = vmatpush1.msra.mxu0 0.0
      %2837 = vmatprep.subr.mxu0 0.0
      %2838 = vmatpush1.msra.mxu0 0.0
      %2839 = vmatprep.subr.mxu0 0.0
      %2840 = vmatpush1.msra.mxu0 0.0
      %2841 = vmatprep.subr.mxu0 0.0
      %2842 = vmatpush1.msra.mxu0 0.0
      %2843 = vmatprep.subr.mxu0 0.0
      %2844 = vmatpush1.msra.mxu0 0.0
      %2845 = vmatprep.subr.mxu0 0.0
      %2846 = vmatpush1.msra.mxu0 0.0
      %2847 = vmatprep.subr.mxu0 0.0
      %2848 = vmatpush1.msra.mxu0 0.0
      %2849 = vmatprep.subr.mxu0 0.0
      %2850 = vmatpush1.msra.mxu0 0.0
      %2851 = vmatprep.subr.mxu0 0.0
      %2852 = vmatpush1.msra.mxu0 0.0
      %2853 = vmatprep.subr.mxu0 0.0
      %2854 = vmatpush1.msra.mxu0 0.0
      %2855 = vmatprep.subr.mxu0 0.0
      %2856 = vmatpush1.msra.mxu0 0.0
      %2857 = vmatprep.subr.mxu0 0.0
      %2858 = vmatpush1.msra.mxu0 0.0
      %2859 = vmatprep.subr.mxu0 0.0
      %2860 = vmatpush1.msra.mxu0 0.0
      %2861 = vmatprep.mubr.f32.mxu0 0.0
      %2862 = vmatmul.mubr.f32.gmra.mrb[0].mxu0 %v2768
      %v2863 = vpop.f32.mrb[0].mxu0
      %v2864 = vadd.f32 0.0, %v2863
      %v2865 = vpop.f32.mrb[0].mxu0
      %2866 = vmatprep.mubr.f32.mxu0 0.0
      %2867 = vmatmul.mubr.f32.gmra.mrb[0].mxu0 %v2769
      %v2868 = vpop.f32.mrb[0].mxu0
      %v2869 = vadd.f32 0.0, %v2868
      %v2870 = vpop.f32.mrb[0].mxu0
      %2871 = vmatprep.mubr.f32.mxu0 0.0
      %2872 = vmatmul.mubr.f32.gmra.mrb[0].mxu0 %v2770
      %v2873 = vpop.f32.mrb[0].mxu0
      %v2874 = vadd.f32 0.0, %v2873
      %v2875 = vpop.f32.mrb[0].mxu0
      %2876 = vmatprep.mubr.f32.mxu0 0.0
      %2877 = vmatmul.mubr.f32.gmra.mrb[0].mxu0 %v2771
      %v2878 = vpop.f32.mrb[0].mxu0
      %v2879 = vadd.f32 0.0, %v2878
      %v2880 = vpop.f32.mrb[0].mxu0
      %2881 = vmatprep.mubr.f32.mxu0 0.0
      %2882 = vmatmul.mubr.f32.gmra.mrb[0].mxu0 %v2772
      %v2883 = vpop.f32.mrb[0].mxu0
      %v2884 = vadd.f32 0.0, %v2883
      %v2885 = vpop.f32.mrb[0].mxu0
      %2886 = vmatprep.mubr.f32.mxu0 0.0
      %2887 = vmatmul.mubr.f32.gmra.mrb[0].mxu0 %v2773
      %v2888 = vpop.f32.mrb[0].mxu0
      %v2889 = vadd.f32 0.0, %v2888
      %v2890 = vpop.f32.mrb[0].mxu0
      %2891 = vmatprep.mubr.f32.mxu0 0.0
      %2892 = vmatmul.mubr.f32.gmra.mrb[0].mxu0 %v2774
      %v2893 = vpop.f32.mrb[0].mxu0
      %v2894 = vadd.f32 0.0, %v2893
      %v2895 = vpop.f32.mrb[0].mxu0
      %2896 = vmatprep.mubr.f32.mxu0 0.0
      %2897 = vmatmul.mubr.f32.gmra.mrb[0].mxu0 %v2775
      %v2898 = vpop.f32.mrb[0].mxu0
      %v2899 = vadd.f32 0.0, %v2898
      %v2900 = vpop.f32.mrb[0].mxu0
      %2901 = vmatprep.mubr.f32.mxu0 0.0
      %2902 = vmatmul.mubr.f32.gmra.mrb[0].mxu0 %v2776
      %v2903 = vpop.f32.mrb[0].mxu0
      %v2904 = vadd.f32 0.0, %v2903
      %v2905 = vpop.f32.mrb[0].mxu0
      %2906 = vmatprep.mubr.f32.mxu0 0.0
      %2907 = vmatmul.mubr.f32.gmra.mrb[0].mxu0 %v2777
      %v2908 = vpop.f32.mrb[0].mxu0
      %v2909 = vadd.f32 0.0, %v2908
      %v2910 = vpop.f32.mrb[0].mxu0
      %2911 = vmatprep.mubr.f32.mxu0 0.0
      %2912 = vmatmul.mubr.f32.gmra.mrb[0].mxu0 %v2778
      %v2913 = vpop.f32.mrb[0].mxu0
      %v2914 = vadd.f32 0.0, %v2913
      %v2915 = vpop.f32.mrb[0].mxu0
      %2916 = vmatprep.mubr.f32.mxu0 0.0
      %2917 = vmatmul.mubr.f32.gmra.mrb[0].mxu0 %v2779
      %v2918 = vpop.f32.mrb[0].mxu0
      %v2919 = vadd.f32 0.0, %v2918
      %v2920 = vpop.f32.mrb[0].mxu0
      %2921 = vdwg.mxu0
      %v2922 = vadd.f32 %v2710, %v2864
      %v2923 = vadd.f32 %v2715, %v2869
      %v2924 = vadd.f32 %v2720, %v2874
      %v2925 = vadd.f32 %v2725, %v2879
      %v2926 = vadd.f32 %v2730, %v2884
      %v2927 = vadd.f32 %v2735, %v2889
      %v2928 = vadd.f32 %v2740, %v2894
      %v2929 = vadd.f32 %v2745, %v2899
      %v2930 = vadd.f32 %v2750, %v2904
      %v2931 = vadd.f32 %v2755, %v2909
      %v2932 = vadd.f32 %v2760, %v2914
      %v2933 = vadd.f32 %v2765, %v2919
      %v2934 = vld [vmem:[#allocation3 + $0x3] sm:$0xff]
      %v2935 = vld [vmem:[#allocation3 + $0xb] sm:$0xff]
      %v2936 = vld [vmem:[#allocation3 + $0x13] sm:$0xff]
      %v2937 = vld [vmem:[#allocation3 + $0x1b] sm:$0xff]
      %v2938 = vld [vmem:[#allocation3 + $0x23] sm:$0xff]
      %v2939 = vld [vmem:[#allocation3 + $0x2b] sm:$0xff]
      %v2940 = vld [vmem:[#allocation3 + $0x33] sm:$0xff]
      %v2941 = vld [vmem:[#allocation3 + $0x3b] sm:$0xff]
      %v2942 = vld [vmem:[#allocation3 + $0x43] sm:$0xff]
      %v2943 = vld [vmem:[#allocation3 + $0x4b] sm:$0xff]
      %v2944 = vld [vmem:[#allocation3 + $0x53] sm:$0xff]
      %v2945 = vld [vmem:[#allocation3 + $0x5b] sm:$0xff]
      %s2946 = scalar_lea.vmem %s6, 384
      %v2947 = vld [vmem:[%s2946] sm:$0xff]
      %v2948 = vld [vmem:[%s2946 + $0x8] sm:$0xff]
      %v2949 = vld [vmem:[%s2946 + $0x10] sm:$0xff]
      %v2950 = vld [vmem:[%s2946 + $0x18] sm:$0xff]
      %v2951 = vld [vmem:[%s2946 + $0x20] sm:$0xff]
      %v2952 = vld [vmem:[%s2946 + $0x28] sm:$0xff]
      %v2953 = vld [vmem:[%s2946 + $0x30] sm:$0xff]
      %v2954 = vld [vmem:[%s2946 + $0x38] sm:$0xff]
      %v2955 = vld [vmem:[%s2946 + $0x40] sm:$0xff]
      %v2956 = vld [vmem:[%s2946 + $0x48] sm:$0xff]
      %v2957 = vld [vmem:[%s2946 + $0x50] sm:$0xff]
      %v2958 = vld [vmem:[%s2946 + $0x58] sm:$0xff]
      %v2959 = vld [vmem:[%s2946 + $0x60] sm:$0xff]
      %v2960 = vld [vmem:[%s2946 + $0x68] sm:$0xff]
      %v2961 = vld [vmem:[%s2946 + $0x70] sm:$0xff]
      %v2962 = vld [vmem:[%s2946 + $0x78] sm:$0xff]
      %2963 = vmatprep.subr.mxu0 0.0
      %2964 = vmatpush1.msra.mxu0 %v2947
      %2965 = vmatprep.subr.mxu0 0.0
      %2966 = vmatpush1.msra.mxu0 %v2948
      %2967 = vmatprep.subr.mxu0 0.0
      %2968 = vmatpush1.msra.mxu0 %v2949
      %2969 = vmatprep.subr.mxu0 0.0
      %2970 = vmatpush1.msra.mxu0 %v2950
      %2971 = vmatprep.subr.mxu0 0.0
      %2972 = vmatpush1.msra.mxu0 %v2951
      %2973 = vmatprep.subr.mxu0 0.0
      %2974 = vmatpush1.msra.mxu0 %v2952
      %2975 = vmatprep.subr.mxu0 0.0
      %2976 = vmatpush1.msra.mxu0 %v2953
      %2977 = vmatprep.subr.mxu0 0.0
      %2978 = vmatpush1.msra.mxu0 %v2954
      %2979 = vmatprep.subr.mxu0 0.0
      %2980 = vmatpush1.msra.mxu0 %v2955
      %2981 = vmatprep.subr.mxu0 0.0
      %2982 = vmatpush1.msra.mxu0 %v2956
      %2983 = vmatprep.subr.mxu0 0.0
      %2984 = vmatpush1.msra.mxu0 %v2957
      %2985 = vmatprep.subr.mxu0 0.0
      %2986 = vmatpush1.msra.mxu0 %v2958
      %2987 = vmatprep.subr.mxu0 0.0
      %2988 = vmatpush1.msra.mxu0 %v2959
      %2989 = vmatprep.subr.mxu0 0.0
      %2990 = vmatpush1.msra.mxu0 %v2960
      %2991 = vmatprep.subr.mxu0 0.0
      %2992 = vmatpush1.msra.mxu0 %v2961
      %2993 = vmatprep.subr.mxu0 0.0
      %2994 = vmatpush1.msra.mxu0 %v2962
      %2995 = vmatprep.subr.mxu0 0.0
      %2996 = vmatpush1.msra.mxu0 0.0
      %2997 = vmatprep.subr.mxu0 0.0
      %2998 = vmatpush1.msra.mxu0 0.0
      %2999 = vmatprep.subr.mxu0 0.0
      %3000 = vmatpush1.msra.mxu0 0.0
      %3001 = vmatprep.subr.mxu0 0.0
      %3002 = vmatpush1.msra.mxu0 0.0
      %3003 = vmatprep.subr.mxu0 0.0
      %3004 = vmatpush1.msra.mxu0 0.0
      %3005 = vmatprep.subr.mxu0 0.0
      %3006 = vmatpush1.msra.mxu0 0.0
      %3007 = vmatprep.subr.mxu0 0.0
      %3008 = vmatpush1.msra.mxu0 0.0
      %3009 = vmatprep.subr.mxu0 0.0
      %3010 = vmatpush1.msra.mxu0 0.0
      %3011 = vmatprep.subr.mxu0 0.0
      %3012 = vmatpush1.msra.mxu0 0.0
      %3013 = vmatprep.subr.mxu0 0.0
      %3014 = vmatpush1.msra.mxu0 0.0
      %3015 = vmatprep.subr.mxu0 0.0
      %3016 = vmatpush1.msra.mxu0 0.0
      %3017 = vmatprep.subr.mxu0 0.0
      %3018 = vmatpush1.msra.mxu0 0.0
      %3019 = vmatprep.subr.mxu0 0.0
      %3020 = vmatpush1.msra.mxu0 0.0
      %3021 = vmatprep.subr.mxu0 0.0
      %3022 = vmatpush1.msra.mxu0 0.0
      %3023 = vmatprep.subr.mxu0 0.0
      %3024 = vmatpush1.msra.mxu0 0.0
      %3025 = vmatprep.subr.mxu0 0.0
      %3026 = vmatpush1.msra.mxu0 0.0
      %3027 = vmatprep.mubr.f32.mxu0 0.0
      %3028 = vmatmul.mubr.f32.gmra.mrb[0].mxu0 %v2934
      %v3029 = vpop.f32.mrb[0].mxu0
      %v3030 = vadd.f32 0.0, %v3029
      %v3031 = vpop.f32.mrb[0].mxu0
      %3032 = vmatprep.mubr.f32.mxu0 0.0
      %3033 = vmatmul.mubr.f32.gmra.mrb[0].mxu0 %v2935
      %v3034 = vpop.f32.mrb[0].mxu0
      %v3035 = vadd.f32 0.0, %v3034
      %v3036 = vpop.f32.mrb[0].mxu0
      %3037 = vmatprep.mubr.f32.mxu0 0.0
      %3038 = vmatmul.mubr.f32.gmra.mrb[0].mxu0 %v2936
      %v3039 = vpop.f32.mrb[0].mxu0
      %v3040 = vadd.f32 0.0, %v3039
      %v3041 = vpop.f32.mrb[0].mxu0
      %3042 = vmatprep.mubr.f32.mxu0 0.0
      %3043 = vmatmul.mubr.f32.gmra.mrb[0].mxu0 %v2937
      %v3044 = vpop.f32.mrb[0].mxu0
      %v3045 = vadd.f32 0.0, %v3044
      %v3046 = vpop.f32.mrb[0].mxu0
      %3047 = vmatprep.mubr.f32.mxu0 0.0
      %3048 = vmatmul.mubr.f32.gmra.mrb[0].mxu0 %v2938
      %v3049 = vpop.f32.mrb[0].mxu0
      %v3050 = vadd.f32 0.0, %v3049
      %v3051 = vpop.f32.mrb[0].mxu0
      %3052 = vmatprep.mubr.f32.mxu0 0.0
      %3053 = vmatmul.mubr.f32.gmra.mrb[0].mxu0 %v2939
      %v3054 = vpop.f32.mrb[0].mxu0
      %v3055 = vadd.f32 0.0, %v3054
      %v3056 = vpop.f32.mrb[0].mxu0
      %3057 = vmatprep.mubr.f32.mxu0 0.0
      %3058 = vmatmul.mubr.f32.gmra.mrb[0].mxu0 %v2940
      %v3059 = vpop.f32.mrb[0].mxu0
      %v3060 = vadd.f32 0.0, %v3059
      %v3061 = vpop.f32.mrb[0].mxu0
      %3062 = vmatprep.mubr.f32.mxu0 0.0
      %3063 = vmatmul.mubr.f32.gmra.mrb[0].mxu0 %v2941
      %v3064 = vpop.f32.mrb[0].mxu0
      %v3065 = vadd.f32 0.0, %v3064
      %v3066 = vpop.f32.mrb[0].mxu0
      %3067 = vmatprep.mubr.f32.mxu0 0.0
      %3068 = vmatmul.mubr.f32.gmra.mrb[0].mxu0 %v2942
      %v3069 = vpop.f32.mrb[0].mxu0
      %v3070 = vadd.f32 0.0, %v3069
      %v3071 = vpop.f32.mrb[0].mxu0
      %3072 = vmatprep.mubr.f32.mxu0 0.0
      %3073 = vmatmul.mubr.f32.gmra.mrb[0].mxu0 %v2943
      %v3074 = vpop.f32.mrb[0].mxu0
      %v3075 = vadd.f32 0.0, %v3074
      %v3076 = vpop.f32.mrb[0].mxu0
      %3077 = vmatprep.mubr.f32.mxu0 0.0
      %3078 = vmatmul.mubr.f32.gmra.mrb[0].mxu0 %v2944
      %v3079 = vpop.f32.mrb[0].mxu0
      %v3080 = vadd.f32 0.0, %v3079
      %v3081 = vpop.f32.mrb[0].mxu0
      %3082 = vmatprep.mubr.f32.mxu0 0.0
      %3083 = vmatmul.mubr.f32.gmra.mrb[0].mxu0 %v2945
      %v3084 = vpop.f32.mrb[0].mxu0
      %v3085 = vadd.f32 0.0, %v3084
      %v3086 = vpop.f32.mrb[0].mxu0
      %3087 = vdwg.mxu0
      %v3088 = vadd.f32 %v2922, %v3030
      %v3089 = vadd.f32 %v2923, %v3035
      %v3090 = vadd.f32 %v2924, %v3040
      %v3091 = vadd.f32 %v2925, %v3045
      %v3092 = vadd.f32 %v2926, %v3050
      %v3093 = vadd.f32 %v2927, %v3055
      %v3094 = vadd.f32 %v2928, %v3060
      %v3095 = vadd.f32 %v2929, %v3065
      %v3096 = vadd.f32 %v2930, %v3070
      %v3097 = vadd.f32 %v2931, %v3075
      %v3098 = vadd.f32 %v2932, %v3080
      %v3099 = vadd.f32 %v2933, %v3085
      %v3100 = vld [vmem:[#allocation3 + $0x4] sm:$0xff]
      %v3101 = vld [vmem:[#allocation3 + $0xc] sm:$0xff]
      %v3102 = vld [vmem:[#allocation3 + $0x14] sm:$0xff]
      %v3103 = vld [vmem:[#allocation3 + $0x1c] sm:$0xff]
      %v3104 = vld [vmem:[#allocation3 + $0x24] sm:$0xff]
      %v3105 = vld [vmem:[#allocation3 + $0x2c] sm:$0xff]
      %v3106 = vld [vmem:[#allocation3 + $0x34] sm:$0xff]
      %v3107 = vld [vmem:[#allocation3 + $0x3c] sm:$0xff]
      %v3108 = vld [vmem:[#allocation3 + $0x44] sm:$0xff]
      %v3109 = vld [vmem:[#allocation3 + $0x4c] sm:$0xff]
      %v3110 = vld [vmem:[#allocation3 + $0x54] sm:$0xff]
      %v3111 = vld [vmem:[#allocation3 + $0x5c] sm:$0xff]
      %s3112 = scalar_lea.vmem %s6, 512
      %v3113 = vld [vmem:[%s3112] sm:$0xff]
      %v3114 = vld [vmem:[%s3112 + $0x8] sm:$0xff]
      %v3115 = vld [vmem:[%s3112 + $0x10] sm:$0xff]
      %v3116 = vld [vmem:[%s3112 + $0x18] sm:$0xff]
      %v3117 = vld [vmem:[%s3112 + $0x20] sm:$0xff]
      %v3118 = vld [vmem:[%s3112 + $0x28] sm:$0xff]
      %v3119 = vld [vmem:[%s3112 + $0x30] sm:$0xff]
      %v3120 = vld [vmem:[%s3112 + $0x38] sm:$0xff]
      %v3121 = vld [vmem:[%s3112 + $0x40] sm:$0xff]
      %v3122 = vld [vmem:[%s3112 + $0x48] sm:$0xff]
      %v3123 = vld [vmem:[%s3112 + $0x50] sm:$0xff]
      %v3124 = vld [vmem:[%s3112 + $0x58] sm:$0xff]
      %v3125 = vld [vmem:[%s3112 + $0x60] sm:$0xff]
      %v3126 = vld [vmem:[%s3112 + $0x68] sm:$0xff]
      %v3127 = vld [vmem:[%s3112 + $0x70] sm:$0xff]
      %v3128 = vld [vmem:[%s3112 + $0x78] sm:$0xff]
      %3129 = vmatprep.subr.mxu0 0.0
      %3130 = vmatpush1.msra.mxu0 %v3113
      %3131 = vmatprep.subr.mxu0 0.0
      %3132 = vmatpush1.msra.mxu0 %v3114
      %3133 = vmatprep.subr.mxu0 0.0
      %3134 = vmatpush1.msra.mxu0 %v3115
      %3135 = vmatprep.subr.mxu0 0.0
      %3136 = vmatpush1.msra.mxu0 %v3116
      %3137 = vmatprep.subr.mxu0 0.0
      %3138 = vmatpush1.msra.mxu0 %v3117
      %3139 = vmatprep.subr.mxu0 0.0
      %3140 = vmatpush1.msra.mxu0 %v3118
      %3141 = vmatprep.subr.mxu0 0.0
      %3142 = vmatpush1.msra.mxu0 %v3119
      %3143 = vmatprep.subr.mxu0 0.0
      %3144 = vmatpush1.msra.mxu0 %v3120
      %3145 = vmatprep.subr.mxu0 0.0
      %3146 = vmatpush1.msra.mxu0 %v3121
      %3147 = vmatprep.subr.mxu0 0.0
      %3148 = vmatpush1.msra.mxu0 %v3122
      %3149 = vmatprep.subr.mxu0 0.0
      %3150 = vmatpush1.msra.mxu0 %v3123
      %3151 = vmatprep.subr.mxu0 0.0
      %3152 = vmatpush1.msra.mxu0 %v3124
      %3153 = vmatprep.subr.mxu0 0.0
      %3154 = vmatpush1.msra.mxu0 %v3125
      %3155 = vmatprep.subr.mxu0 0.0
      %3156 = vmatpush1.msra.mxu0 %v3126
      %3157 = vmatprep.subr.mxu0 0.0
      %3158 = vmatpush1.msra.mxu0 %v3127
      %3159 = vmatprep.subr.mxu0 0.0
      %3160 = vmatpush1.msra.mxu0 %v3128
      %3161 = vmatprep.subr.mxu0 0.0
      %3162 = vmatpush1.msra.mxu0 0.0
      %3163 = vmatprep.subr.mxu0 0.0
      %3164 = vmatpush1.msra.mxu0 0.0
      %3165 = vmatprep.subr.mxu0 0.0
      %3166 = vmatpush1.msra.mxu0 0.0
      %3167 = vmatprep.subr.mxu0 0.0
      %3168 = vmatpush1.msra.mxu0 0.0
      %3169 = vmatprep.subr.mxu0 0.0
      %3170 = vmatpush1.msra.mxu0 0.0
      %3171 = vmatprep.subr.mxu0 0.0
      %3172 = vmatpush1.msra.mxu0 0.0
      %3173 = vmatprep.subr.mxu0 0.0
      %3174 = vmatpush1.msra.mxu0 0.0
      %3175 = vmatprep.subr.mxu0 0.0
      %3176 = vmatpush1.msra.mxu0 0.0
      %3177 = vmatprep.subr.mxu0 0.0
      %3178 = vmatpush1.msra.mxu0 0.0
      %3179 = vmatprep.subr.mxu0 0.0
      %3180 = vmatpush1.msra.mxu0 0.0
      %3181 = vmatprep.subr.mxu0 0.0
      %3182 = vmatpush1.msra.mxu0 0.0
      %3183 = vmatprep.subr.mxu0 0.0
      %3184 = vmatpush1.msra.mxu0 0.0
      %3185 = vmatprep.subr.mxu0 0.0
      %3186 = vmatpush1.msra.mxu0 0.0
      %3187 = vmatprep.subr.mxu0 0.0
      %3188 = vmatpush1.msra.mxu0 0.0
      %3189 = vmatprep.subr.mxu0 0.0
      %3190 = vmatpush1.msra.mxu0 0.0
      %3191 = vmatprep.subr.mxu0 0.0
      %3192 = vmatpush1.msra.mxu0 0.0
      %3193 = vmatprep.mubr.f32.mxu0 0.0
      %3194 = vmatmul.mubr.f32.gmra.mrb[0].mxu0 %v3100
      %v3195 = vpop.f32.mrb[0].mxu0
      %v3196 = vadd.f32 0.0, %v3195
      %v3197 = vpop.f32.mrb[0].mxu0
      %3198 = vmatprep.mubr.f32.mxu0 0.0
      %3199 = vmatmul.mubr.f32.gmra.mrb[0].mxu0 %v3101
      %v3200 = vpop.f32.mrb[0].mxu0
      %v3201 = vadd.f32 0.0, %v3200
      %v3202 = vpop.f32.mrb[0].mxu0
      %3203 = vmatprep.mubr.f32.mxu0 0.0
      %3204 = vmatmul.mubr.f32.gmra.mrb[0].mxu0 %v3102
      %v3205 = vpop.f32.mrb[0].mxu0
      %v3206 = vadd.f32 0.0, %v3205
      %v3207 = vpop.f32.mrb[0].mxu0
      %3208 = vmatprep.mubr.f32.mxu0 0.0
      %3209 = vmatmul.mubr.f32.gmra.mrb[0].mxu0 %v3103
      %v3210 = vpop.f32.mrb[0].mxu0
      %v3211 = vadd.f32 0.0, %v3210
      %v3212 = vpop.f32.mrb[0].mxu0
      %3213 = vmatprep.mubr.f32.mxu0 0.0
      %3214 = vmatmul.mubr.f32.gmra.mrb[0].mxu0 %v3104
      %v3215 = vpop.f32.mrb[0].mxu0
      %v3216 = vadd.f32 0.0, %v3215
      %v3217 = vpop.f32.mrb[0].mxu0
      %3218 = vmatprep.mubr.f32.mxu0 0.0
      %3219 = vmatmul.mubr.f32.gmra.mrb[0].mxu0 %v3105
      %v3220 = vpop.f32.mrb[0].mxu0
      %v3221 = vadd.f32 0.0, %v3220
      %v3222 = vpop.f32.mrb[0].mxu0
      %3223 = vmatprep.mubr.f32.mxu0 0.0
      %3224 = vmatmul.mubr.f32.gmra.mrb[0].mxu0 %v3106
      %v3225 = vpop.f32.mrb[0].mxu0
      %v3226 = vadd.f32 0.0, %v3225
      %v3227 = vpop.f32.mrb[0].mxu0
      %3228 = vmatprep.mubr.f32.mxu0 0.0
      %3229 = vmatmul.mubr.f32.gmra.mrb[0].mxu0 %v3107
      %v3230 = vpop.f32.mrb[0].mxu0
      %v3231 = vadd.f32 0.0, %v3230
      %v3232 = vpop.f32.mrb[0].mxu0
      %3233 = vmatprep.mubr.f32.mxu0 0.0
      %3234 = vmatmul.mubr.f32.gmra.mrb[0].mxu0 %v3108
      %v3235 = vpop.f32.mrb[0].mxu0
      %v3236 = vadd.f32 0.0, %v3235
      %v3237 = vpop.f32.mrb[0].mxu0
      %3238 = vmatprep.mubr.f32.mxu0 0.0
      %3239 = vmatmul.mubr.f32.gmra.mrb[0].mxu0 %v3109
      %v3240 = vpop.f32.mrb[0].mxu0
      %v3241 = vadd.f32 0.0, %v3240
      %v3242 = vpop.f32.mrb[0].mxu0
      %3243 = vmatprep.mubr.f32.mxu0 0.0
      %3244 = vmatmul.mubr.f32.gmra.mrb[0].mxu0 %v3110
      %v3245 = vpop.f32.mrb[0].mxu0
      %v3246 = vadd.f32 0.0, %v3245
      %v3247 = vpop.f32.mrb[0].mxu0
      %3248 = vmatprep.mubr.f32.mxu0 0.0
      %3249 = vmatmul.mubr.f32.gmra.mrb[0].mxu0 %v3111
      %v3250 = vpop.f32.mrb[0].mxu0
      %v3251 = vadd.f32 0.0, %v3250
      %v3252 = vpop.f32.mrb[0].mxu0
      %3253 = vdwg.mxu0
      %v3254 = vadd.f32 %v3088, %v3196
      %v3255 = vadd.f32 %v3089, %v3201
      %v3256 = vadd.f32 %v3090, %v3206
      %v3257 = vadd.f32 %v3091, %v3211
      %v3258 = vadd.f32 %v3092, %v3216
      %v3259 = vadd.f32 %v3093, %v3221
      %v3260 = vadd.f32 %v3094, %v3226
      %v3261 = vadd.f32 %v3095, %v3231
      %v3262 = vadd.f32 %v3096, %v3236
      %v3263 = vadd.f32 %v3097, %v3241
      %v3264 = vadd.f32 %v3098, %v3246
      %v3265 = vadd.f32 %v3099, %v3251
      %v3266 = vld [vmem:[%s7] sm:$0x1]
      %v3268 = vlaneseq
      %v3269 = vshrl.u32 %v3268, 7
      %v3270 = vsub.s32 0, %v3269
      %v3271 = vrot.slane %v3266, %v3270
      %v3273 = vadd.f32 %v3254, %v3271
      %v3274 = vadd.f32 %v3255, %v3271
      %v3275 = vadd.f32 %v3256, %v3271
      %v3276 = vadd.f32 %v3257, %v3271
      %v3277 = vadd.f32 %v3258, %v3271
      %v3278 = vadd.f32 %v3259, %v3271
      %v3279 = vadd.f32 %v3260, %v3271
      %v3280 = vadd.f32 %v3261, %v3271
      %v3281 = vadd.f32 %v3262, %v3271
      %v3282 = vadd.f32 %v3263, %v3271
      %v3283 = vadd.f32 %v3264, %v3271
      %v3284 = vadd.f32 %v3265, %v3271
      %v3285 = vmax.f32 %v3273, 0.0
      %v3286 = vmax.f32 %v3274, 0.0
      %v3287 = vmax.f32 %v3275, 0.0
      %v3288 = vmax.f32 %v3276, 0.0
      %v3289 = vmax.f32 %v3277, 0.0
      %v3290 = vmax.f32 %v3278, 0.0
      %v3291 = vmax.f32 %v3279, 0.0
      %v3292 = vmax.f32 %v3280, 0.0
      %v3293 = vmax.f32 %v3281, 0.0
      %v3294 = vmax.f32 %v3282, 0.0
      %v3295 = vmax.f32 %v3283, 0.0
      %v3296 = vmax.f32 %v3284, 0.0
      %v3297 = vsel %vm2449, 1, 0
      %v3298 = vsel %vm2450, 1, 0
      %v3299 = vsel %vm2451, 1, 0
      %v3300 = vsel %vm2452, 1, 0
      %v3301 = vsel %vm2453, 1, 0
      %v3302 = vsel %vm2454, 1, 0
      %v3303 = vsel %vm2455, 1, 0
      %v3304 = vsel %vm2456, 1, 0
      %v3305 = vsel %vm2457, 1, 0
      %v3306 = vsel %vm2458, 1, 0
      %v3307 = vsel %vm2459, 1, 0
      %v3308 = vsel %vm2460, 1, 0
      %3309 = vset.pattern.permute.xlu0 0
      %3310 = vperm.xlu0 %3309, %v3297
      %v3311 = vpop.permute.xlu0 %3310
      %3312 = vset.pattern.permute.xlu0 0
      %3313 = vperm.xlu0 %3312, %v3298
      %v3314 = vpop.permute.xlu0 %3313
      %3315 = vset.pattern.permute.xlu0 0
      %3316 = vperm.xlu0 %3315, %v3299
      %v3317 = vpop.permute.xlu0 %3316
      %3318 = vset.pattern.permute.xlu0 0
      %3319 = vperm.xlu0 %3318, %v3300
      %v3320 = vpop.permute.xlu0 %3319
      %3321 = vset.pattern.permute.xlu0 0
      %3322 = vperm.xlu0 %3321, %v3301
      %v3323 = vpop.permute.xlu0 %3322
      %3324 = vset.pattern.permute.xlu0 0
      %3325 = vperm.xlu0 %3324, %v3302
      %v3326 = vpop.permute.xlu0 %3325
      %3327 = vset.pattern.permute.xlu0 0
      %3328 = vperm.xlu0 %3327, %v3303
      %v3329 = vpop.permute.xlu0 %3328
      %3330 = vset.pattern.permute.xlu0 0
      %3331 = vperm.xlu0 %3330, %v3304
      %v3332 = vpop.permute.xlu0 %3331
      %3333 = vset.pattern.permute.xlu0 0
      %3334 = vperm.xlu0 %3333, %v3305
      %v3335 = vpop.permute.xlu0 %3334
      %3336 = vset.pattern.permute.xlu0 0
      %3337 = vperm.xlu0 %3336, %v3306
      %v3338 = vpop.permute.xlu0 %3337
      %3339 = vset.pattern.permute.xlu0 0
      %3340 = vperm.xlu0 %3339, %v3307
      %v3341 = vpop.permute.xlu0 %3340
      %3342 = vset.pattern.permute.xlu0 0
      %3343 = vperm.xlu0 %3342, %v3308
      %v3344 = vpop.permute.xlu0 %3343
      %vm3345 = vcmp.eq.s32.totalorder %v3311, 1
      %vm3346 = vcmp.eq.s32.totalorder %v3314, 1
      %vm3347 = vcmp.eq.s32.totalorder %v3317, 1
      %vm3348 = vcmp.eq.s32.totalorder %v3320, 1
      %vm3349 = vcmp.eq.s32.totalorder %v3323, 1
      %vm3350 = vcmp.eq.s32.totalorder %v3326, 1
      %vm3351 = vcmp.eq.s32.totalorder %v3329, 1
      %vm3352 = vcmp.eq.s32.totalorder %v3332, 1
      %vm3353 = vcmp.eq.s32.totalorder %v3335, 1
      %vm3354 = vcmp.eq.s32.totalorder %v3338, 1
      %vm3355 = vcmp.eq.s32.totalorder %v3341, 1
      %vm3356 = vcmp.eq.s32.totalorder %v3344, 1
      %v3357 = vsel %vm3345, %v3285, 0.0
      %v3358 = vsel %vm3346, %v3286, 0.0
      %v3359 = vsel %vm3347, %v3287, 0.0
      %v3360 = vsel %vm3348, %v3288, 0.0
      %v3361 = vsel %vm3349, %v3289, 0.0
      %v3362 = vsel %vm3350, %v3290, 0.0
      %v3363 = vsel %vm3351, %v3291, 0.0
      %v3364 = vsel %vm3352, %v3292, 0.0
      %v3365 = vsel %vm3353, %v3293, 0.0
      %v3366 = vsel %vm3354, %v3294, 0.0
      %v3367 = vsel %vm3355, %v3295, 0.0
      %v3368 = vsel %vm3356, %v3296, 0.0
      %3369 = vst.msk [vmem:[#allocation4] sm:$0xff] %vm1323, %v3357
      %3370 = vst.msk [vmem:[#allocation4 + $0x8] sm:$0xff] %vm1323, %v3358
      %3371 = vst.msk [vmem:[#allocation4 + $0x10] sm:$0xff] %vm1323, %v3359
      %3372 = vst.msk [vmem:[#allocation4 + $0x18] sm:$0xff] %vm1323, %v3360
      %3373 = vst.msk [vmem:[#allocation4 + $0x20] sm:$0xff] %vm1323, %v3361
      %3374 = vst.msk [vmem:[#allocation4 + $0x28] sm:$0xff] %vm1323, %v3362
      %3375 = vst.msk [vmem:[#allocation4 + $0x30] sm:$0xff] %vm1323, %v3363
      %3376 = vst.msk [vmem:[#allocation4 + $0x38] sm:$0xff] %vm1323, %v3364
      %3377 = vst.msk [vmem:[#allocation4 + $0x40] sm:$0xff] %vm1323, %v3365
      %3378 = vst.msk [vmem:[#allocation4 + $0x48] sm:$0xff] %vm1323, %v3366
      %3379 = vst.msk [vmem:[#allocation4 + $0x50] sm:$0xff] %vm1323, %v3367
      %3380 = vst.msk [vmem:[#allocation4 + $0x58] sm:$0xff] %vm1323, %v3368
      %v3381 = vld [vmem:[#allocation4] sm:$0xff]
      %v3382 = vld [vmem:[#allocation4 + $0x8] sm:$0xff]
      %v3383 = vld [vmem:[#allocation4 + $0x10] sm:$0xff]
      %v3384 = vld [vmem:[#allocation4 + $0x18] sm:$0xff]
      %v3385 = vld [vmem:[#allocation4 + $0x20] sm:$0xff]
      %v3386 = vld [vmem:[#allocation4 + $0x28] sm:$0xff]
      %v3387 = vld [vmem:[#allocation4 + $0x30] sm:$0xff]
      %v3388 = vld [vmem:[#allocation4 + $0x38] sm:$0xff]
      %v3389 = vld [vmem:[#allocation4 + $0x40] sm:$0xff]
      %v3390 = vld [vmem:[#allocation4 + $0x48] sm:$0xff]
      %v3391 = vld [vmem:[#allocation4 + $0x50] sm:$0xff]
      %v3392 = vld [vmem:[#allocation4 + $0x58] sm:$0xff]
      %v3393 = vld [vmem:[%s8] sm:$0xff]
      %v3394 = vld [vmem:[%s8 + $0x8] sm:$0xff]
      %v3395 = vld [vmem:[%s8 + $0x10] sm:$0xff]
      %v3396 = vld [vmem:[%s8 + $0x18] sm:$0xff]
      %v3397 = vld [vmem:[%s8 + $0x20] sm:$0xff]
      %v3398 = vld [vmem:[%s8 + $0x28] sm:$0xff]
      %v3399 = vld [vmem:[%s8 + $0x30] sm:$0xff]
      %v3400 = vld [vmem:[%s8 + $0x38] sm:$0xff]
      %v3401 = vld [vmem:[%s8 + $0x40] sm:$0xff]
      %v3402 = vld [vmem:[#allocation4 + $0x1] sm:$0xff]
      %v3403 = vld [vmem:[#allocation4 + $0x9] sm:$0xff]
      %v3404 = vld [vmem:[#allocation4 + $0x11] sm:$0xff]
      %v3405 = vld [vmem:[#allocation4 + $0x19] sm:$0xff]
      %v3406 = vld [vmem:[#allocation4 + $0x21] sm:$0xff]
      %v3407 = vld [vmem:[#allocation4 + $0x29] sm:$0xff]
      %v3408 = vld [vmem:[#allocation4 + $0x31] sm:$0xff]
      %v3409 = vld [vmem:[#allocation4 + $0x39] sm:$0xff]
      %v3410 = vld [vmem:[#allocation4 + $0x41] sm:$0xff]
      %v3411 = vld [vmem:[#allocation4 + $0x49] sm:$0xff]
      %v3412 = vld [vmem:[#allocation4 + $0x51] sm:$0xff]
      %v3413 = vld [vmem:[#allocation4 + $0x59] sm:$0xff]
      %s3414 = scalar_lea.vmem %s8, 72
      %v3415 = vld [vmem:[%s3414] sm:$0xff]
      %v3416 = vld [vmem:[%s3414 + $0x8] sm:$0xff]
      %v3417 = vld [vmem:[%s3414 + $0x10] sm:$0xff]
      %v3418 = vld [vmem:[%s3414 + $0x18] sm:$0xff]
      %v3419 = vld [vmem:[%s3414 + $0x20] sm:$0xff]
      %v3420 = vld [vmem:[%s3414 + $0x28] sm:$0xff]
      %v3421 = vld [vmem:[%s3414 + $0x30] sm:$0xff]
      %v3422 = vld [vmem:[%s3414 + $0x38] sm:$0xff]
      %v3423 = vld [vmem:[%s3414 + $0x40] sm:$0xff]
      %v3425 = vsel %vm1323, %v3402, 0
      %v3428 = vsel %vm1323, %v3403, 0
      %v3431 = vsel %vm1323, %v3404, 0
      %v3434 = vsel %vm1323, %v3405, 0
      %v3437 = vsel %vm1323, %v3406, 0
      %v3440 = vsel %vm1323, %v3407, 0
      %v3443 = vsel %vm1323, %v3408, 0
      %v3446 = vsel %vm1323, %v3409, 0
      %v3449 = vsel %vm1323, %v3410, 0
      %v3452 = vsel %vm1323, %v3411, 0
      %v3455 = vsel %vm1323, %v3412, 0
      %v3458 = vsel %vm1323, %v3413, 0
      %3460 = vmatprep.subr.mxu0 0.0
      %3461 = vmatpush1.msra.mxu0 %v3415
      %3462 = vmatprep.subr.mxu0 0.0
      %3463 = vmatpush1.msra.mxu0 %v3416
      %3464 = vmatprep.subr.mxu0 0.0
      %3465 = vmatpush1.msra.mxu0 %v3417
      %3466 = vmatprep.subr.mxu0 0.0
      %3467 = vmatpush1.msra.mxu0 %v3418
      %3468 = vmatprep.subr.mxu0 0.0
      %3469 = vmatpush1.msra.mxu0 %v3419
      %3470 = vmatprep.subr.mxu0 0.0
      %3471 = vmatpush1.msra.mxu0 %v3420
      %3472 = vmatprep.subr.mxu0 0.0
      %3473 = vmatpush1.msra.mxu0 %v3421
      %3474 = vmatprep.subr.mxu0 0.0
      %3475 = vmatpush1.msra.mxu0 %v3422
      %3476 = vmatprep.subr.mxu0 0.0
      %3477 = vmatpush1.msra.mxu0 %v3423
      %3478 = vmatprep.subr.mxu0 0.0
      %3479 = vmatpush1.msra.mxu0 0.0
      %3480 = vmatprep.subr.mxu0 0.0
      %3481 = vmatpush1.msra.mxu0 0.0
      %3482 = vmatprep.subr.mxu0 0.0
      %3483 = vmatpush1.msra.mxu0 0.0
      %3484 = vmatprep.subr.mxu0 0.0
      %3485 = vmatpush1.msra.mxu0 0.0
      %3486 = vmatprep.subr.mxu0 0.0
      %3487 = vmatpush1.msra.mxu0 0.0
      %3488 = vmatprep.subr.mxu0 0.0
      %3489 = vmatpush1.msra.mxu0 0.0
      %3490 = vmatprep.subr.mxu0 0.0
      %3491 = vmatpush1.msra.mxu0 0.0
      %3492 = vmatprep.subr.mxu0 0.0
      %3493 = vmatpush1.msra.mxu0 0.0
      %3494 = vmatprep.subr.mxu0 0.0
      %3495 = vmatpush1.msra.mxu0 0.0
      %3496 = vmatprep.subr.mxu0 0.0
      %3497 = vmatpush1.msra.mxu0 0.0
      %3498 = vmatprep.subr.mxu0 0.0
      %3499 = vmatpush1.msra.mxu0 0.0
      %3500 = vmatprep.subr.mxu0 0.0
      %3501 = vmatpush1.msra.mxu0 0.0
      %3502 = vmatprep.subr.mxu0 0.0
      %3503 = vmatpush1.msra.mxu0 0.0
      %3504 = vmatprep.subr.mxu0 0.0
      %3505 = vmatpush1.msra.mxu0 0.0
      %3506 = vmatprep.subr.mxu0 0.0
      %3507 = vmatpush1.msra.mxu0 0.0
      %3508 = vmatprep.subr.mxu0 0.0
      %3509 = vmatpush1.msra.mxu0 0.0
      %3510 = vmatprep.subr.mxu0 0.0
      %3511 = vmatpush1.msra.mxu0 0.0
      %3512 = vmatprep.subr.mxu0 0.0
      %3513 = vmatpush1.msra.mxu0 0.0
      %3514 = vmatprep.subr.mxu0 0.0
      %3515 = vmatpush1.msra.mxu0 0.0
      %3516 = vmatprep.subr.mxu0 0.0
      %3517 = vmatpush1.msra.mxu0 0.0
      %3518 = vmatprep.subr.mxu0 0.0
      %3519 = vmatpush1.msra.mxu0 0.0
      %3520 = vmatprep.subr.mxu0 0.0
      %3521 = vmatpush1.msra.mxu0 0.0
      %3522 = vmatprep.subr.mxu0 0.0
      %3523 = vmatpush1.msra.mxu0 0.0
      %3524 = vmatprep.mubr.f32.mxu0 0.0
      %3525 = vmatmul.mubr.f32.gmra.mrb[0].mxu0 %v3425
      %v3526 = vpop.f32.mrb[0].mxu0
      %v3527 = vadd.f32 0.0, %v3526
      %v3528 = vpop.f32.mrb[0].mxu0
      %3529 = vmatprep.mubr.f32.mxu0 0.0
      %3530 = vmatmul.mubr.f32.gmra.mrb[0].mxu0 %v3428
      %v3531 = vpop.f32.mrb[0].mxu0
      %v3532 = vadd.f32 0.0, %v3531
      %v3533 = vpop.f32.mrb[0].mxu0
      %3534 = vmatprep.mubr.f32.mxu0 0.0
      %3535 = vmatmul.mubr.f32.gmra.mrb[0].mxu0 %v3431
      %v3536 = vpop.f32.mrb[0].mxu0
      %v3537 = vadd.f32 0.0, %v3536
      %v3538 = vpop.f32.mrb[0].mxu0
      %3539 = vmatprep.mubr.f32.mxu0 0.0
      %3540 = vmatmul.mubr.f32.gmra.mrb[0].mxu0 %v3434
      %v3541 = vpop.f32.mrb[0].mxu0
      %v3542 = vadd.f32 0.0, %v3541
      %v3543 = vpop.f32.mrb[0].mxu0
      %3544 = vmatprep.mubr.f32.mxu0 0.0
      %3545 = vmatmul.mubr.f32.gmra.mrb[0].mxu0 %v3437
      %v3546 = vpop.f32.mrb[0].mxu0
      %v3547 = vadd.f32 0.0, %v3546
      %v3548 = vpop.f32.mrb[0].mxu0
      %3549 = vmatprep.mubr.f32.mxu0 0.0
      %3550 = vmatmul.mubr.f32.gmra.mrb[0].mxu0 %v3440
      %v3551 = vpop.f32.mrb[0].mxu0
      %v3552 = vadd.f32 0.0, %v3551
      %v3553 = vpop.f32.mrb[0].mxu0
      %3554 = vmatprep.mubr.f32.mxu0 0.0
      %3555 = vmatmul.mubr.f32.gmra.mrb[0].mxu0 %v3443
      %v3556 = vpop.f32.mrb[0].mxu0
      %v3557 = vadd.f32 0.0, %v3556
      %v3558 = vpop.f32.mrb[0].mxu0
      %3559 = vmatprep.mubr.f32.mxu0 0.0
      %3560 = vmatmul.mubr.f32.gmra.mrb[0].mxu0 %v3446
      %v3561 = vpop.f32.mrb[0].mxu0
      %v3562 = vadd.f32 0.0, %v3561
      %v3563 = vpop.f32.mrb[0].mxu0
      %3564 = vmatprep.mubr.f32.mxu0 0.0
      %3565 = vmatmul.mubr.f32.gmra.mrb[0].mxu0 %v3449
      %v3566 = vpop.f32.mrb[0].mxu0
      %v3567 = vadd.f32 0.0, %v3566
      %v3568 = vpop.f32.mrb[0].mxu0
      %3569 = vmatprep.mubr.f32.mxu0 0.0
      %3570 = vmatmul.mubr.f32.gmra.mrb[0].mxu0 %v3452
      %v3571 = vpop.f32.mrb[0].mxu0
      %v3572 = vadd.f32 0.0, %v3571
      %v3573 = vpop.f32.mrb[0].mxu0
      %3574 = vmatprep.mubr.f32.mxu0 0.0
      %3575 = vmatmul.mubr.f32.gmra.mrb[0].mxu0 %v3455
      %v3576 = vpop.f32.mrb[0].mxu0
      %v3577 = vadd.f32 0.0, %v3576
      %v3578 = vpop.f32.mrb[0].mxu0
      %3579 = vmatprep.mubr.f32.mxu0 0.0
      %3580 = vmatmul.mubr.f32.gmra.mrb[0].mxu0 %v3458
      %v3581 = vpop.f32.mrb[0].mxu0
      %v3582 = vadd.f32 0.0, %v3581
      %v3583 = vpop.f32.mrb[0].mxu0
      %3584 = vdwg.mxu0
      %v3586 = vsel %vm1323, %v3381, 0
      %v3589 = vsel %vm1323, %v3382, 0
      %v3592 = vsel %vm1323, %v3383, 0
      %v3595 = vsel %vm1323, %v3384, 0
      %v3598 = vsel %vm1323, %v3385, 0
      %v3601 = vsel %vm1323, %v3386, 0
      %v3604 = vsel %vm1323, %v3387, 0
      %v3607 = vsel %vm1323, %v3388, 0
      %v3610 = vsel %vm1323, %v3389, 0
      %v3613 = vsel %vm1323, %v3390, 0
      %v3616 = vsel %vm1323, %v3391, 0
      %v3619 = vsel %vm1323, %v3392, 0
      %3621 = vmatprep.subr.mxu0 0.0
      %3622 = vmatpush1.msra.mxu0 %v3393
      %3623 = vmatprep.subr.mxu0 0.0
      %3624 = vmatpush1.msra.mxu0 %v3394
      %3625 = vmatprep.subr.mxu0 0.0
      %3626 = vmatpush1.msra.mxu0 %v3395
      %3627 = vmatprep.subr.mxu0 0.0
      %3628 = vmatpush1.msra.mxu0 %v3396
      %3629 = vmatprep.subr.mxu0 0.0
      %3630 = vmatpush1.msra.mxu0 %v3397
      %3631 = vmatprep.subr.mxu0 0.0
      %3632 = vmatpush1.msra.mxu0 %v3398
      %3633 = vmatprep.subr.mxu0 0.0
      %3634 = vmatpush1.msra.mxu0 %v3399
      %3635 = vmatprep.subr.mxu0 0.0
      %3636 = vmatpush1.msra.mxu0 %v3400
      %3637 = vmatprep.subr.mxu0 0.0
      %3638 = vmatpush1.msra.mxu0 %v3401
      %3639 = vmatprep.subr.mxu0 0.0
      %3640 = vmatpush1.msra.mxu0 0.0
      %3641 = vmatprep.subr.mxu0 0.0
      %3642 = vmatpush1.msra.mxu0 0.0
      %3643 = vmatprep.subr.mxu0 0.0
      %3644 = vmatpush1.msra.mxu0 0.0
      %3645 = vmatprep.subr.mxu0 0.0
      %3646 = vmatpush1.msra.mxu0 0.0
      %3647 = vmatprep.subr.mxu0 0.0
      %3648 = vmatpush1.msra.mxu0 0.0
      %3649 = vmatprep.subr.mxu0 0.0
      %3650 = vmatpush1.msra.mxu0 0.0
      %3651 = vmatprep.subr.mxu0 0.0
      %3652 = vmatpush1.msra.mxu0 0.0
      %3653 = vmatprep.subr.mxu0 0.0
      %3654 = vmatpush1.msra.mxu0 0.0
      %3655 = vmatprep.subr.mxu0 0.0
      %3656 = vmatpush1.msra.mxu0 0.0
      %3657 = vmatprep.subr.mxu0 0.0
      %3658 = vmatpush1.msra.mxu0 0.0
      %3659 = vmatprep.subr.mxu0 0.0
      %3660 = vmatpush1.msra.mxu0 0.0
      %3661 = vmatprep.subr.mxu0 0.0
      %3662 = vmatpush1.msra.mxu0 0.0
      %3663 = vmatprep.subr.mxu0 0.0
      %3664 = vmatpush1.msra.mxu0 0.0
      %3665 = vmatprep.subr.mxu0 0.0
      %3666 = vmatpush1.msra.mxu0 0.0
      %3667 = vmatprep.subr.mxu0 0.0
      %3668 = vmatpush1.msra.mxu0 0.0
      %3669 = vmatprep.subr.mxu0 0.0
      %3670 = vmatpush1.msra.mxu0 0.0
      %3671 = vmatprep.subr.mxu0 0.0
      %3672 = vmatpush1.msra.mxu0 0.0
      %3673 = vmatprep.subr.mxu0 0.0
      %3674 = vmatpush1.msra.mxu0 0.0
      %3675 = vmatprep.subr.mxu0 0.0
      %3676 = vmatpush1.msra.mxu0 0.0
      %3677 = vmatprep.subr.mxu0 0.0
      %3678 = vmatpush1.msra.mxu0 0.0
      %3679 = vmatprep.subr.mxu0 0.0
      %3680 = vmatpush1.msra.mxu0 0.0
      %3681 = vmatprep.subr.mxu0 0.0
      %3682 = vmatpush1.msra.mxu0 0.0
      %3683 = vmatprep.subr.mxu0 0.0
      %3684 = vmatpush1.msra.mxu0 0.0
      %3685 = vmatprep.mubr.f32.mxu0 0.0
      %3686 = vmatmul.mubr.f32.gmra.mrb[0].mxu0 %v3586
      %v3687 = vpop.f32.mrb[0].mxu0
      %v3688 = vadd.f32 %v3527, %v3687
      %v3689 = vpop.f32.mrb[0].mxu0
      %3690 = vmatprep.mubr.f32.mxu0 0.0
      %3691 = vmatmul.mubr.f32.gmra.mrb[0].mxu0 %v3589
      %v3692 = vpop.f32.mrb[0].mxu0
      %v3693 = vadd.f32 %v3532, %v3692
      %v3694 = vpop.f32.mrb[0].mxu0
      %3695 = vmatprep.mubr.f32.mxu0 0.0
      %3696 = vmatmul.mubr.f32.gmra.mrb[0].mxu0 %v3592
      %v3697 = vpop.f32.mrb[0].mxu0
      %v3698 = vadd.f32 %v3537, %v3697
      %v3699 = vpop.f32.mrb[0].mxu0
      %3700 = vmatprep.mubr.f32.mxu0 0.0
      %3701 = vmatmul.mubr.f32.gmra.mrb[0].mxu0 %v3595
      %v3702 = vpop.f32.mrb[0].mxu0
      %v3703 = vadd.f32 %v3542, %v3702
      %v3704 = vpop.f32.mrb[0].mxu0
      %3705 = vmatprep.mubr.f32.mxu0 0.0
      %3706 = vmatmul.mubr.f32.gmra.mrb[0].mxu0 %v3598
      %v3707 = vpop.f32.mrb[0].mxu0
      %v3708 = vadd.f32 %v3547, %v3707
      %v3709 = vpop.f32.mrb[0].mxu0
      %3710 = vmatprep.mubr.f32.mxu0 0.0
      %3711 = vmatmul.mubr.f32.gmra.mrb[0].mxu0 %v3601
      %v3712 = vpop.f32.mrb[0].mxu0
      %v3713 = vadd.f32 %v3552, %v3712
      %v3714 = vpop.f32.mrb[0].mxu0
      %3715 = vmatprep.mubr.f32.mxu0 0.0
      %3716 = vmatmul.mubr.f32.gmra.mrb[0].mxu0 %v3604
      %v3717 = vpop.f32.mrb[0].mxu0
      %v3718 = vadd.f32 %v3557, %v3717
      %v3719 = vpop.f32.mrb[0].mxu0
      %3720 = vmatprep.mubr.f32.mxu0 0.0
      %3721 = vmatmul.mubr.f32.gmra.mrb[0].mxu0 %v3607
      %v3722 = vpop.f32.mrb[0].mxu0
      %v3723 = vadd.f32 %v3562, %v3722
      %v3724 = vpop.f32.mrb[0].mxu0
      %3725 = vmatprep.mubr.f32.mxu0 0.0
      %3726 = vmatmul.mubr.f32.gmra.mrb[0].mxu0 %v3610
      %v3727 = vpop.f32.mrb[0].mxu0
      %v3728 = vadd.f32 %v3567, %v3727
      %v3729 = vpop.f32.mrb[0].mxu0
      %3730 = vmatprep.mubr.f32.mxu0 0.0
      %3731 = vmatmul.mubr.f32.gmra.mrb[0].mxu0 %v3613
      %v3732 = vpop.f32.mrb[0].mxu0
      %v3733 = vadd.f32 %v3572, %v3732
      %v3734 = vpop.f32.mrb[0].mxu0
      %3735 = vmatprep.mubr.f32.mxu0 0.0
      %3736 = vmatmul.mubr.f32.gmra.mrb[0].mxu0 %v3616
      %v3737 = vpop.f32.mrb[0].mxu0
      %v3738 = vadd.f32 %v3577, %v3737
      %v3739 = vpop.f32.mrb[0].mxu0
      %3740 = vmatprep.mubr.f32.mxu0 0.0
      %3741 = vmatmul.mubr.f32.gmra.mrb[0].mxu0 %v3619
      %v3742 = vpop.f32.mrb[0].mxu0
      %v3743 = vadd.f32 %v3582, %v3742
      %v3744 = vpop.f32.mrb[0].mxu0
      %3745 = vdwg.mxu0
      %v3746 = vld [vmem:[#allocation4 + $0x2] sm:$0xff]
      %v3747 = vld [vmem:[#allocation4 + $0xa] sm:$0xff]
      %v3748 = vld [vmem:[#allocation4 + $0x12] sm:$0xff]
      %v3749 = vld [vmem:[#allocation4 + $0x1a] sm:$0xff]
      %v3750 = vld [vmem:[#allocation4 + $0x22] sm:$0xff]
      %v3751 = vld [vmem:[#allocation4 + $0x2a] sm:$0xff]
      %v3752 = vld [vmem:[#allocation4 + $0x32] sm:$0xff]
      %v3753 = vld [vmem:[#allocation4 + $0x3a] sm:$0xff]
      %v3754 = vld [vmem:[#allocation4 + $0x42] sm:$0xff]
      %v3755 = vld [vmem:[#allocation4 + $0x4a] sm:$0xff]
      %v3756 = vld [vmem:[#allocation4 + $0x52] sm:$0xff]
      %v3757 = vld [vmem:[#allocation4 + $0x5a] sm:$0xff]
      %s3758 = scalar_lea.vmem %s8, 144
      %v3759 = vld [vmem:[%s3758] sm:$0xff]
      %v3760 = vld [vmem:[%s3758 + $0x8] sm:$0xff]
      %v3761 = vld [vmem:[%s3758 + $0x10] sm:$0xff]
      %v3762 = vld [vmem:[%s3758 + $0x18] sm:$0xff]
      %v3763 = vld [vmem:[%s3758 + $0x20] sm:$0xff]
      %v3764 = vld [vmem:[%s3758 + $0x28] sm:$0xff]
      %v3765 = vld [vmem:[%s3758 + $0x30] sm:$0xff]
      %v3766 = vld [vmem:[%s3758 + $0x38] sm:$0xff]
      %v3767 = vld [vmem:[%s3758 + $0x40] sm:$0xff]
      %v3769 = vsel %vm1323, %v3746, 0
      %v3772 = vsel %vm1323, %v3747, 0
      %v3775 = vsel %vm1323, %v3748, 0
      %v3778 = vsel %vm1323, %v3749, 0
      %v3781 = vsel %vm1323, %v3750, 0
      %v3784 = vsel %vm1323, %v3751, 0
      %v3787 = vsel %vm1323, %v3752, 0
      %v3790 = vsel %vm1323, %v3753, 0
      %v3793 = vsel %vm1323, %v3754, 0
      %v3796 = vsel %vm1323, %v3755, 0
      %v3799 = vsel %vm1323, %v3756, 0
      %v3802 = vsel %vm1323, %v3757, 0
      %3804 = vmatprep.subr.mxu0 0.0
      %3805 = vmatpush1.msra.mxu0 %v3759
      %3806 = vmatprep.subr.mxu0 0.0
      %3807 = vmatpush1.msra.mxu0 %v3760
      %3808 = vmatprep.subr.mxu0 0.0
      %3809 = vmatpush1.msra.mxu0 %v3761
      %3810 = vmatprep.subr.mxu0 0.0
      %3811 = vmatpush1.msra.mxu0 %v3762
      %3812 = vmatprep.subr.mxu0 0.0
      %3813 = vmatpush1.msra.mxu0 %v3763
      %3814 = vmatprep.subr.mxu0 0.0
      %3815 = vmatpush1.msra.mxu0 %v3764
      %3816 = vmatprep.subr.mxu0 0.0
      %3817 = vmatpush1.msra.mxu0 %v3765
      %3818 = vmatprep.subr.mxu0 0.0
      %3819 = vmatpush1.msra.mxu0 %v3766
      %3820 = vmatprep.subr.mxu0 0.0
      %3821 = vmatpush1.msra.mxu0 %v3767
      %3822 = vmatprep.subr.mxu0 0.0
      %3823 = vmatpush1.msra.mxu0 0.0
      %3824 = vmatprep.subr.mxu0 0.0
      %3825 = vmatpush1.msra.mxu0 0.0
      %3826 = vmatprep.subr.mxu0 0.0
      %3827 = vmatpush1.msra.mxu0 0.0
      %3828 = vmatprep.subr.mxu0 0.0
      %3829 = vmatpush1.msra.mxu0 0.0
      %3830 = vmatprep.subr.mxu0 0.0
      %3831 = vmatpush1.msra.mxu0 0.0
      %3832 = vmatprep.subr.mxu0 0.0
      %3833 = vmatpush1.msra.mxu0 0.0
      %3834 = vmatprep.subr.mxu0 0.0
      %3835 = vmatpush1.msra.mxu0 0.0
      %3836 = vmatprep.subr.mxu0 0.0
      %3837 = vmatpush1.msra.mxu0 0.0
      %3838 = vmatprep.subr.mxu0 0.0
      %3839 = vmatpush1.msra.mxu0 0.0
      %3840 = vmatprep.subr.mxu0 0.0
      %3841 = vmatpush1.msra.mxu0 0.0
      %3842 = vmatprep.subr.mxu0 0.0
      %3843 = vmatpush1.msra.mxu0 0.0
      %3844 = vmatprep.subr.mxu0 0.0
      %3845 = vmatpush1.msra.mxu0 0.0
      %3846 = vmatprep.subr.mxu0 0.0
      %3847 = vmatpush1.msra.mxu0 0.0
      %3848 = vmatprep.subr.mxu0 0.0
      %3849 = vmatpush1.msra.mxu0 0.0
      %3850 = vmatprep.subr.mxu0 0.0
      %3851 = vmatpush1.msra.mxu0 0.0
      %3852 = vmatprep.subr.mxu0 0.0
      %3853 = vmatpush1.msra.mxu0 0.0
      %3854 = vmatprep.subr.mxu0 0.0
      %3855 = vmatpush1.msra.mxu0 0.0
      %3856 = vmatprep.subr.mxu0 0.0
      %3857 = vmatpush1.msra.mxu0 0.0
      %3858 = vmatprep.subr.mxu0 0.0
      %3859 = vmatpush1.msra.mxu0 0.0
      %3860 = vmatprep.subr.mxu0 0.0
      %3861 = vmatpush1.msra.mxu0 0.0
      %3862 = vmatprep.subr.mxu0 0.0
      %3863 = vmatpush1.msra.mxu0 0.0
      %3864 = vmatprep.subr.mxu0 0.0
      %3865 = vmatpush1.msra.mxu0 0.0
      %3866 = vmatprep.subr.mxu0 0.0
      %3867 = vmatpush1.msra.mxu0 0.0
      %3868 = vmatprep.mubr.f32.mxu0 0.0
      %3869 = vmatmul.mubr.f32.gmra.mrb[0].mxu0 %v3769
      %v3870 = vpop.f32.mrb[0].mxu0
      %v3871 = vadd.f32 0.0, %v3870
      %v3872 = vpop.f32.mrb[0].mxu0
      %3873 = vmatprep.mubr.f32.mxu0 0.0
      %3874 = vmatmul.mubr.f32.gmra.mrb[0].mxu0 %v3772
      %v3875 = vpop.f32.mrb[0].mxu0
      %v3876 = vadd.f32 0.0, %v3875
      %v3877 = vpop.f32.mrb[0].mxu0
      %3878 = vmatprep.mubr.f32.mxu0 0.0
      %3879 = vmatmul.mubr.f32.gmra.mrb[0].mxu0 %v3775
      %v3880 = vpop.f32.mrb[0].mxu0
      %v3881 = vadd.f32 0.0, %v3880
      %v3882 = vpop.f32.mrb[0].mxu0
      %3883 = vmatprep.mubr.f32.mxu0 0.0
      %3884 = vmatmul.mubr.f32.gmra.mrb[0].mxu0 %v3778
      %v3885 = vpop.f32.mrb[0].mxu0
      %v3886 = vadd.f32 0.0, %v3885
      %v3887 = vpop.f32.mrb[0].mxu0
      %3888 = vmatprep.mubr.f32.mxu0 0.0
      %3889 = vmatmul.mubr.f32.gmra.mrb[0].mxu0 %v3781
      %v3890 = vpop.f32.mrb[0].mxu0
      %v3891 = vadd.f32 0.0, %v3890
      %v3892 = vpop.f32.mrb[0].mxu0
      %3893 = vmatprep.mubr.f32.mxu0 0.0
      %3894 = vmatmul.mubr.f32.gmra.mrb[0].mxu0 %v3784
      %v3895 = vpop.f32.mrb[0].mxu0
      %v3896 = vadd.f32 0.0, %v3895
      %v3897 = vpop.f32.mrb[0].mxu0
      %3898 = vmatprep.mubr.f32.mxu0 0.0
      %3899 = vmatmul.mubr.f32.gmra.mrb[0].mxu0 %v3787
      %v3900 = vpop.f32.mrb[0].mxu0
      %v3901 = vadd.f32 0.0, %v3900
      %v3902 = vpop.f32.mrb[0].mxu0
      %3903 = vmatprep.mubr.f32.mxu0 0.0
      %3904 = vmatmul.mubr.f32.gmra.mrb[0].mxu0 %v3790
      %v3905 = vpop.f32.mrb[0].mxu0
      %v3906 = vadd.f32 0.0, %v3905
      %v3907 = vpop.f32.mrb[0].mxu0
      %3908 = vmatprep.mubr.f32.mxu0 0.0
      %3909 = vmatmul.mubr.f32.gmra.mrb[0].mxu0 %v3793
      %v3910 = vpop.f32.mrb[0].mxu0
      %v3911 = vadd.f32 0.0, %v3910
      %v3912 = vpop.f32.mrb[0].mxu0
      %3913 = vmatprep.mubr.f32.mxu0 0.0
      %3914 = vmatmul.mubr.f32.gmra.mrb[0].mxu0 %v3796
      %v3915 = vpop.f32.mrb[0].mxu0
      %v3916 = vadd.f32 0.0, %v3915
      %v3917 = vpop.f32.mrb[0].mxu0
      %3918 = vmatprep.mubr.f32.mxu0 0.0
      %3919 = vmatmul.mubr.f32.gmra.mrb[0].mxu0 %v3799
      %v3920 = vpop.f32.mrb[0].mxu0
      %v3921 = vadd.f32 0.0, %v3920
      %v3922 = vpop.f32.mrb[0].mxu0
      %3923 = vmatprep.mubr.f32.mxu0 0.0
      %3924 = vmatmul.mubr.f32.gmra.mrb[0].mxu0 %v3802
      %v3925 = vpop.f32.mrb[0].mxu0
      %v3926 = vadd.f32 0.0, %v3925
      %v3927 = vpop.f32.mrb[0].mxu0
      %3928 = vdwg.mxu0
      %v3929 = vadd.f32 %v3688, %v3871
      %v3930 = vadd.f32 %v3693, %v3876
      %v3931 = vadd.f32 %v3698, %v3881
      %v3932 = vadd.f32 %v3703, %v3886
      %v3933 = vadd.f32 %v3708, %v3891
      %v3934 = vadd.f32 %v3713, %v3896
      %v3935 = vadd.f32 %v3718, %v3901
      %v3936 = vadd.f32 %v3723, %v3906
      %v3937 = vadd.f32 %v3728, %v3911
      %v3938 = vadd.f32 %v3733, %v3916
      %v3939 = vadd.f32 %v3738, %v3921
      %v3940 = vadd.f32 %v3743, %v3926
      %v3941 = vld [vmem:[#allocation4 + $0x3] sm:$0xff]
      %v3942 = vld [vmem:[#allocation4 + $0xb] sm:$0xff]
      %v3943 = vld [vmem:[#allocation4 + $0x13] sm:$0xff]
      %v3944 = vld [vmem:[#allocation4 + $0x1b] sm:$0xff]
      %v3945 = vld [vmem:[#allocation4 + $0x23] sm:$0xff]
      %v3946 = vld [vmem:[#allocation4 + $0x2b] sm:$0xff]
      %v3947 = vld [vmem:[#allocation4 + $0x33] sm:$0xff]
      %v3948 = vld [vmem:[#allocation4 + $0x3b] sm:$0xff]
      %v3949 = vld [vmem:[#allocation4 + $0x43] sm:$0xff]
      %v3950 = vld [vmem:[#allocation4 + $0x4b] sm:$0xff]
      %v3951 = vld [vmem:[#allocation4 + $0x53] sm:$0xff]
      %v3952 = vld [vmem:[#allocation4 + $0x5b] sm:$0xff]
      %s3953 = scalar_lea.vmem %s8, 216
      %v3954 = vld [vmem:[%s3953] sm:$0xff]
      %v3955 = vld [vmem:[%s3953 + $0x8] sm:$0xff]
      %v3956 = vld [vmem:[%s3953 + $0x10] sm:$0xff]
      %v3957 = vld [vmem:[%s3953 + $0x18] sm:$0xff]
      %v3958 = vld [vmem:[%s3953 + $0x20] sm:$0xff]
      %v3959 = vld [vmem:[%s3953 + $0x28] sm:$0xff]
      %v3960 = vld [vmem:[%s3953 + $0x30] sm:$0xff]
      %v3961 = vld [vmem:[%s3953 + $0x38] sm:$0xff]
      %v3962 = vld [vmem:[%s3953 + $0x40] sm:$0xff]
      %v3964 = vsel %vm1323, %v3941, 0
      %v3967 = vsel %vm1323, %v3942, 0
      %v3970 = vsel %vm1323, %v3943, 0
      %v3973 = vsel %vm1323, %v3944, 0
      %v3976 = vsel %vm1323, %v3945, 0
      %v3979 = vsel %vm1323, %v3946, 0
      %v3982 = vsel %vm1323, %v3947, 0
      %v3985 = vsel %vm1323, %v3948, 0
      %v3988 = vsel %vm1323, %v3949, 0
      %v3991 = vsel %vm1323, %v3950, 0
      %v3994 = vsel %vm1323, %v3951, 0
      %v3997 = vsel %vm1323, %v3952, 0
      %3999 = vmatprep.subr.mxu0 0.0
      %4000 = vmatpush1.msra.mxu0 %v3954
      %4001 = vmatprep.subr.mxu0 0.0
      %4002 = vmatpush1.msra.mxu0 %v3955
      %4003 = vmatprep.subr.mxu0 0.0
      %4004 = vmatpush1.msra.mxu0 %v3956
      %4005 = vmatprep.subr.mxu0 0.0
      %4006 = vmatpush1.msra.mxu0 %v3957
      %4007 = vmatprep.subr.mxu0 0.0
      %4008 = vmatpush1.msra.mxu0 %v3958
      %4009 = vmatprep.subr.mxu0 0.0
      %4010 = vmatpush1.msra.mxu0 %v3959
      %4011 = vmatprep.subr.mxu0 0.0
      %4012 = vmatpush1.msra.mxu0 %v3960
      %4013 = vmatprep.subr.mxu0 0.0
      %4014 = vmatpush1.msra.mxu0 %v3961
      %4015 = vmatprep.subr.mxu0 0.0
      %4016 = vmatpush1.msra.mxu0 %v3962
      %4017 = vmatprep.subr.mxu0 0.0
      %4018 = vmatpush1.msra.mxu0 0.0
      %4019 = vmatprep.subr.mxu0 0.0
      %4020 = vmatpush1.msra.mxu0 0.0
      %4021 = vmatprep.subr.mxu0 0.0
      %4022 = vmatpush1.msra.mxu0 0.0
      %4023 = vmatprep.subr.mxu0 0.0
      %4024 = vmatpush1.msra.mxu0 0.0
      %4025 = vmatprep.subr.mxu0 0.0
      %4026 = vmatpush1.msra.mxu0 0.0
      %4027 = vmatprep.subr.mxu0 0.0
      %4028 = vmatpush1.msra.mxu0 0.0
      %4029 = vmatprep.subr.mxu0 0.0
      %4030 = vmatpush1.msra.mxu0 0.0
      %4031 = vmatprep.subr.mxu0 0.0
      %4032 = vmatpush1.msra.mxu0 0.0
      %4033 = vmatprep.subr.mxu0 0.0
      %4034 = vmatpush1.msra.mxu0 0.0
      %4035 = vmatprep.subr.mxu0 0.0
      %4036 = vmatpush1.msra.mxu0 0.0
      %4037 = vmatprep.subr.mxu0 0.0
      %4038 = vmatpush1.msra.mxu0 0.0
      %4039 = vmatprep.subr.mxu0 0.0
      %4040 = vmatpush1.msra.mxu0 0.0
      %4041 = vmatprep.subr.mxu0 0.0
      %4042 = vmatpush1.msra.mxu0 0.0
      %4043 = vmatprep.subr.mxu0 0.0
      %4044 = vmatpush1.msra.mxu0 0.0
      %4045 = vmatprep.subr.mxu0 0.0
      %4046 = vmatpush1.msra.mxu0 0.0
      %4047 = vmatprep.subr.mxu0 0.0
      %4048 = vmatpush1.msra.mxu0 0.0
      %4049 = vmatprep.subr.mxu0 0.0
      %4050 = vmatpush1.msra.mxu0 0.0
      %4051 = vmatprep.subr.mxu0 0.0
      %4052 = vmatpush1.msra.mxu0 0.0
      %4053 = vmatprep.subr.mxu0 0.0
      %4054 = vmatpush1.msra.mxu0 0.0
      %4055 = vmatprep.subr.mxu0 0.0
      %4056 = vmatpush1.msra.mxu0 0.0
      %4057 = vmatprep.subr.mxu0 0.0
      %4058 = vmatpush1.msra.mxu0 0.0
      %4059 = vmatprep.subr.mxu0 0.0
      %4060 = vmatpush1.msra.mxu0 0.0
      %4061 = vmatprep.subr.mxu0 0.0
      %4062 = vmatpush1.msra.mxu0 0.0
      %4063 = vmatprep.mubr.f32.mxu0 0.0
      %4064 = vmatmul.mubr.f32.gmra.mrb[0].mxu0 %v3964
      %v4065 = vpop.f32.mrb[0].mxu0
      %v4066 = vadd.f32 0.0, %v4065
      %v4067 = vpop.f32.mrb[0].mxu0
      %4068 = vmatprep.mubr.f32.mxu0 0.0
      %4069 = vmatmul.mubr.f32.gmra.mrb[0].mxu0 %v3967
      %v4070 = vpop.f32.mrb[0].mxu0
      %v4071 = vadd.f32 0.0, %v4070
      %v4072 = vpop.f32.mrb[0].mxu0
      %4073 = vmatprep.mubr.f32.mxu0 0.0
      %4074 = vmatmul.mubr.f32.gmra.mrb[0].mxu0 %v3970
      %v4075 = vpop.f32.mrb[0].mxu0
      %v4076 = vadd.f32 0.0, %v4075
      %v4077 = vpop.f32.mrb[0].mxu0
      %4078 = vmatprep.mubr.f32.mxu0 0.0
      %4079 = vmatmul.mubr.f32.gmra.mrb[0].mxu0 %v3973
      %v4080 = vpop.f32.mrb[0].mxu0
      %v4081 = vadd.f32 0.0, %v4080
      %v4082 = vpop.f32.mrb[0].mxu0
      %4083 = vmatprep.mubr.f32.mxu0 0.0
      %4084 = vmatmul.mubr.f32.gmra.mrb[0].mxu0 %v3976
      %v4085 = vpop.f32.mrb[0].mxu0
      %v4086 = vadd.f32 0.0, %v4085
      %v4087 = vpop.f32.mrb[0].mxu0
      %4088 = vmatprep.mubr.f32.mxu0 0.0
      %4089 = vmatmul.mubr.f32.gmra.mrb[0].mxu0 %v3979
      %v4090 = vpop.f32.mrb[0].mxu0
      %v4091 = vadd.f32 0.0, %v4090
      %v4092 = vpop.f32.mrb[0].mxu0
      %4093 = vmatprep.mubr.f32.mxu0 0.0
      %4094 = vmatmul.mubr.f32.gmra.mrb[0].mxu0 %v3982
      %v4095 = vpop.f32.mrb[0].mxu0
      %v4096 = vadd.f32 0.0, %v4095
      %v4097 = vpop.f32.mrb[0].mxu0
      %4098 = vmatprep.mubr.f32.mxu0 0.0
      %4099 = vmatmul.mubr.f32.gmra.mrb[0].mxu0 %v3985
      %v4100 = vpop.f32.mrb[0].mxu0
      %v4101 = vadd.f32 0.0, %v4100
      %v4102 = vpop.f32.mrb[0].mxu0
      %4103 = vmatprep.mubr.f32.mxu0 0.0
      %4104 = vmatmul.mubr.f32.gmra.mrb[0].mxu0 %v3988
      %v4105 = vpop.f32.mrb[0].mxu0
      %v4106 = vadd.f32 0.0, %v4105
      %v4107 = vpop.f32.mrb[0].mxu0
      %4108 = vmatprep.mubr.f32.mxu0 0.0
      %4109 = vmatmul.mubr.f32.gmra.mrb[0].mxu0 %v3991
      %v4110 = vpop.f32.mrb[0].mxu0
      %v4111 = vadd.f32 0.0, %v4110
      %v4112 = vpop.f32.mrb[0].mxu0
      %4113 = vmatprep.mubr.f32.mxu0 0.0
      %4114 = vmatmul.mubr.f32.gmra.mrb[0].mxu0 %v3994
      %v4115 = vpop.f32.mrb[0].mxu0
      %v4116 = vadd.f32 0.0, %v4115
      %v4117 = vpop.f32.mrb[0].mxu0
      %4118 = vmatprep.mubr.f32.mxu0 0.0
      %4119 = vmatmul.mubr.f32.gmra.mrb[0].mxu0 %v3997
      %v4120 = vpop.f32.mrb[0].mxu0
      %v4121 = vadd.f32 0.0, %v4120
      %v4122 = vpop.f32.mrb[0].mxu0
      %4123 = vdwg.mxu0
      %v4124 = vadd.f32 %v3929, %v4066
      %v4125 = vadd.f32 %v3930, %v4071
      %v4126 = vadd.f32 %v3931, %v4076
      %v4127 = vadd.f32 %v3932, %v4081
      %v4128 = vadd.f32 %v3933, %v4086
      %v4129 = vadd.f32 %v3934, %v4091
      %v4130 = vadd.f32 %v3935, %v4096
      %v4131 = vadd.f32 %v3936, %v4101
      %v4132 = vadd.f32 %v3937, %v4106
      %v4133 = vadd.f32 %v3938, %v4111
      %v4134 = vadd.f32 %v3939, %v4116
      %v4135 = vadd.f32 %v3940, %v4121
      %v4136 = vld [vmem:[#allocation4 + $0x4] sm:$0xff]
      %v4137 = vld [vmem:[#allocation4 + $0xc] sm:$0xff]
      %v4138 = vld [vmem:[#allocation4 + $0x14] sm:$0xff]
      %v4139 = vld [vmem:[#allocation4 + $0x1c] sm:$0xff]
      %v4140 = vld [vmem:[#allocation4 + $0x24] sm:$0xff]
      %v4141 = vld [vmem:[#allocation4 + $0x2c] sm:$0xff]
      %v4142 = vld [vmem:[#allocation4 + $0x34] sm:$0xff]
      %v4143 = vld [vmem:[#allocation4 + $0x3c] sm:$0xff]
      %v4144 = vld [vmem:[#allocation4 + $0x44] sm:$0xff]
      %v4145 = vld [vmem:[#allocation4 + $0x4c] sm:$0xff]
      %v4146 = vld [vmem:[#allocation4 + $0x54] sm:$0xff]
      %v4147 = vld [vmem:[#allocation4 + $0x5c] sm:$0xff]
      %s4148 = scalar_lea.vmem %s8, 288
      %v4149 = vld [vmem:[%s4148] sm:$0xff]
      %v4150 = vld [vmem:[%s4148 + $0x8] sm:$0xff]
      %v4151 = vld [vmem:[%s4148 + $0x10] sm:$0xff]
      %v4152 = vld [vmem:[%s4148 + $0x18] sm:$0xff]
      %v4153 = vld [vmem:[%s4148 + $0x20] sm:$0xff]
      %v4154 = vld [vmem:[%s4148 + $0x28] sm:$0xff]
      %v4155 = vld [vmem:[%s4148 + $0x30] sm:$0xff]
      %v4156 = vld [vmem:[%s4148 + $0x38] sm:$0xff]
      %v4157 = vld [vmem:[%s4148 + $0x40] sm:$0xff]
      %v4159 = vsel %vm1323, %v4136, 0
      %v4162 = vsel %vm1323, %v4137, 0
      %v4165 = vsel %vm1323, %v4138, 0
      %v4168 = vsel %vm1323, %v4139, 0
      %v4171 = vsel %vm1323, %v4140, 0
      %v4174 = vsel %vm1323, %v4141, 0
      %v4177 = vsel %vm1323, %v4142, 0
      %v4180 = vsel %vm1323, %v4143, 0
      %v4183 = vsel %vm1323, %v4144, 0
      %v4186 = vsel %vm1323, %v4145, 0
      %v4189 = vsel %vm1323, %v4146, 0
      %v4192 = vsel %vm1323, %v4147, 0
      %4194 = vmatprep.subr.mxu0 0.0
      %4195 = vmatpush1.msra.mxu0 %v4149
      %4196 = vmatprep.subr.mxu0 0.0
      %4197 = vmatpush1.msra.mxu0 %v4150
      %4198 = vmatprep.subr.mxu0 0.0
      %4199 = vmatpush1.msra.mxu0 %v4151
      %4200 = vmatprep.subr.mxu0 0.0
      %4201 = vmatpush1.msra.mxu0 %v4152
      %4202 = vmatprep.subr.mxu0 0.0
      %4203 = vmatpush1.msra.mxu0 %v4153
      %4204 = vmatprep.subr.mxu0 0.0
      %4205 = vmatpush1.msra.mxu0 %v4154
      %4206 = vmatprep.subr.mxu0 0.0
      %4207 = vmatpush1.msra.mxu0 %v4155
      %4208 = vmatprep.subr.mxu0 0.0
      %4209 = vmatpush1.msra.mxu0 %v4156
      %4210 = vmatprep.subr.mxu0 0.0
      %4211 = vmatpush1.msra.mxu0 %v4157
      %4212 = vmatprep.subr.mxu0 0.0
      %4213 = vmatpush1.msra.mxu0 0.0
      %4214 = vmatprep.subr.mxu0 0.0
      %4215 = vmatpush1.msra.mxu0 0.0
      %4216 = vmatprep.subr.mxu0 0.0
      %4217 = vmatpush1.msra.mxu0 0.0
      %4218 = vmatprep.subr.mxu0 0.0
      %4219 = vmatpush1.msra.mxu0 0.0
      %4220 = vmatprep.subr.mxu0 0.0
      %4221 = vmatpush1.msra.mxu0 0.0
      %4222 = vmatprep.subr.mxu0 0.0
      %4223 = vmatpush1.msra.mxu0 0.0
      %4224 = vmatprep.subr.mxu0 0.0
      %4225 = vmatpush1.msra.mxu0 0.0
      %4226 = vmatprep.subr.mxu0 0.0
      %4227 = vmatpush1.msra.mxu0 0.0
      %4228 = vmatprep.subr.mxu0 0.0
      %4229 = vmatpush1.msra.mxu0 0.0
      %4230 = vmatprep.subr.mxu0 0.0
      %4231 = vmatpush1.msra.mxu0 0.0
      %4232 = vmatprep.subr.mxu0 0.0
      %4233 = vmatpush1.msra.mxu0 0.0
      %4234 = vmatprep.subr.mxu0 0.0
      %4235 = vmatpush1.msra.mxu0 0.0
      %4236 = vmatprep.subr.mxu0 0.0
      %4237 = vmatpush1.msra.mxu0 0.0
      %4238 = vmatprep.subr.mxu0 0.0
      %4239 = vmatpush1.msra.mxu0 0.0
      %4240 = vmatprep.subr.mxu0 0.0
      %4241 = vmatpush1.msra.mxu0 0.0
      %4242 = vmatprep.subr.mxu0 0.0
      %4243 = vmatpush1.msra.mxu0 0.0
      %4244 = vmatprep.subr.mxu0 0.0
      %4245 = vmatpush1.msra.mxu0 0.0
      %4246 = vmatprep.subr.mxu0 0.0
      %4247 = vmatpush1.msra.mxu0 0.0
      %4248 = vmatprep.subr.mxu0 0.0
      %4249 = vmatpush1.msra.mxu0 0.0
      %4250 = vmatprep.subr.mxu0 0.0
      %4251 = vmatpush1.msra.mxu0 0.0
      %4252 = vmatprep.subr.mxu0 0.0
      %4253 = vmatpush1.msra.mxu0 0.0
      %4254 = vmatprep.subr.mxu0 0.0
      %4255 = vmatpush1.msra.mxu0 0.0
      %4256 = vmatprep.subr.mxu0 0.0
      %4257 = vmatpush1.msra.mxu0 0.0
      %4258 = vmatprep.mubr.f32.mxu0 0.0
      %4259 = vmatmul.mubr.f32.gmra.mrb[0].mxu0 %v4159
      %v4260 = vpop.f32.mrb[0].mxu0
      %v4261 = vadd.f32 0.0, %v4260
      %v4262 = vpop.f32.mrb[0].mxu0
      %4263 = vmatprep.mubr.f32.mxu0 0.0
      %4264 = vmatmul.mubr.f32.gmra.mrb[0].mxu0 %v4162
      %v4265 = vpop.f32.mrb[0].mxu0
      %v4266 = vadd.f32 0.0, %v4265
      %v4267 = vpop.f32.mrb[0].mxu0
      %4268 = vmatprep.mubr.f32.mxu0 0.0
      %4269 = vmatmul.mubr.f32.gmra.mrb[0].mxu0 %v4165
      %v4270 = vpop.f32.mrb[0].mxu0
      %v4271 = vadd.f32 0.0, %v4270
      %v4272 = vpop.f32.mrb[0].mxu0
      %4273 = vmatprep.mubr.f32.mxu0 0.0
      %4274 = vmatmul.mubr.f32.gmra.mrb[0].mxu0 %v4168
      %v4275 = vpop.f32.mrb[0].mxu0
      %v4276 = vadd.f32 0.0, %v4275
      %v4277 = vpop.f32.mrb[0].mxu0
      %4278 = vmatprep.mubr.f32.mxu0 0.0
      %4279 = vmatmul.mubr.f32.gmra.mrb[0].mxu0 %v4171
      %v4280 = vpop.f32.mrb[0].mxu0
      %v4281 = vadd.f32 0.0, %v4280
      %v4282 = vpop.f32.mrb[0].mxu0
      %4283 = vmatprep.mubr.f32.mxu0 0.0
      %4284 = vmatmul.mubr.f32.gmra.mrb[0].mxu0 %v4174
      %v4285 = vpop.f32.mrb[0].mxu0
      %v4286 = vadd.f32 0.0, %v4285
      %v4287 = vpop.f32.mrb[0].mxu0
      %4288 = vmatprep.mubr.f32.mxu0 0.0
      %4289 = vmatmul.mubr.f32.gmra.mrb[0].mxu0 %v4177
      %v4290 = vpop.f32.mrb[0].mxu0
      %v4291 = vadd.f32 0.0, %v4290
      %v4292 = vpop.f32.mrb[0].mxu0
      %4293 = vmatprep.mubr.f32.mxu0 0.0
      %4294 = vmatmul.mubr.f32.gmra.mrb[0].mxu0 %v4180
      %v4295 = vpop.f32.mrb[0].mxu0
      %v4296 = vadd.f32 0.0, %v4295
      %v4297 = vpop.f32.mrb[0].mxu0
      %4298 = vmatprep.mubr.f32.mxu0 0.0
      %4299 = vmatmul.mubr.f32.gmra.mrb[0].mxu0 %v4183
      %v4300 = vpop.f32.mrb[0].mxu0
      %v4301 = vadd.f32 0.0, %v4300
      %v4302 = vpop.f32.mrb[0].mxu0
      %4303 = vmatprep.mubr.f32.mxu0 0.0
      %4304 = vmatmul.mubr.f32.gmra.mrb[0].mxu0 %v4186
      %v4305 = vpop.f32.mrb[0].mxu0
      %v4306 = vadd.f32 0.0, %v4305
      %v4307 = vpop.f32.mrb[0].mxu0
      %4308 = vmatprep.mubr.f32.mxu0 0.0
      %4309 = vmatmul.mubr.f32.gmra.mrb[0].mxu0 %v4189
      %v4310 = vpop.f32.mrb[0].mxu0
      %v4311 = vadd.f32 0.0, %v4310
      %v4312 = vpop.f32.mrb[0].mxu0
      %4313 = vmatprep.mubr.f32.mxu0 0.0
      %4314 = vmatmul.mubr.f32.gmra.mrb[0].mxu0 %v4192
      %v4315 = vpop.f32.mrb[0].mxu0
      %v4316 = vadd.f32 0.0, %v4315
      %v4317 = vpop.f32.mrb[0].mxu0
      %4318 = vdwg.mxu0
      %v4319 = vadd.f32 %v4124, %v4261
      %v4320 = vadd.f32 %v4125, %v4266
      %v4321 = vadd.f32 %v4126, %v4271
      %v4322 = vadd.f32 %v4127, %v4276
      %v4323 = vadd.f32 %v4128, %v4281
      %v4324 = vadd.f32 %v4129, %v4286
      %v4325 = vadd.f32 %v4130, %v4291
      %v4326 = vadd.f32 %v4131, %v4296
      %v4327 = vadd.f32 %v4132, %v4301
      %v4328 = vadd.f32 %v4133, %v4306
      %v4329 = vadd.f32 %v4134, %v4311
      %v4330 = vadd.f32 %v4135, %v4316
      %v4331 = vld [vmem:[%s9] sm:$0x1]
      %v4333 = vlaneseq
      %v4334 = vshrl.u32 %v4333, 7
      %v4335 = vsub.s32 0, %v4334
      %v4336 = vrot.slane %v4331, %v4335
      %v4338 = vadd.f32 %v4319, %v4336
      %v4339 = vadd.f32 %v4320, %v4336
      %v4340 = vadd.f32 %v4321, %v4336
      %v4341 = vadd.f32 %v4322, %v4336
      %v4342 = vadd.f32 %v4323, %v4336
      %v4343 = vadd.f32 %v4324, %v4336
      %v4344 = vadd.f32 %v4325, %v4336
      %v4345 = vadd.f32 %v4326, %v4336
      %v4346 = vadd.f32 %v4327, %v4336
      %v4347 = vadd.f32 %v4328, %v4336
      %v4348 = vadd.f32 %v4329, %v4336
      %v4349 = vadd.f32 %v4330, %v4336
      %v4350 = vmax.f32 %v4338, 0.0
      %v4351 = vmax.f32 %v4339, 0.0
      %v4352 = vmax.f32 %v4340, 0.0
      %v4353 = vmax.f32 %v4341, 0.0
      %v4354 = vmax.f32 %v4342, 0.0
      %v4355 = vmax.f32 %v4343, 0.0
      %v4356 = vmax.f32 %v4344, 0.0
      %v4357 = vmax.f32 %v4345, 0.0
      %v4358 = vmax.f32 %v4346, 0.0
      %v4359 = vmax.f32 %v4347, 0.0
      %v4360 = vmax.f32 %v4348, 0.0
      %v4361 = vmax.f32 %v4349, 0.0
      %v4362 = vmul.f32 %v4350, 0.5
      %v4363 = vmul.f32 %v4351, 0.5
      %v4364 = vmul.f32 %v4352, 0.5
      %v4365 = vmul.f32 %v4353, 0.5
      %v4366 = vmul.f32 %v4354, 0.5
      %v4367 = vmul.f32 %v4355, 0.5
      %v4368 = vmul.f32 %v4356, 0.5
      %v4369 = vmul.f32 %v4357, 0.5
      %v4370 = vmul.f32 %v4358, 0.5
      %v4371 = vmul.f32 %v4359, 0.5
      %v4372 = vmul.f32 %v4360, 0.5
      %v4373 = vmul.f32 %v4361, 0.5
      %v4374 = vtanh.pop %v4362
      %v4375 = vtanh.pop %v4363
      %v4376 = vtanh.pop %v4364
      %v4377 = vtanh.pop %v4365
      %v4378 = vtanh.pop %v4366
      %v4379 = vtanh.pop %v4367
      %v4380 = vtanh.pop %v4368
      %v4381 = vtanh.pop %v4369
      %v4382 = vtanh.pop %v4370
      %v4383 = vtanh.pop %v4371
      %v4384 = vtanh.pop %v4372
      %v4385 = vtanh.pop %v4373
      %v4386 = vadd.f32 %v4374, 1.0
      %v4387 = vadd.f32 %v4375, 1.0
      %v4388 = vadd.f32 %v4376, 1.0
      %v4389 = vadd.f32 %v4377, 1.0
      %v4390 = vadd.f32 %v4378, 1.0
      %v4391 = vadd.f32 %v4379, 1.0
      %v4392 = vadd.f32 %v4380, 1.0
      %v4393 = vadd.f32 %v4381, 1.0
      %v4394 = vadd.f32 %v4382, 1.0
      %v4395 = vadd.f32 %v4383, 1.0
      %v4396 = vadd.f32 %v4384, 1.0
      %v4397 = vadd.f32 %v4385, 1.0
      %v4398 = vmul.f32 %v4386, 0.5
      %v4399 = vmul.f32 %v4387, 0.5
      %v4400 = vmul.f32 %v4388, 0.5
      %v4401 = vmul.f32 %v4389, 0.5
      %v4402 = vmul.f32 %v4390, 0.5
      %v4403 = vmul.f32 %v4391, 0.5
      %v4404 = vmul.f32 %v4392, 0.5
      %v4405 = vmul.f32 %v4393, 0.5
      %v4406 = vmul.f32 %v4394, 0.5
      %v4407 = vmul.f32 %v4395, 0.5
      %v4408 = vmul.f32 %v4396, 0.5
      %v4409 = vmul.f32 %v4397, 0.5
      %4410 = vst.msk [vmem:[%s359] sm:$0xff] %vm405, %v4398
      %4411 = vst.msk [vmem:[%s359 + $0x8] sm:$0xff] %vm405, %v4399
      %4412 = vst.msk [vmem:[%s359 + $0x10] sm:$0xff] %vm405, %v4400
      %4413 = vst.msk [vmem:[%s359 + $0x18] sm:$0xff] %vm405, %v4401
      %4414 = vst.msk [vmem:[%s359 + $0x20] sm:$0xff] %vm405, %v4402
      %4415 = vst.msk [vmem:[%s359 + $0x28] sm:$0xff] %vm405, %v4403
      %4416 = vst.msk [vmem:[%s359 + $0x30] sm:$0xff] %vm405, %v4404
      %4417 = vst.msk [vmem:[%s359 + $0x38] sm:$0xff] %vm405, %v4405
      %4418 = vst.msk [vmem:[%s359 + $0x40] sm:$0xff] %vm405, %v4406
      %4419 = vst.msk [vmem:[%s359 + $0x48] sm:$0xff] %vm405, %v4407
      %4420 = vst.msk [vmem:[%s359 + $0x50] sm:$0xff] %vm405, %v4408
      %4421 = vst.msk [vmem:[%s359 + $0x58] sm:$0xff] %vm405, %v4409
      %p4422 = scmp.lt.s32.totalorder %s21, 1
      %s4423 = scalar_select %p4422, %s21, 1
      %s4424 = smul.addr %s4423, 12
      %s4425 = smul.addr %s4424, 8
      %s4426 = scalar_lea.vmem %s10, %s4425
      // Predicated region
      $region61: #{forward.1} parent=59 // pred_check
        %p4427 = pneg %p254
      $region62: #{forward.1} parent=59 // pred_check_branch
        %4429 = sbr.rel (%p4427) target = $region64
      $region63: #{forward.1} parent=59 // pred_region
        _
      $region64: #{forward.1} parent=59 // pred_fallthru
        _
    $region60: #{forward.1} parent=5 // pred_fallthru
      _
    %p4430 = scmp.le.s32.totalorder 2, %s16
    // Predicated region
    $region65: #{forward.1} parent=5 // pred_check
      %p4431 = pneg %p4430
    $region66: #{forward.1} parent=5 // pred_check_branch
      %4433 = sbr.rel (%p4431) target = $region68
    $region67: #{forward.1} parent=5 // pred_region
      %s4434 = ssub.s32 %s16, 2
      // Predicated region
      $region69: #{forward.1} parent=67 // pred_check
        %p4435 = pneg %p260
      $region70: #{forward.1} parent=67 // pred_check_branch
        %4437 = sbr.rel (%p4435) target = $region72
      $region71: #{forward.1} parent=67 // pred_region
        %p4438 = scmp.lt.s32.totalorder %s22, 1
        %s4439 = scalar_select %p4438, %s22, 1
        %s4440 = smul.addr %s4439, 12
        %s4441 = smul.addr %s4440, 8
        %s4442 = scalar_lea.vmem %s10, %s4441
      $region72: #{forward.1} parent=67 // pred_fallthru
        _
    $region68: #{forward.1} parent=5 // pred_fallthru
      _
  $region6: #{forward.1} parent=0 // loop_footer
    %s20 = sadd.s32 1, %s16
  $region7: #{forward.1} parent=0 // loop_footer_branch
    %15 = sbr.rel target = $region3
  $region8: #{forward.1} parent=0 // loop_exit
    _

</llo_original>
